<compile_context>
chip_gen: v6e
topology: v6e:2x2x1
jax: 0.10.0
libtpu: 0.0.40
codegen_flags: <defaults>
</compile_context>

<pallas_src>
import jax
import jax.numpy as jnp
from jax.experimental import pallas as pl
from jax.experimental.pallas import tpu as pltpu

E_CHAR = 50      # char embedding dim (fixed by the module)
KERNEL = 5       # CNN kernel size (a5 CNN)
PAD = 1          # CNN padding (a5 CNN)


def _round_up(v, m):
    return ((v + m - 1) // m) * m


def char_cnn_embed_kernel(x_ref, wcol_ref, bconv_ref, whw_ref, bhw_ref, out_ref):
    # x_ref    : (tile, W_pad, E_CHAR)  bf16, channels-last, already zero-padded in W
    # wcol_ref : (K*E_CHAR, C_out)      f32 im2col conv weight
    # bconv_ref: (1, C_out)             f32
    # whw_ref  : (C_out, 2*C_out)       f32, [W_proj^T | W_gate^T] fused
    # bhw_ref  : (1, 2*C_out)           f32, [b_proj | b_gate]
    # out_ref  : (tile, C_out)          f32
    x = x_ref[...].astype(jnp.float32)
    tn, w_pad, e_char = x.shape
    kxc, c_out = wcol_ref.shape
    k = kxc // e_char
    w_out = w_pad - k + 1

    # im2col: concatenate the K shifted views along channels and do a single
    # 250-wide contraction on the MXU (instead of K separate 50-wide matmuls).
    xcol = jnp.concatenate([x[:, kk:kk + w_out, :] for kk in range(k)], axis=-1)
    conv = jax.lax.dot_general(
        xcol, wcol_ref[...],
        dimension_numbers=(((2,), (0,)), ((), ())),
        preferred_element_type=jnp.float32)                # (tn, w_out, C_out)
    conv = conv + bconv_ref[...][None, :, :]

    # ReLU + max-over-time -> (tn, C_out)
    h = jnp.max(jnp.maximum(conv, 0.0), axis=1)

    # Highway: one fused matmul for proj and gate.
    hw = jnp.dot(h, whw_ref[...], preferred_element_type=jnp.float32) + bhw_ref[...]
    proj = jnp.maximum(hw[:, :c_out], 0.0)
    gate = jax.nn.sigmoid(hw[:, c_out:])
    out = gate * proj + (1.0 - gate) * h

    # TODO(synk): Dropout(p=0.3) is identity in eval mode; training-mode RNG dropout not applied.
    out_ref[...] = out.astype(out_ref.dtype)


def model_embeddings_forward(inputs, params, *, tile_n=256):
    """inputs: (sen_len, batch, max_word) int32 -> (sen_len, batch, embed_size) f32."""
    sen_len, b, max_word = inputs.shape
    char_table = params["char_embed"]          # (V, 50); row pad_idx is zero
    wconv = params["conv_w"]                   # (C_out, C_in=50, K=5)  PyTorch layout
    bconv = params["conv_b"]                   # (C_out,)
    wproj, bproj = params["proj_w"], params["proj_b"]
    wgate, bgate = params["gate_w"], params["gate_b"]

    embed_size = wconv.shape[0]
    n = sen_len * b
    w_pad = max_word + 2 * PAD

    # Word tile: keep it a multiple of 8, cap at the (rounded) problem size, and pad N
    # up to a tile multiple so any sen_len*batch works (padded rows are discarded).
    tile = min(_round_up(tile_n, 8), _round_up(n, 8))
    n_pad = _round_up(n, tile)

    # --- glue: char-embedding gather (stored bf16 to halve HBM traffic), W zero-pad, N pad ---
    emb = jnp.take(char_table.astype(jnp.bfloat16),
                   inputs.reshape(n, max_word), axis=0)            # (n, W, 50) bf16
    x = jnp.pad(emb, ((0, n_pad - n), (PAD, PAD), (0, 0)))         # (n_pad, W+2, 50)

    # conv weight -> im2col layout (K*C_in, C_out); highway proj/gate fused.
    wcol = jnp.transpose(wconv, (2, 1, 0)).reshape(KERNEL * E_CHAR, embed_size)
    bconv2 = bconv.reshape(1, embed_size)
    w_hw = jnp.concatenate([wproj.T, wgate.T], axis=1)             # (E, 2E)
    b_hw = jnp.concatenate([bproj, bgate]).reshape(1, 2 * embed_size)

    # NOTE: with tile_n > ~512 also raise vmem_limit_bytes (and mind v7x's 64 MiB VMEM).
    out = pl.pallas_call(
        char_cnn_embed_kernel,
        out_shape=jax.ShapeDtypeStruct((n_pad, embed_size), jnp.float32),
        grid_spec=pltpu.PrefetchScalarGridSpec(
            num_scalar_prefetch=0,
            grid=(n_pad // tile,),
            in_specs=[
                pl.BlockSpec((tile, w_pad, E_CHAR), lambda i: (i, 0, 0)),
                pl.BlockSpec((KERNEL * E_CHAR, embed_size), lambda i: (0, 0)),
                pl.BlockSpec((1, embed_size), lambda i: (0, 0)),
                pl.BlockSpec((embed_size, 2 * embed_size), lambda i: (0, 0)),
                pl.BlockSpec((1, 2 * embed_size), lambda i: (0, 0)),
            ],
            out_specs=pl.BlockSpec((tile, embed_size), lambda i: (i, 0)),
        ),
        compiler_params=pltpu.CompilerParams(
            dimension_semantics=("parallel",)),
    )(x, wcol, bconv2, w_hw, b_hw)

    return out[:n].reshape(sen_len, b, embed_size)


def reference_forward(inputs, params):
    """Pure-JAX reference mirroring the PyTorch forward (eval mode, f32)."""
    sen_len, b, max_word = inputs.shape
    char_table = params["char_embed"]
    wconv, bconv = params["conv_w"], params["conv_b"]
    wproj, bproj = params["proj_w"], params["proj_b"]
    wgate, bgate = params["gate_w"], params["gate_b"]
    embed_size = wconv.shape[0]

    emb = jnp.take(char_table, inputs, axis=0)                          # (S, B, W, 50)
    x = emb.reshape(sen_len * b, max_word, E_CHAR).transpose(0, 2, 1)   # NCW
    conv = jax.lax.conv_general_dilated(
        x, wconv, window_strides=(1,), padding=[(PAD, PAD)],
        dimension_numbers=("NCH", "OIH", "NCH"))
    conv = conv + bconv[None, :, None]
    h = jnp.max(jnp.maximum(conv, 0.0), axis=2)                         # (N, embed)
    proj = jnp.maximum(h @ wproj.T + bproj, 0.0)
    gate = jax.nn.sigmoid(h @ wgate.T + bgate)
    out = gate * proj + (1.0 - gate) * h
    return out.reshape(sen_len, b, embed_size)


def init_params(key, vocab_size, embed_size, pad_idx=0):
    ks = jax.random.split(key, 7)
    char_embed = 0.1 * jax.random.normal(ks[0], (vocab_size, E_CHAR), jnp.float32)
    char_embed = char_embed.at[pad_idx].set(0.0)            # nn.Embedding padding_idx
    return {
        "char_embed": char_embed,
        "conv_w": 0.1 * jax.random.normal(ks[1], (embed_size, E_CHAR, KERNEL), jnp.float32),
        "conv_b": 0.1 * jax.random.normal(ks[2], (embed_size,), jnp.float32),
        "proj_w": 0.1 * jax.random.normal(ks[3], (embed_size, embed_size), jnp.float32),
        "proj_b": 0.1 * jax.random.normal(ks[4], (embed_size,), jnp.float32),
        "gate_w": 0.1 * jax.random.normal(ks[5], (embed_size, embed_size), jnp.float32),
        "gate_b": 0.1 * jax.random.normal(ks[6], (embed_size,), jnp.float32),
    }


if __name__ == "__main__":
    key = jax.random.PRNGKey(0)
    k_inp, k_par = jax.random.split(key)

    sen_len, batch, max_word = 9, 6, 16
    embed_size, vocab_size, pad_idx = 128, 96, 0   # embed multiple of 128 -> lane-dense stores

    inputs = jax.random.randint(k_inp, (sen_len, batch, max_word), 0, vocab_size, jnp.int32)
    params = init_params(k_par, vocab_size, embed_size, pad_idx)

    ref = reference_forward(inputs, params)

    # Small tile to exercise a multi-step grid + N-remainder padding (n=54 -> n_pad=64).
    out = model_embeddings_forward(inputs, params, tile_n=32)
    out = jax.block_until_ready(out)
    assert out.shape == (sen_len, batch, embed_size)
    # bf16 compression of the gathered char embeddings (HBM-bandwidth optimization) is the
    # only deviation from the pure-f32 reference -> compare with a correspondingly relaxed
    # tolerance; all matmul accumulation is f32.
    assert jnp.allclose(out, ref, rtol=2e-2, atol=1e-2), float(jnp.max(jnp.abs(out - ref)))

    # Default (large-tile) path: single grid step at this demo size.
    out2 = jax.block_until_ready(model_embeddings_forward(inputs, params))
    assert jnp.allclose(out2, ref, rtol=2e-2, atol=1e-2), float(jnp.max(jnp.abs(out2 - ref)))

    print("KERNEL_OK")
</pallas_src>

<mosaic_0001>
module attributes {stable_mosaic.version = 11 : i64} {
  func.func @char_cnn_embed_kernel(%arg0: i32, %arg1: memref<32x18x50xbf16, #tpu.memory_space<vmem>>, %arg2: memref<250x128xf32, #tpu.memory_space<vmem>>, %arg3: memref<1x128xf32, #tpu.memory_space<vmem>>, %arg4: memref<128x256xf32, #tpu.memory_space<vmem>>, %arg5: memref<1x256xf32, #tpu.memory_space<vmem>>, %arg6: memref<32x128xf32, #tpu.memory_space<vmem>>) attributes {dimension_semantics = [#tpu.dimension_semantics<parallel>], iteration_bounds = array<i64: 2>, scalar_prefetch = 0 : i64, scratch_operands = 0 : i64, tpu.core_type = #tpu.core_type<tc>, window_params = [{transform_indices = @transform_0, window_bounds = array<i64: 32, 18, 50>}, {pipeline_mode = #tpu.pipeline_mode<synchronous>, transform_indices = @transform_1, window_bounds = array<i64: 250, 128>}, {pipeline_mode = #tpu.pipeline_mode<synchronous>, transform_indices = @transform_2, window_bounds = array<i64: 1, 128>}, {pipeline_mode = #tpu.pipeline_mode<synchronous>, transform_indices = @transform_3, window_bounds = array<i64: 128, 256>}, {pipeline_mode = #tpu.pipeline_mode<synchronous>, transform_indices = @transform_4, window_bounds = array<i64: 1, 256>}, {transform_indices = @transform_5, window_bounds = array<i64: 32, 128>}]} {
    %c0 = arith.constant 0 : index
    %c0_0 = arith.constant 0 : index
    %c0_1 = arith.constant 0 : index
    %0 = vector.load %arg1[%c0, %c0_0, %c0_1] : memref<32x18x50xbf16, #tpu.memory_space<vmem>>, vector<32x18x50xbf16>
    %1 = arith.extf %0 : vector<32x18x50xbf16> to vector<32x18x50xf32>
    %2 = vector.extract_strided_slice %1 {offsets = [0, 0, 0], sizes = [32, 14, 50], strides = [1, 1, 1]} : vector<32x18x50xf32> to vector<32x14x50xf32>
    %3 = vector.extract_strided_slice %1 {offsets = [0, 1, 0], sizes = [32, 14, 50], strides = [1, 1, 1]} : vector<32x18x50xf32> to vector<32x14x50xf32>
    %4 = vector.extract_strided_slice %1 {offsets = [0, 2, 0], sizes = [32, 14, 50], strides = [1, 1, 1]} : vector<32x18x50xf32> to vector<32x14x50xf32>
    %5 = vector.extract_strided_slice %1 {offsets = [0, 3, 0], sizes = [32, 14, 50], strides = [1, 1, 1]} : vector<32x18x50xf32> to vector<32x14x50xf32>
    %6 = vector.extract_strided_slice %1 {offsets = [0, 4, 0], sizes = [32, 14, 50], strides = [1, 1, 1]} : vector<32x18x50xf32> to vector<32x14x50xf32>
    %7 = tpu.concatenate %2, %3, %4, %5, %6 in 2 : vector<32x14x50xf32>, vector<32x14x50xf32>, vector<32x14x50xf32>, vector<32x14x50xf32>, vector<32x14x50xf32> -> vector<32x14x250xf32>
    %c0_2 = arith.constant 0 : index
    %c0_3 = arith.constant 0 : index
    %8 = vector.load %arg2[%c0_2, %c0_3] : memref<250x128xf32, #tpu.memory_space<vmem>>, vector<250x128xf32>
    %cst = arith.constant dense<0.000000e+00> : vector<32x14x128xf32>
    %9 = tpu.matmul %7, %8, %cst {dimension_numbers = #tpu.dot_dimension_numbers<[2], [0], [0, 1], [1], [0, 0, 0, 1, 1, 1], [], []>} : vector<32x14x250xf32>, vector<250x128xf32>, vector<32x14x128xf32> -> vector<32x14x128xf32>
    %c0_4 = arith.constant 0 : index
    %c0_5 = arith.constant 0 : index
    %10 = vector.load %arg3[%c0_4, %c0_5] : memref<1x128xf32, #tpu.memory_space<vmem>>, vector<1x128xf32>
    %11 = vector.shape_cast %10 : vector<1x128xf32> to vector<1x1x128xf32>
    %12 = vector.broadcast %11 : vector<1x1x128xf32> to vector<32x14x128xf32>
    %13 = arith.addf %9, %12 : vector<32x14x128xf32>
    %cst_6 = arith.constant 0.000000e+00 : f32
    %14 = vector.broadcast %cst_6 : f32 to vector<32x14x128xf32>
    %15 = arith.maximumf %13, %14 : vector<32x14x128xf32>
    %cst_7 = arith.constant dense<0xFF800000> : vector<32x128xf32>
    %16 = vector.multi_reduction <maximumf>, %15, %cst_7 [1] : vector<32x14x128xf32> to vector<32x128xf32>
    %c0_8 = arith.constant 0 : index
    %c0_9 = arith.constant 0 : index
    %17 = vector.load %arg4[%c0_8, %c0_9] : memref<128x256xf32, #tpu.memory_space<vmem>>, vector<128x256xf32>
    %cst_10 = arith.constant dense<0.000000e+00> : vector<32x256xf32>
    %18 = tpu.matmul %16, %17, %cst_10 {dimension_numbers = #tpu.dot_dimension_numbers<[1], [0], [0], [1], [0, 0, 1, 1], [], []>} : vector<32x128xf32>, vector<128x256xf32>, vector<32x256xf32> -> vector<32x256xf32>
    %c0_11 = arith.constant 0 : index
    %c0_12 = arith.constant 0 : index
    %19 = vector.load %arg5[%c0_11, %c0_12] : memref<1x256xf32, #tpu.memory_space<vmem>>, vector<1x256xf32>
    %20 = vector.broadcast %19 : vector<1x256xf32> to vector<32x256xf32>
    %21 = arith.addf %18, %20 : vector<32x256xf32>
    %22 = vector.extract_strided_slice %21 {offsets = [0, 0], sizes = [32, 128], strides = [1, 1]} : vector<32x256xf32> to vector<32x128xf32>
    %cst_13 = arith.constant 0.000000e+00 : f32
    %23 = vector.broadcast %cst_13 : f32 to vector<32x128xf32>
    %24 = arith.maximumf %22, %23 : vector<32x128xf32>
    %25 = vector.extract_strided_slice %21 {offsets = [0, 128], sizes = [32, 128], strides = [1, 1]} : vector<32x256xf32> to vector<32x128xf32>
    %26 = arith.negf %25 : vector<32x128xf32>
    %27 = math.exp %26 : vector<32x128xf32>
    %cst_14 = arith.constant 1.000000e+00 : f32
    %28 = vector.broadcast %cst_14 : f32 to vector<32x128xf32>
    %29 = arith.addf %28, %27 : vector<32x128xf32>
    %30 = arith.divf %28, %29 : vector<32x128xf32>
    %31 = arith.mulf %30, %24 : vector<32x128xf32>
    %cst_15 = arith.constant 1.000000e+00 : f32
    %32 = vector.broadcast %cst_15 : f32 to vector<32x128xf32>
    %33 = arith.subf %32, %30 : vector<32x128xf32>
    %34 = arith.mulf %33, %16 : vector<32x128xf32>
    %35 = arith.addf %31, %34 : vector<32x128xf32>
    %c0_16 = arith.constant 0 : index
    %c0_17 = arith.constant 0 : index
    %36 = vector.load %arg6[%c0_16, %c0_17] : memref<32x128xf32, #tpu.memory_space<vmem>>, vector<32x128xf32>
    tpu.vector_store %arg6[%c0_16, %c0_17], %35 {strides = array<i32>} : memref<32x128xf32, #tpu.memory_space<vmem>>, vector<32x128xf32>,
    return
  }
  func.func @transform_0(%arg0: i32) -> (i32, i32, i32) {
    %c0_i32 = arith.constant 0 : i32
    %c0_i32_0 = arith.constant 0 : i32
    %c0_i32_1 = arith.constant 0 : i32
    return %arg0, %c0_i32, %c0_i32_0 : i32, i32, i32
  }
  func.func @transform_1(%arg0: i32) -> (i32, i32) {
    %c0_i32 = arith.constant 0 : i32
    %c0_i32_0 = arith.constant 0 : i32
    %c0_i32_1 = arith.constant 0 : i32
    return %c0_i32, %c0_i32_0 : i32, i32
  }
  func.func @transform_2(%arg0: i32) -> (i32, i32) {
    %c0_i32 = arith.constant 0 : i32
    %c0_i32_0 = arith.constant 0 : i32
    %c0_i32_1 = arith.constant 0 : i32
    return %c0_i32, %c0_i32_0 : i32, i32
  }
  func.func @transform_3(%arg0: i32) -> (i32, i32) {
    %c0_i32 = arith.constant 0 : i32
    %c0_i32_0 = arith.constant 0 : i32
    %c0_i32_1 = arith.constant 0 : i32
    return %c0_i32, %c0_i32_0 : i32, i32
  }
  func.func @transform_4(%arg0: i32) -> (i32, i32) {
    %c0_i32 = arith.constant 0 : i32
    %c0_i32_0 = arith.constant 0 : i32
    %c0_i32_1 = arith.constant 0 : i32
    return %c0_i32, %c0_i32_0 : i32, i32
  }
  func.func @transform_5(%arg0: i32) -> (i32, i32) {
    %c0_i32 = arith.constant 0 : i32
    %c0_i32_0 = arith.constant 0 : i32
    return %arg0, %c0_i32 : i32, i32
  }
}

</mosaic_0001>

<llo_original>
// kernel: tpu_custom_call.1
$region0: #{tpu_custom_call.1}
  #allocation0 [shape = 'u32[]', space=smem, size = 0x4, offset = 0x4, fixed_abs, tag = 'smem constant byte address 0x4 - core index']
  #allocation1 [shape = 'u32[144,128]{1,0:T(1,128)}', space=vmem, size = 0x12000, scoped, tag = 'internal scratch']
  %s0 = inlined_call_operand.vmem [shape: bf16[64,18,50], index: 0, kind: input, shape index: {}]
  %s1 = inlined_call_operand.vmem [shape: f32[250,128], index: 1, kind: input, shape index: {}]
  %s2 = inlined_call_operand.vmem [shape: f32[1,128], index: 2, kind: input, shape index: {}]
  %s3 = inlined_call_operand.vmem [shape: f32[128,256], index: 3, kind: input, shape index: {}]
  %s4 = inlined_call_operand.vmem [shape: f32[1,256], index: 4, kind: input, shape index: {}]
  %s5 = inlined_call_operand.hbm [shape: f32[64,128], index: 5, kind: output, shape index: {}]
  %s6 = sld [smem:[#allocation0]]
  $region53: #{tpu_custom_call.1} parent=0
    _
  %s8 = ssub.s32 1, %s6
  %s9 = scalar_select 0, %s8, %s6
  $region1: #{tpu_custom_call.1} parent=0
    #allocation2 [shape = 'u8[32768]{0}', space=vmem, size = 0x8000, scoped, tag = 'output window, operand 0']
    #allocation3 [shape = 's32[2]{0}', space=sflag, size = 0x8, scoped, tag = 'scoped memory for tpu_custom_call.1']
    %10 = vsyncpa [#allocation3], 0
    %s11 = scalar_lea.sflag [#allocation3], 1
    %12 = vsyncpa %s11, 0
    loop: start=0, step=1, limit=4
    $region2: #{tpu_custom_call.1} parent=1 // loop_pre_header
      _
    $region3: #{tpu_custom_call.1} parent=1 // loop_header
      %s14 = sphi 0, %s18
      %p15 = scmp.ge.s32.totalorder %s14, 4
      %s24 = sphi 0, %s26
      %s27 = sphi 0, %s24
      %s28 = sphi 0, %s27
      %s44 = sphi 0, %s28
      %s48 = sphi 0, %s48
      %s50 = sphi 0, %s48
      %s51 = sphi 0, %s50
      %s65 = sphi 0, %s51
      %s69 = sphi 0, %s69
      %s71 = sphi 0, %s69
      %s72 = sphi 0, %s71
      %s86 = sphi 0, %s72
      %s90 = sphi 0, %s90
      %s92 = sphi 0, %s90
      %s93 = sphi 0, %s92
      %s107 = sphi 0, %s93
      %s111 = sphi 0, %s111
      %s113 = sphi 0, %s111
      %s114 = sphi 0, %s113
      %s128 = sphi 0, %s114
      %s134 = sphi 0, %s136
      %s137 = sphi 0, %s134
      %s138 = sphi 0, %s137
      %s154 = sphi 0, %s138
    $region4: #{tpu_custom_call.1} parent=1 // loop_header_branch
      %17 = sbr.rel (%p15) target = $region8
    $region5: #{tpu_custom_call.1} parent=1 // loop_body
      %s19 = ssub.s32 %s14, 1
      %s20 = ssub.s32 %s14, 2
      %s21 = sadd.s32 %s14, 1
      %s22 = ssub.s32 %s14, %s21
      %p23 = scmp.eq.s32.totalorder %s22, 0
      %s25 = sadd.s32 %s24, 1
      %s26 = scalar_select %p23, %s24, %s25
      %p29 = pneg %p23
      %p30 = scmp.eq.s32.totalorder %s14, 1
      %p31 = por %p29, %p30
      %p32 = scmp.ne.s32.totalorder %s24, %s27
      %p33 = scmp.eq.s32.totalorder %s14, 0
      %p34 = por %p32, %p33
      %p35 = scmp.ne.s32.totalorder %s24, %s27
      %p36 = scmp.eq.s32.totalorder %s19, 1
      %p37 = por %p35, %p36
      %p38 = scmp.ne.s32.totalorder %s27, %s28
      %p39 = scmp.eq.s32.totalorder %s19, 0
      %p40 = por %p38, %p39
      %p41 = scmp.ne.s32.totalorder %s27, %s28
      %p42 = scmp.eq.s32.totalorder %s20, 1
      %p43 = por %p41, %p42
      %p45 = scmp.ne.s32.totalorder %s28, %s44
      %p46 = scmp.eq.s32.totalorder %s20, 0
      %p47 = por %p45, %p46
      %s49 = sadd.s32 %s48, 1
      %p52 = scmp.eq.s32.totalorder %s14, 1
      %p53 = scmp.ne.s32.totalorder %s48, %s50
      %p54 = scmp.eq.s32.totalorder %s14, 0
      %p55 = por %p53, %p54
      %p56 = scmp.ne.s32.totalorder %s48, %s50
      %p57 = scmp.eq.s32.totalorder %s19, 1
      %p58 = por %p56, %p57
      %p59 = scmp.ne.s32.totalorder %s50, %s51
      %p60 = scmp.eq.s32.totalorder %s19, 0
      %p61 = por %p59, %p60
      %p62 = scmp.ne.s32.totalorder %s50, %s51
      %p63 = scmp.eq.s32.totalorder %s20, 1
      %p64 = por %p62, %p63
      %p66 = scmp.ne.s32.totalorder %s51, %s65
      %p67 = scmp.eq.s32.totalorder %s20, 0
      %p68 = por %p66, %p67
      %s70 = sadd.s32 %s69, 1
      %p73 = scmp.eq.s32.totalorder %s14, 1
      %p74 = scmp.ne.s32.totalorder %s69, %s71
      %p75 = scmp.eq.s32.totalorder %s14, 0
      %p76 = por %p74, %p75
      %p77 = scmp.ne.s32.totalorder %s69, %s71
      %p78 = scmp.eq.s32.totalorder %s19, 1
      %p79 = por %p77, %p78
      %p80 = scmp.ne.s32.totalorder %s71, %s72
      %p81 = scmp.eq.s32.totalorder %s19, 0
      %p82 = por %p80, %p81
      %p83 = scmp.ne.s32.totalorder %s71, %s72
      %p84 = scmp.eq.s32.totalorder %s20, 1
      %p85 = por %p83, %p84
      %p87 = scmp.ne.s32.totalorder %s72, %s86
      %p88 = scmp.eq.s32.totalorder %s20, 0
      %p89 = por %p87, %p88
      %s91 = sadd.s32 %s90, 1
      %p94 = scmp.eq.s32.totalorder %s14, 1
      %p95 = scmp.ne.s32.totalorder %s90, %s92
      %p96 = scmp.eq.s32.totalorder %s14, 0
      %p97 = por %p95, %p96
      %p98 = scmp.ne.s32.totalorder %s90, %s92
      %p99 = scmp.eq.s32.totalorder %s19, 1
      %p100 = por %p98, %p99
      %p101 = scmp.ne.s32.totalorder %s92, %s93
      %p102 = scmp.eq.s32.totalorder %s19, 0
      %p103 = por %p101, %p102
      %p104 = scmp.ne.s32.totalorder %s92, %s93
      %p105 = scmp.eq.s32.totalorder %s20, 1
      %p106 = por %p104, %p105
      %p108 = scmp.ne.s32.totalorder %s93, %s107
      %p109 = scmp.eq.s32.totalorder %s20, 0
      %p110 = por %p108, %p109
      %s112 = sadd.s32 %s111, 1
      %p115 = scmp.eq.s32.totalorder %s14, 1
      %p116 = scmp.ne.s32.totalorder %s111, %s113
      %p117 = scmp.eq.s32.totalorder %s14, 0
      %p118 = por %p116, %p117
      %p119 = scmp.ne.s32.totalorder %s111, %s113
      %p120 = scmp.eq.s32.totalorder %s19, 1
      %p121 = por %p119, %p120
      %p122 = scmp.ne.s32.totalorder %s113, %s114
      %p123 = scmp.eq.s32.totalorder %s19, 0
      %p124 = por %p122, %p123
      %p125 = scmp.ne.s32.totalorder %s113, %s114
      %p126 = scmp.eq.s32.totalorder %s20, 1
      %p127 = por %p125, %p126
      %p129 = scmp.ne.s32.totalorder %s114, %s128
      %p130 = scmp.eq.s32.totalorder %s20, 0
      %p131 = por %p129, %p130
      %s132 = ssub.s32 %s14, %s21
      %p133 = scmp.eq.s32.totalorder %s132, 0
      %s135 = sadd.s32 %s134, 1
      %s136 = scalar_select %p133, %s134, %s135
      %p139 = pneg %p133
      %p140 = scmp.eq.s32.totalorder %s14, 1
      %p141 = por %p139, %p140
      %p142 = scmp.ne.s32.totalorder %s134, %s137
      %p143 = scmp.eq.s32.totalorder %s14, 0
      %p144 = por %p142, %p143
      %p145 = scmp.ne.s32.totalorder %s134, %s137
      %p146 = scmp.eq.s32.totalorder %s19, 1
      %p147 = por %p145, %p146
      %p148 = scmp.ne.s32.totalorder %s137, %s138
      %p149 = scmp.eq.s32.totalorder %s19, 0
      %p150 = por %p148, %p149
      %p151 = scmp.ne.s32.totalorder %s137, %s138
      %p152 = scmp.eq.s32.totalorder %s20, 1
      %p153 = por %p151, %p152
      %p155 = scmp.ne.s32.totalorder %s138, %s154
      %p156 = scmp.eq.s32.totalorder %s20, 0
      %p157 = por %p155, %p156
      %p158 = scmp.le.s32.totalorder 1, %s14
      %p159 = scmp.lt.s32.totalorder %s14, 3
      %p160 = pnand %p158, %p159
      %p161 = pneg %p160
      // Predicated region
      $region9: #{tpu_custom_call.1} parent=5 // pred_check
        _
      $region10: #{tpu_custom_call.1} parent=5 // pred_check_branch
        %163 = sbr.rel (%p160) target = $region12
      $region11: #{tpu_custom_call.1} parent=5 // pred_region
        %s164 = ssub.s32 %s14, 1
        // Predicated region
        $region13: #{tpu_custom_call.1} parent=11 // pred_check
          %p165 = pneg %p61
        $region14: #{tpu_custom_call.1} parent=11 // pred_check_branch
          %167 = sbr.rel (%p165) target = $region16
        $region15: #{tpu_custom_call.1} parent=11 // pred_region
          _
        $region16: #{tpu_custom_call.1} parent=11 // pred_fallthru
          _
        // Predicated region
        $region17: #{tpu_custom_call.1} parent=11 // pred_check
          %p168 = pneg %p82
        $region18: #{tpu_custom_call.1} parent=11 // pred_check_branch
          %170 = sbr.rel (%p168) target = $region20
        $region19: #{tpu_custom_call.1} parent=11 // pred_region
          _
        $region20: #{tpu_custom_call.1} parent=11 // pred_fallthru
          _
        // Predicated region
        $region21: #{tpu_custom_call.1} parent=11 // pred_check
          %p171 = pneg %p103
        $region22: #{tpu_custom_call.1} parent=11 // pred_check_branch
          %173 = sbr.rel (%p171) target = $region24
        $region23: #{tpu_custom_call.1} parent=11 // pred_region
          _
        $region24: #{tpu_custom_call.1} parent=11 // pred_fallthru
          _
        // Predicated region
        $region25: #{tpu_custom_call.1} parent=11 // pred_check
          %p174 = pneg %p124
        $region26: #{tpu_custom_call.1} parent=11 // pred_check_branch
          %176 = sbr.rel (%p174) target = $region28
        $region27: #{tpu_custom_call.1} parent=11 // pred_region
          _
        $region28: #{tpu_custom_call.1} parent=11 // pred_fallthru
          _
      $region12: #{tpu_custom_call.1} parent=5 // pred_fallthru
        _
      %p177 = scmp.lt.s32.totalorder %s14, 2
      // Predicated region
      $region29: #{tpu_custom_call.1} parent=5 // pred_check
        %p178 = pneg %p177
      $region30: #{tpu_custom_call.1} parent=5 // pred_check_branch
        %180 = sbr.rel (%p178) target = $region32
      $region31: #{tpu_custom_call.1} parent=5 // pred_region
        // Predicated region
        $region33: #{tpu_custom_call.1} parent=31 // pred_check
          %p181 = pneg %p34
        $region34: #{tpu_custom_call.1} parent=31 // pred_check_branch
          %183 = sbr.rel (%p181) target = $region36
        $region35: #{tpu_custom_call.1} parent=31 // pred_region
          %s184 = smul.u32 32, %s14
          %p185 = scmp.lt.s32.totalorder %s184, 63
          %s186 = scalar_select %p185, %s184, 63
          %s187 = smul.addr %s186, 3
          %s188 = smul.addr %s187, 4
          %s189 = scalar_lea.vmem %s0, %s188
          %s190 = smul.u32 32, %s14
        $region36: #{tpu_custom_call.1} parent=31 // pred_fallthru
          _
      $region32: #{tpu_custom_call.1} parent=5 // pred_fallthru
        _
      %p191 = scmp.le.s32.totalorder 1, %s14
      %p192 = scmp.lt.s32.totalorder %s14, 3
      %p193 = pnand %p191, %p192
      %p194 = pneg %p193
      // Predicated region
      $region37: #{tpu_custom_call.1} parent=5 // pred_check
        _
      $region38: #{tpu_custom_call.1} parent=5 // pred_check_branch
        %196 = sbr.rel (%p193) target = $region40
      $region39: #{tpu_custom_call.1} parent=5 // pred_region
        %s197 = ssub.s32 %s14, 1
        %s198 = smul.u32 32, %s19
        %p199 = scmp.lt.s32.totalorder %s198, 63
        %s200 = scalar_select %p199, %s198, 63
        %s201 = smul.addr %s200, 3
        %s202 = smul.addr %s201, 4
        %s203 = scalar_lea.vmem %s0, %s202
        %p204 = pneg %p40
        %p205 = pneg %p37
        %p206 = pneg %p61
        %p207 = pneg %p58
        %p208 = pneg %p82
        %p209 = pneg %p79
        %p210 = pneg %p103
        %p211 = pneg %p100
        %p212 = pneg %p124
        %p213 = pneg %p121
        %p214 = pneg %p150
        %p215 = pneg %p147
        %s216 = sand.u32 %s137, 1
        %s217 = scalar_lea.sflag [#allocation3], %s216
        %s218 = sand.u32 %s137, 1
        %s219 = smul.addr %s218, 32
        %s220 = scalar_lea.vmem [#allocation2], %s219
        %s221 = smul.u32 32, %s19
        %p222 = scmp.lt.s32.totalorder %s221, 63
        %s223 = scalar_select %p222, %s221, 63
        %s224 = smul.addr %s223, 3
        %s225 = smul.addr %s224, 4
        %s226 = scalar_lea.vmem %s0, %s225
        %s227 = smul.u32 32, %s19
        %s228 = smul.u32 4, %s19
        %v229 = vld [vmem:[%s226] sm:$0xf]
        %v230 = vld [vmem:[%s226 + $0x4] sm:$0xf]
        %v231 = vld [vmem:[%s226 + $0x8] sm:$0x1]
        %v232 = vld [vmem:[%s226 + $0xc] sm:$0xf]
        %v233 = vld [vmem:[%s226 + $0x10] sm:$0xf]
        %v234 = vld [vmem:[%s226 + $0x14] sm:$0x1]
        %v235 = vld [vmem:[%s226 + $0x18] sm:$0xf]
        %v236 = vld [vmem:[%s226 + $0x1c] sm:$0xf]
        %v237 = vld [vmem:[%s226 + $0x20] sm:$0x1]
        %v238 = vld [vmem:[%s226 + $0x24] sm:$0xf]
        %v239 = vld [vmem:[%s226 + $0x28] sm:$0xf]
        %v240 = vld [vmem:[%s226 + $0x2c] sm:$0x1]
        %v241 = vld [vmem:[%s226 + $0x30] sm:$0xf]
        %v242 = vld [vmem:[%s226 + $0x34] sm:$0xf]
        %v243 = vld [vmem:[%s226 + $0x38] sm:$0x1]
        %v244 = vld [vmem:[%s226 + $0x3c] sm:$0xf]
        %v245 = vld [vmem:[%s226 + $0x40] sm:$0xf]
        %v246 = vld [vmem:[%s226 + $0x44] sm:$0x1]
        %v247 = vld [vmem:[%s226 + $0x48] sm:$0xf]
        %v248 = vld [vmem:[%s226 + $0x4c] sm:$0xf]
        %v249 = vld [vmem:[%s226 + $0x50] sm:$0x1]
        %v250 = vld [vmem:[%s226 + $0x54] sm:$0xf]
        %v251 = vld [vmem:[%s226 + $0x58] sm:$0xf]
        %v252 = vld [vmem:[%s226 + $0x5c] sm:$0x1]
        %v253 = vld [vmem:[%s226 + $0x60] sm:$0xf]
        %v254 = vld [vmem:[%s226 + $0x64] sm:$0xf]
        %v255 = vld [vmem:[%s226 + $0x68] sm:$0x1]
        %v256 = vld [vmem:[%s226 + $0x6c] sm:$0xf]
        %v257 = vld [vmem:[%s226 + $0x70] sm:$0xf]
        %v258 = vld [vmem:[%s226 + $0x74] sm:$0x1]
        %v259 = vld [vmem:[%s226 + $0x78] sm:$0xf]
        %v260 = vld [vmem:[%s226 + $0x7c] sm:$0xf]
        %v261 = vld [vmem:[%s226 + $0x80] sm:$0x1]
        %v262 = vld [vmem:[%s226 + $0x84] sm:$0xf]
        %v263 = vld [vmem:[%s226 + $0x88] sm:$0xf]
        %v264 = vld [vmem:[%s226 + $0x8c] sm:$0x1]
        %v265 = vld [vmem:[%s226 + $0x90] sm:$0xf]
        %v266 = vld [vmem:[%s226 + $0x94] sm:$0xf]
        %v267 = vld [vmem:[%s226 + $0x98] sm:$0x1]
        %v268 = vld [vmem:[%s226 + $0x9c] sm:$0xf]
        %v269 = vld [vmem:[%s226 + $0xa0] sm:$0xf]
        %v270 = vld [vmem:[%s226 + $0xa4] sm:$0x1]
        %v271 = vld [vmem:[%s226 + $0xa8] sm:$0xf]
        %v272 = vld [vmem:[%s226 + $0xac] sm:$0xf]
        %v273 = vld [vmem:[%s226 + $0xb0] sm:$0x1]
        %v274 = vld [vmem:[%s226 + $0xb4] sm:$0xf]
        %v275 = vld [vmem:[%s226 + $0xb8] sm:$0xf]
        %v276 = vld [vmem:[%s226 + $0xbc] sm:$0x1]
        %v277 = vld [vmem:[%s226 + $0xc0] sm:$0xf]
        %v278 = vld [vmem:[%s226 + $0xc4] sm:$0xf]
        %v279 = vld [vmem:[%s226 + $0xc8] sm:$0x1]
        %v280 = vld [vmem:[%s226 + $0xcc] sm:$0xf]
        %v281 = vld [vmem:[%s226 + $0xd0] sm:$0xf]
        %v282 = vld [vmem:[%s226 + $0xd4] sm:$0x1]
        %v283 = vld [vmem:[%s226 + $0xd8] sm:$0xf]
        %v284 = vld [vmem:[%s226 + $0xdc] sm:$0xf]
        %v285 = vld [vmem:[%s226 + $0xe0] sm:$0x1]
        %v286 = vld [vmem:[%s226 + $0xe4] sm:$0xf]
        %v287 = vld [vmem:[%s226 + $0xe8] sm:$0xf]
        %v288 = vld [vmem:[%s226 + $0xec] sm:$0x1]
        %v289 = vld [vmem:[%s226 + $0xf0] sm:$0xf]
        %v290 = vld [vmem:[%s226 + $0xf4] sm:$0xf]
        %v291 = vld [vmem:[%s226 + $0xf8] sm:$0x1]
        %v292 = vld [vmem:[%s226 + $0xfc] sm:$0xf]
        %v293 = vld [vmem:[%s226 + $0x100] sm:$0xf]
        %v294 = vld [vmem:[%s226 + $0x104] sm:$0x1]
        %v295 = vld [vmem:[%s226 + $0x108] sm:$0xf]
        %v296 = vld [vmem:[%s226 + $0x10c] sm:$0xf]
        %v297 = vld [vmem:[%s226 + $0x110] sm:$0x1]
        %v298 = vld [vmem:[%s226 + $0x114] sm:$0xf]
        %v299 = vld [vmem:[%s226 + $0x118] sm:$0xf]
        %v300 = vld [vmem:[%s226 + $0x11c] sm:$0x1]
        %v301 = vld [vmem:[%s226 + $0x120] sm:$0xf]
        %v302 = vld [vmem:[%s226 + $0x124] sm:$0xf]
        %v303 = vld [vmem:[%s226 + $0x128] sm:$0x1]
        %v304 = vld [vmem:[%s226 + $0x12c] sm:$0xf]
        %v305 = vld [vmem:[%s226 + $0x130] sm:$0xf]
        %v306 = vld [vmem:[%s226 + $0x134] sm:$0x1]
        %v307 = vld [vmem:[%s226 + $0x138] sm:$0xf]
        %v308 = vld [vmem:[%s226 + $0x13c] sm:$0xf]
        %v309 = vld [vmem:[%s226 + $0x140] sm:$0x1]
        %v310 = vld [vmem:[%s226 + $0x144] sm:$0xf]
        %v311 = vld [vmem:[%s226 + $0x148] sm:$0xf]
        %v312 = vld [vmem:[%s226 + $0x14c] sm:$0x1]
        %v313 = vld [vmem:[%s226 + $0x150] sm:$0xf]
        %v314 = vld [vmem:[%s226 + $0x154] sm:$0xf]
        %v315 = vld [vmem:[%s226 + $0x158] sm:$0x1]
        %v316 = vld [vmem:[%s226 + $0x15c] sm:$0xf]
        %v317 = vld [vmem:[%s226 + $0x160] sm:$0xf]
        %v318 = vld [vmem:[%s226 + $0x164] sm:$0x1]
        %v319 = vld [vmem:[%s226 + $0x168] sm:$0xf]
        %v320 = vld [vmem:[%s226 + $0x16c] sm:$0xf]
        %v321 = vld [vmem:[%s226 + $0x170] sm:$0x1]
        %v322 = vld [vmem:[%s226 + $0x174] sm:$0xf]
        %v323 = vld [vmem:[%s226 + $0x178] sm:$0xf]
        %v324 = vld [vmem:[%s226 + $0x17c] sm:$0x1]
        %v325 = vunpack.c.l.bf16 %v229
        %v326 = vunpack.c.l.bf16 %v230
        %v327 = vunpack.c.l.bf16 %v231
        %v328 = vunpack.c.l.bf16 %v232
        %v329 = vunpack.c.l.bf16 %v233
        %v330 = vunpack.c.l.bf16 %v234
        %v331 = vunpack.c.l.bf16 %v235
        %v332 = vunpack.c.l.bf16 %v236
        %v333 = vunpack.c.l.bf16 %v237
        %v334 = vunpack.c.l.bf16 %v238
        %v335 = vunpack.c.l.bf16 %v239
        %v336 = vunpack.c.l.bf16 %v240
        %v337 = vunpack.c.l.bf16 %v241
        %v338 = vunpack.c.l.bf16 %v242
        %v339 = vunpack.c.l.bf16 %v243
        %v340 = vunpack.c.l.bf16 %v244
        %v341 = vunpack.c.l.bf16 %v245
        %v342 = vunpack.c.l.bf16 %v246
        %v343 = vunpack.c.l.bf16 %v247
        %v344 = vunpack.c.l.bf16 %v248
        %v345 = vunpack.c.l.bf16 %v249
        %v346 = vunpack.c.l.bf16 %v250
        %v347 = vunpack.c.l.bf16 %v251
        %v348 = vunpack.c.l.bf16 %v252
        %v349 = vunpack.c.l.bf16 %v253
        %v350 = vunpack.c.l.bf16 %v254
        %v351 = vunpack.c.l.bf16 %v255
        %v352 = vunpack.c.l.bf16 %v256
        %v353 = vunpack.c.l.bf16 %v257
        %v354 = vunpack.c.l.bf16 %v258
        %v355 = vunpack.c.l.bf16 %v259
        %v356 = vunpack.c.l.bf16 %v260
        %v357 = vunpack.c.l.bf16 %v261
        %v358 = vunpack.c.l.bf16 %v262
        %v359 = vunpack.c.l.bf16 %v263
        %v360 = vunpack.c.l.bf16 %v264
        %v361 = vunpack.c.l.bf16 %v265
        %v362 = vunpack.c.l.bf16 %v266
        %v363 = vunpack.c.l.bf16 %v267
        %v364 = vunpack.c.l.bf16 %v268
        %v365 = vunpack.c.l.bf16 %v269
        %v366 = vunpack.c.l.bf16 %v270
        %v367 = vunpack.c.l.bf16 %v271
        %v368 = vunpack.c.l.bf16 %v272
        %v369 = vunpack.c.l.bf16 %v273
        %v370 = vunpack.c.l.bf16 %v274
        %v371 = vunpack.c.l.bf16 %v275
        %v372 = vunpack.c.l.bf16 %v276
        %v373 = vunpack.c.l.bf16 %v277
        %v374 = vunpack.c.l.bf16 %v278
        %v375 = vunpack.c.l.bf16 %v279
        %v376 = vunpack.c.l.bf16 %v280
        %v377 = vunpack.c.l.bf16 %v281
        %v378 = vunpack.c.l.bf16 %v282
        %v379 = vunpack.c.l.bf16 %v283
        %v380 = vunpack.c.l.bf16 %v284
        %v381 = vunpack.c.l.bf16 %v285
        %v382 = vunpack.c.l.bf16 %v286
        %v383 = vunpack.c.l.bf16 %v287
        %v384 = vunpack.c.l.bf16 %v288
        %v385 = vunpack.c.l.bf16 %v289
        %v386 = vunpack.c.l.bf16 %v290
        %v387 = vunpack.c.l.bf16 %v291
        %v388 = vunpack.c.l.bf16 %v292
        %v389 = vunpack.c.l.bf16 %v293
        %v390 = vunpack.c.l.bf16 %v294
        %v391 = vunpack.c.l.bf16 %v295
        %v392 = vunpack.c.l.bf16 %v296
        %v393 = vunpack.c.l.bf16 %v297
        %v394 = vunpack.c.l.bf16 %v298
        %v395 = vunpack.c.l.bf16 %v299
        %v396 = vunpack.c.l.bf16 %v300
        %v397 = vunpack.c.l.bf16 %v301
        %v398 = vunpack.c.l.bf16 %v302
        %v399 = vunpack.c.l.bf16 %v303
        %v400 = vunpack.c.l.bf16 %v304
        %v401 = vunpack.c.l.bf16 %v305
        %v402 = vunpack.c.l.bf16 %v306
        %v403 = vunpack.c.l.bf16 %v307
        %v404 = vunpack.c.l.bf16 %v308
        %v405 = vunpack.c.l.bf16 %v309
        %v406 = vunpack.c.l.bf16 %v310
        %v407 = vunpack.c.l.bf16 %v311
        %v408 = vunpack.c.l.bf16 %v312
        %v409 = vunpack.c.l.bf16 %v313
        %v410 = vunpack.c.l.bf16 %v314
        %v411 = vunpack.c.l.bf16 %v315
        %v412 = vunpack.c.l.bf16 %v316
        %v413 = vunpack.c.l.bf16 %v317
        %v414 = vunpack.c.l.bf16 %v318
        %v415 = vunpack.c.l.bf16 %v319
        %v416 = vunpack.c.l.bf16 %v320
        %v417 = vunpack.c.l.bf16 %v321
        %v418 = vunpack.c.l.bf16 %v322
        %v419 = vunpack.c.l.bf16 %v323
        %v420 = vunpack.c.l.bf16 %v324
        %vm485 = vcmask 1046528
        %v486 = vrot.slane %v325, 1
        %v487 = vrot.slane %v326, 1
        %v488 = vsel %vm485, %v486, %v487
        %v489 = vrot.slane %v328, 1
        %v490 = vrot.slane %v329, 1
        %v491 = vsel %vm485, %v489, %v490
        %v492 = vrot.slane %v331, 1
        %v493 = vrot.slane %v332, 1
        %v494 = vsel %vm485, %v492, %v493
        %v495 = vrot.slane %v334, 1
        %v496 = vrot.slane %v335, 1
        %v497 = vsel %vm485, %v495, %v496
        %v498 = vrot.slane %v337, 1
        %v499 = vrot.slane %v338, 1
        %v500 = vsel %vm485, %v498, %v499
        %v501 = vrot.slane %v340, 1
        %v502 = vrot.slane %v341, 1
        %v503 = vsel %vm485, %v501, %v502
        %v504 = vrot.slane %v343, 1
        %v505 = vrot.slane %v344, 1
        %v506 = vsel %vm485, %v504, %v505
        %v507 = vrot.slane %v346, 1
        %v508 = vrot.slane %v347, 1
        %v509 = vsel %vm485, %v507, %v508
        %v510 = vrot.slane %v349, 1
        %v511 = vrot.slane %v350, 1
        %v512 = vsel %vm485, %v510, %v511
        %v513 = vrot.slane %v352, 1
        %v514 = vrot.slane %v353, 1
        %v515 = vsel %vm485, %v513, %v514
        %v516 = vrot.slane %v355, 1
        %v517 = vrot.slane %v356, 1
        %v518 = vsel %vm485, %v516, %v517
        %v519 = vrot.slane %v358, 1
        %v520 = vrot.slane %v359, 1
        %v521 = vsel %vm485, %v519, %v520
        %v522 = vrot.slane %v361, 1
        %v523 = vrot.slane %v362, 1
        %v524 = vsel %vm485, %v522, %v523
        %v525 = vrot.slane %v364, 1
        %v526 = vrot.slane %v365, 1
        %v527 = vsel %vm485, %v525, %v526
        %v528 = vrot.slane %v367, 1
        %v529 = vrot.slane %v368, 1
        %v530 = vsel %vm485, %v528, %v529
        %v531 = vrot.slane %v370, 1
        %v532 = vrot.slane %v371, 1
        %v533 = vsel %vm485, %v531, %v532
        %v534 = vrot.slane %v373, 1
        %v535 = vrot.slane %v374, 1
        %v536 = vsel %vm485, %v534, %v535
        %v537 = vrot.slane %v376, 1
        %v538 = vrot.slane %v377, 1
        %v539 = vsel %vm485, %v537, %v538
        %v540 = vrot.slane %v379, 1
        %v541 = vrot.slane %v380, 1
        %v542 = vsel %vm485, %v540, %v541
        %v543 = vrot.slane %v382, 1
        %v544 = vrot.slane %v383, 1
        %v545 = vsel %vm485, %v543, %v544
        %v546 = vrot.slane %v385, 1
        %v547 = vrot.slane %v386, 1
        %v548 = vsel %vm485, %v546, %v547
        %v549 = vrot.slane %v388, 1
        %v550 = vrot.slane %v389, 1
        %v551 = vsel %vm485, %v549, %v550
        %v552 = vrot.slane %v391, 1
        %v553 = vrot.slane %v392, 1
        %v554 = vsel %vm485, %v552, %v553
        %v555 = vrot.slane %v394, 1
        %v556 = vrot.slane %v395, 1
        %v557 = vsel %vm485, %v555, %v556
        %v558 = vrot.slane %v397, 1
        %v559 = vrot.slane %v398, 1
        %v560 = vsel %vm485, %v558, %v559
        %v561 = vrot.slane %v400, 1
        %v562 = vrot.slane %v401, 1
        %v563 = vsel %vm485, %v561, %v562
        %v564 = vrot.slane %v403, 1
        %v565 = vrot.slane %v404, 1
        %v566 = vsel %vm485, %v564, %v565
        %v567 = vrot.slane %v406, 1
        %v568 = vrot.slane %v407, 1
        %v569 = vsel %vm485, %v567, %v568
        %v570 = vrot.slane %v409, 1
        %v571 = vrot.slane %v410, 1
        %v572 = vsel %vm485, %v570, %v571
        %v573 = vrot.slane %v412, 1
        %v574 = vrot.slane %v413, 1
        %v575 = vsel %vm485, %v573, %v574
        %v576 = vrot.slane %v415, 1
        %v577 = vrot.slane %v416, 1
        %v578 = vsel %vm485, %v576, %v577
        %v579 = vrot.slane %v418, 1
        %v580 = vrot.slane %v419, 1
        %v581 = vsel %vm485, %v579, %v580
        %582 = vrot.lane.b32.xlu0 %v488, 50
        %v583 = vpop.permute.xlu0 %582
        %584 = vrot.lane.b32.xlu0 %v487, 50
        %v585 = vpop.permute.xlu0 %584
        %586 = vrot.lane.b32.xlu0 %v491, 50
        %v587 = vpop.permute.xlu0 %586
        %588 = vrot.lane.b32.xlu0 %v490, 50
        %v589 = vpop.permute.xlu0 %588
        %590 = vrot.lane.b32.xlu0 %v494, 50
        %v591 = vpop.permute.xlu0 %590
        %592 = vrot.lane.b32.xlu0 %v493, 50
        %v593 = vpop.permute.xlu0 %592
        %594 = vrot.lane.b32.xlu0 %v497, 50
        %v595 = vpop.permute.xlu0 %594
        %596 = vrot.lane.b32.xlu0 %v496, 50
        %v597 = vpop.permute.xlu0 %596
        %598 = vrot.lane.b32.xlu0 %v500, 50
        %v599 = vpop.permute.xlu0 %598
        %600 = vrot.lane.b32.xlu0 %v499, 50
        %v601 = vpop.permute.xlu0 %600
        %602 = vrot.lane.b32.xlu0 %v503, 50
        %v603 = vpop.permute.xlu0 %602
        %604 = vrot.lane.b32.xlu0 %v502, 50
        %v605 = vpop.permute.xlu0 %604
        %606 = vrot.lane.b32.xlu0 %v506, 50
        %v607 = vpop.permute.xlu0 %606
        %608 = vrot.lane.b32.xlu0 %v505, 50
        %v609 = vpop.permute.xlu0 %608
        %610 = vrot.lane.b32.xlu0 %v509, 50
        %v611 = vpop.permute.xlu0 %610
        %612 = vrot.lane.b32.xlu0 %v508, 50
        %v613 = vpop.permute.xlu0 %612
        %614 = vrot.lane.b32.xlu0 %v512, 50
        %v615 = vpop.permute.xlu0 %614
        %616 = vrot.lane.b32.xlu0 %v511, 50
        %v617 = vpop.permute.xlu0 %616
        %618 = vrot.lane.b32.xlu0 %v515, 50
        %v619 = vpop.permute.xlu0 %618
        %620 = vrot.lane.b32.xlu0 %v514, 50
        %v621 = vpop.permute.xlu0 %620
        %622 = vrot.lane.b32.xlu0 %v518, 50
        %v623 = vpop.permute.xlu0 %622
        %624 = vrot.lane.b32.xlu0 %v517, 50
        %v625 = vpop.permute.xlu0 %624
        %626 = vrot.lane.b32.xlu0 %v521, 50
        %v627 = vpop.permute.xlu0 %626
        %628 = vrot.lane.b32.xlu0 %v520, 50
        %v629 = vpop.permute.xlu0 %628
        %630 = vrot.lane.b32.xlu0 %v524, 50
        %v631 = vpop.permute.xlu0 %630
        %632 = vrot.lane.b32.xlu0 %v523, 50
        %v633 = vpop.permute.xlu0 %632
        %634 = vrot.lane.b32.xlu0 %v527, 50
        %v635 = vpop.permute.xlu0 %634
        %636 = vrot.lane.b32.xlu0 %v526, 50
        %v637 = vpop.permute.xlu0 %636
        %638 = vrot.lane.b32.xlu0 %v530, 50
        %v639 = vpop.permute.xlu0 %638
        %640 = vrot.lane.b32.xlu0 %v529, 50
        %v641 = vpop.permute.xlu0 %640
        %642 = vrot.lane.b32.xlu0 %v533, 50
        %v643 = vpop.permute.xlu0 %642
        %644 = vrot.lane.b32.xlu0 %v532, 50
        %v645 = vpop.permute.xlu0 %644
        %646 = vrot.lane.b32.xlu0 %v536, 50
        %v647 = vpop.permute.xlu0 %646
        %648 = vrot.lane.b32.xlu0 %v535, 50
        %v649 = vpop.permute.xlu0 %648
        %650 = vrot.lane.b32.xlu0 %v539, 50
        %v651 = vpop.permute.xlu0 %650
        %652 = vrot.lane.b32.xlu0 %v538, 50
        %v653 = vpop.permute.xlu0 %652
        %654 = vrot.lane.b32.xlu0 %v542, 50
        %v655 = vpop.permute.xlu0 %654
        %656 = vrot.lane.b32.xlu0 %v541, 50
        %v657 = vpop.permute.xlu0 %656
        %658 = vrot.lane.b32.xlu0 %v545, 50
        %v659 = vpop.permute.xlu0 %658
        %660 = vrot.lane.b32.xlu0 %v544, 50
        %v661 = vpop.permute.xlu0 %660
        %662 = vrot.lane.b32.xlu0 %v548, 50
        %v663 = vpop.permute.xlu0 %662
        %664 = vrot.lane.b32.xlu0 %v547, 50
        %v665 = vpop.permute.xlu0 %664
        %666 = vrot.lane.b32.xlu0 %v551, 50
        %v667 = vpop.permute.xlu0 %666
        %668 = vrot.lane.b32.xlu0 %v550, 50
        %v669 = vpop.permute.xlu0 %668
        %670 = vrot.lane.b32.xlu0 %v554, 50
        %v671 = vpop.permute.xlu0 %670
        %672 = vrot.lane.b32.xlu0 %v553, 50
        %v673 = vpop.permute.xlu0 %672
        %674 = vrot.lane.b32.xlu0 %v557, 50
        %v675 = vpop.permute.xlu0 %674
        %676 = vrot.lane.b32.xlu0 %v556, 50
        %v677 = vpop.permute.xlu0 %676
        %678 = vrot.lane.b32.xlu0 %v560, 50
        %v679 = vpop.permute.xlu0 %678
        %680 = vrot.lane.b32.xlu0 %v559, 50
        %v681 = vpop.permute.xlu0 %680
        %682 = vrot.lane.b32.xlu0 %v563, 50
        %v683 = vpop.permute.xlu0 %682
        %684 = vrot.lane.b32.xlu0 %v562, 50
        %v685 = vpop.permute.xlu0 %684
        %686 = vrot.lane.b32.xlu0 %v566, 50
        %v687 = vpop.permute.xlu0 %686
        %688 = vrot.lane.b32.xlu0 %v565, 50
        %v689 = vpop.permute.xlu0 %688
        %690 = vrot.lane.b32.xlu0 %v569, 50
        %v691 = vpop.permute.xlu0 %690
        %692 = vrot.lane.b32.xlu0 %v568, 50
        %v693 = vpop.permute.xlu0 %692
        %694 = vrot.lane.b32.xlu0 %v572, 50
        %v695 = vpop.permute.xlu0 %694
        %696 = vrot.lane.b32.xlu0 %v571, 50
        %v697 = vpop.permute.xlu0 %696
        %698 = vrot.lane.b32.xlu0 %v575, 50
        %v699 = vpop.permute.xlu0 %698
        %700 = vrot.lane.b32.xlu0 %v574, 50
        %v701 = vpop.permute.xlu0 %700
        %702 = vrot.lane.b32.xlu0 %v578, 50
        %v703 = vpop.permute.xlu0 %702
        %704 = vrot.lane.b32.xlu0 %v577, 50
        %v705 = vpop.permute.xlu0 %704
        %706 = vrot.lane.b32.xlu0 %v581, 50
        %v707 = vpop.permute.xlu0 %706
        %708 = vrot.lane.b32.xlu0 %v580, 50
        %v709 = vpop.permute.xlu0 %708
        %vm774 = vcmask 1045504
        %v775 = vrot.slane %v325, 2
        %v776 = vrot.slane %v326, 2
        %v777 = vsel %vm774, %v775, %v776
        %v778 = vrot.slane %v328, 2
        %v779 = vrot.slane %v329, 2
        %v780 = vsel %vm774, %v778, %v779
        %v781 = vrot.slane %v331, 2
        %v782 = vrot.slane %v332, 2
        %v783 = vsel %vm774, %v781, %v782
        %v784 = vrot.slane %v334, 2
        %v785 = vrot.slane %v335, 2
        %v786 = vsel %vm774, %v784, %v785
        %v787 = vrot.slane %v337, 2
        %v788 = vrot.slane %v338, 2
        %v789 = vsel %vm774, %v787, %v788
        %v790 = vrot.slane %v340, 2
        %v791 = vrot.slane %v341, 2
        %v792 = vsel %vm774, %v790, %v791
        %v793 = vrot.slane %v343, 2
        %v794 = vrot.slane %v344, 2
        %v795 = vsel %vm774, %v793, %v794
        %v796 = vrot.slane %v346, 2
        %v797 = vrot.slane %v347, 2
        %v798 = vsel %vm774, %v796, %v797
        %v799 = vrot.slane %v349, 2
        %v800 = vrot.slane %v350, 2
        %v801 = vsel %vm774, %v799, %v800
        %v802 = vrot.slane %v352, 2
        %v803 = vrot.slane %v353, 2
        %v804 = vsel %vm774, %v802, %v803
        %v805 = vrot.slane %v355, 2
        %v806 = vrot.slane %v356, 2
        %v807 = vsel %vm774, %v805, %v806
        %v808 = vrot.slane %v358, 2
        %v809 = vrot.slane %v359, 2
        %v810 = vsel %vm774, %v808, %v809
        %v811 = vrot.slane %v361, 2
        %v812 = vrot.slane %v362, 2
        %v813 = vsel %vm774, %v811, %v812
        %v814 = vrot.slane %v364, 2
        %v815 = vrot.slane %v365, 2
        %v816 = vsel %vm774, %v814, %v815
        %v817 = vrot.slane %v367, 2
        %v818 = vrot.slane %v368, 2
        %v819 = vsel %vm774, %v817, %v818
        %v820 = vrot.slane %v370, 2
        %v821 = vrot.slane %v371, 2
        %v822 = vsel %vm774, %v820, %v821
        %v823 = vrot.slane %v373, 2
        %v824 = vrot.slane %v374, 2
        %v825 = vsel %vm774, %v823, %v824
        %v826 = vrot.slane %v376, 2
        %v827 = vrot.slane %v377, 2
        %v828 = vsel %vm774, %v826, %v827
        %v829 = vrot.slane %v379, 2
        %v830 = vrot.slane %v380, 2
        %v831 = vsel %vm774, %v829, %v830
        %v832 = vrot.slane %v382, 2
        %v833 = vrot.slane %v383, 2
        %v834 = vsel %vm774, %v832, %v833
        %v835 = vrot.slane %v385, 2
        %v836 = vrot.slane %v386, 2
        %v837 = vsel %vm774, %v835, %v836
        %v838 = vrot.slane %v388, 2
        %v839 = vrot.slane %v389, 2
        %v840 = vsel %vm774, %v838, %v839
        %v841 = vrot.slane %v391, 2
        %v842 = vrot.slane %v392, 2
        %v843 = vsel %vm774, %v841, %v842
        %v844 = vrot.slane %v394, 2
        %v845 = vrot.slane %v395, 2
        %v846 = vsel %vm774, %v844, %v845
        %v847 = vrot.slane %v397, 2
        %v848 = vrot.slane %v398, 2
        %v849 = vsel %vm774, %v847, %v848
        %v850 = vrot.slane %v400, 2
        %v851 = vrot.slane %v401, 2
        %v852 = vsel %vm774, %v850, %v851
        %v853 = vrot.slane %v403, 2
        %v854 = vrot.slane %v404, 2
        %v855 = vsel %vm774, %v853, %v854
        %v856 = vrot.slane %v406, 2
        %v857 = vrot.slane %v407, 2
        %v858 = vsel %vm774, %v856, %v857
        %v859 = vrot.slane %v409, 2
        %v860 = vrot.slane %v410, 2
        %v861 = vsel %vm774, %v859, %v860
        %v862 = vrot.slane %v412, 2
        %v863 = vrot.slane %v413, 2
        %v864 = vsel %vm774, %v862, %v863
        %v865 = vrot.slane %v415, 2
        %v866 = vrot.slane %v416, 2
        %v867 = vsel %vm774, %v865, %v866
        %v868 = vrot.slane %v418, 2
        %v869 = vrot.slane %v419, 2
        %v870 = vsel %vm774, %v868, %v869
        %871 = vrot.lane.b32.xlu0 %v777, 100
        %v872 = vpop.permute.xlu0 %871
        %873 = vrot.lane.b32.xlu0 %v776, 100
        %v874 = vpop.permute.xlu0 %873
        %875 = vrot.lane.b32.xlu0 %v780, 100
        %v876 = vpop.permute.xlu0 %875
        %877 = vrot.lane.b32.xlu0 %v779, 100
        %v878 = vpop.permute.xlu0 %877
        %879 = vrot.lane.b32.xlu0 %v783, 100
        %v880 = vpop.permute.xlu0 %879
        %881 = vrot.lane.b32.xlu0 %v782, 100
        %v882 = vpop.permute.xlu0 %881
        %883 = vrot.lane.b32.xlu0 %v786, 100
        %v884 = vpop.permute.xlu0 %883
        %885 = vrot.lane.b32.xlu0 %v785, 100
        %v886 = vpop.permute.xlu0 %885
        %887 = vrot.lane.b32.xlu0 %v789, 100
        %v888 = vpop.permute.xlu0 %887
        %889 = vrot.lane.b32.xlu0 %v788, 100
        %v890 = vpop.permute.xlu0 %889
        %891 = vrot.lane.b32.xlu0 %v792, 100
        %v892 = vpop.permute.xlu0 %891
        %893 = vrot.lane.b32.xlu0 %v791, 100
        %v894 = vpop.permute.xlu0 %893
        %895 = vrot.lane.b32.xlu0 %v795, 100
        %v896 = vpop.permute.xlu0 %895
        %897 = vrot.lane.b32.xlu0 %v794, 100
        %v898 = vpop.permute.xlu0 %897
        %899 = vrot.lane.b32.xlu0 %v798, 100
        %v900 = vpop.permute.xlu0 %899
        %901 = vrot.lane.b32.xlu0 %v797, 100
        %v902 = vpop.permute.xlu0 %901
        %903 = vrot.lane.b32.xlu0 %v801, 100
        %v904 = vpop.permute.xlu0 %903
        %905 = vrot.lane.b32.xlu0 %v800, 100
        %v906 = vpop.permute.xlu0 %905
        %907 = vrot.lane.b32.xlu0 %v804, 100
        %v908 = vpop.permute.xlu0 %907
        %909 = vrot.lane.b32.xlu0 %v803, 100
        %v910 = vpop.permute.xlu0 %909
        %911 = vrot.lane.b32.xlu0 %v807, 100
        %v912 = vpop.permute.xlu0 %911
        %913 = vrot.lane.b32.xlu0 %v806, 100
        %v914 = vpop.permute.xlu0 %913
        %915 = vrot.lane.b32.xlu0 %v810, 100
        %v916 = vpop.permute.xlu0 %915
        %917 = vrot.lane.b32.xlu0 %v809, 100
        %v918 = vpop.permute.xlu0 %917
        %919 = vrot.lane.b32.xlu0 %v813, 100
        %v920 = vpop.permute.xlu0 %919
        %921 = vrot.lane.b32.xlu0 %v812, 100
        %v922 = vpop.permute.xlu0 %921
        %923 = vrot.lane.b32.xlu0 %v816, 100
        %v924 = vpop.permute.xlu0 %923
        %925 = vrot.lane.b32.xlu0 %v815, 100
        %v926 = vpop.permute.xlu0 %925
        %927 = vrot.lane.b32.xlu0 %v819, 100
        %v928 = vpop.permute.xlu0 %927
        %929 = vrot.lane.b32.xlu0 %v818, 100
        %v930 = vpop.permute.xlu0 %929
        %931 = vrot.lane.b32.xlu0 %v822, 100
        %v932 = vpop.permute.xlu0 %931
        %933 = vrot.lane.b32.xlu0 %v821, 100
        %v934 = vpop.permute.xlu0 %933
        %935 = vrot.lane.b32.xlu0 %v825, 100
        %v936 = vpop.permute.xlu0 %935
        %937 = vrot.lane.b32.xlu0 %v824, 100
        %v938 = vpop.permute.xlu0 %937
        %939 = vrot.lane.b32.xlu0 %v828, 100
        %v940 = vpop.permute.xlu0 %939
        %941 = vrot.lane.b32.xlu0 %v827, 100
        %v942 = vpop.permute.xlu0 %941
        %943 = vrot.lane.b32.xlu0 %v831, 100
        %v944 = vpop.permute.xlu0 %943
        %945 = vrot.lane.b32.xlu0 %v830, 100
        %v946 = vpop.permute.xlu0 %945
        %947 = vrot.lane.b32.xlu0 %v834, 100
        %v948 = vpop.permute.xlu0 %947
        %949 = vrot.lane.b32.xlu0 %v833, 100
        %v950 = vpop.permute.xlu0 %949
        %951 = vrot.lane.b32.xlu0 %v837, 100
        %v952 = vpop.permute.xlu0 %951
        %953 = vrot.lane.b32.xlu0 %v836, 100
        %v954 = vpop.permute.xlu0 %953
        %955 = vrot.lane.b32.xlu0 %v840, 100
        %v956 = vpop.permute.xlu0 %955
        %957 = vrot.lane.b32.xlu0 %v839, 100
        %v958 = vpop.permute.xlu0 %957
        %959 = vrot.lane.b32.xlu0 %v843, 100
        %v960 = vpop.permute.xlu0 %959
        %961 = vrot.lane.b32.xlu0 %v842, 100
        %v962 = vpop.permute.xlu0 %961
        %963 = vrot.lane.b32.xlu0 %v846, 100
        %v964 = vpop.permute.xlu0 %963
        %965 = vrot.lane.b32.xlu0 %v845, 100
        %v966 = vpop.permute.xlu0 %965
        %967 = vrot.lane.b32.xlu0 %v849, 100
        %v968 = vpop.permute.xlu0 %967
        %969 = vrot.lane.b32.xlu0 %v848, 100
        %v970 = vpop.permute.xlu0 %969
        %971 = vrot.lane.b32.xlu0 %v852, 100
        %v972 = vpop.permute.xlu0 %971
        %973 = vrot.lane.b32.xlu0 %v851, 100
        %v974 = vpop.permute.xlu0 %973
        %975 = vrot.lane.b32.xlu0 %v855, 100
        %v976 = vpop.permute.xlu0 %975
        %977 = vrot.lane.b32.xlu0 %v854, 100
        %v978 = vpop.permute.xlu0 %977
        %979 = vrot.lane.b32.xlu0 %v858, 100
        %v980 = vpop.permute.xlu0 %979
        %981 = vrot.lane.b32.xlu0 %v857, 100
        %v982 = vpop.permute.xlu0 %981
        %983 = vrot.lane.b32.xlu0 %v861, 100
        %v984 = vpop.permute.xlu0 %983
        %985 = vrot.lane.b32.xlu0 %v860, 100
        %v986 = vpop.permute.xlu0 %985
        %987 = vrot.lane.b32.xlu0 %v864, 100
        %v988 = vpop.permute.xlu0 %987
        %989 = vrot.lane.b32.xlu0 %v863, 100
        %v990 = vpop.permute.xlu0 %989
        %991 = vrot.lane.b32.xlu0 %v867, 100
        %v992 = vpop.permute.xlu0 %991
        %993 = vrot.lane.b32.xlu0 %v866, 100
        %v994 = vpop.permute.xlu0 %993
        %995 = vrot.lane.b32.xlu0 %v870, 100
        %v996 = vpop.permute.xlu0 %995
        %997 = vrot.lane.b32.xlu0 %v869, 100
        %v998 = vpop.permute.xlu0 %997
        %vm1095 = vcmask 1044480
        %v1096 = vrot.slane %v325, 3
        %v1097 = vrot.slane %v326, 3
        %v1098 = vsel %vm1095, %v1096, %v1097
        %v1099 = vrot.slane %v327, 3
        %v1100 = vsel %vm1095, %v1097, %v1099
        %v1101 = vrot.slane %v328, 3
        %v1102 = vrot.slane %v329, 3
        %v1103 = vsel %vm1095, %v1101, %v1102
        %v1104 = vrot.slane %v330, 3
        %v1105 = vsel %vm1095, %v1102, %v1104
        %v1106 = vrot.slane %v331, 3
        %v1107 = vrot.slane %v332, 3
        %v1108 = vsel %vm1095, %v1106, %v1107
        %v1109 = vrot.slane %v333, 3
        %v1110 = vsel %vm1095, %v1107, %v1109
        %v1111 = vrot.slane %v334, 3
        %v1112 = vrot.slane %v335, 3
        %v1113 = vsel %vm1095, %v1111, %v1112
        %v1114 = vrot.slane %v336, 3
        %v1115 = vsel %vm1095, %v1112, %v1114
        %v1116 = vrot.slane %v337, 3
        %v1117 = vrot.slane %v338, 3
        %v1118 = vsel %vm1095, %v1116, %v1117
        %v1119 = vrot.slane %v339, 3
        %v1120 = vsel %vm1095, %v1117, %v1119
        %v1121 = vrot.slane %v340, 3
        %v1122 = vrot.slane %v341, 3
        %v1123 = vsel %vm1095, %v1121, %v1122
        %v1124 = vrot.slane %v342, 3
        %v1125 = vsel %vm1095, %v1122, %v1124
        %v1126 = vrot.slane %v343, 3
        %v1127 = vrot.slane %v344, 3
        %v1128 = vsel %vm1095, %v1126, %v1127
        %v1129 = vrot.slane %v345, 3
        %v1130 = vsel %vm1095, %v1127, %v1129
        %v1131 = vrot.slane %v346, 3
        %v1132 = vrot.slane %v347, 3
        %v1133 = vsel %vm1095, %v1131, %v1132
        %v1134 = vrot.slane %v348, 3
        %v1135 = vsel %vm1095, %v1132, %v1134
        %v1136 = vrot.slane %v349, 3
        %v1137 = vrot.slane %v350, 3
        %v1138 = vsel %vm1095, %v1136, %v1137
        %v1139 = vrot.slane %v351, 3
        %v1140 = vsel %vm1095, %v1137, %v1139
        %v1141 = vrot.slane %v352, 3
        %v1142 = vrot.slane %v353, 3
        %v1143 = vsel %vm1095, %v1141, %v1142
        %v1144 = vrot.slane %v354, 3
        %v1145 = vsel %vm1095, %v1142, %v1144
        %v1146 = vrot.slane %v355, 3
        %v1147 = vrot.slane %v356, 3
        %v1148 = vsel %vm1095, %v1146, %v1147
        %v1149 = vrot.slane %v357, 3
        %v1150 = vsel %vm1095, %v1147, %v1149
        %v1151 = vrot.slane %v358, 3
        %v1152 = vrot.slane %v359, 3
        %v1153 = vsel %vm1095, %v1151, %v1152
        %v1154 = vrot.slane %v360, 3
        %v1155 = vsel %vm1095, %v1152, %v1154
        %v1156 = vrot.slane %v361, 3
        %v1157 = vrot.slane %v362, 3
        %v1158 = vsel %vm1095, %v1156, %v1157
        %v1159 = vrot.slane %v363, 3
        %v1160 = vsel %vm1095, %v1157, %v1159
        %v1161 = vrot.slane %v364, 3
        %v1162 = vrot.slane %v365, 3
        %v1163 = vsel %vm1095, %v1161, %v1162
        %v1164 = vrot.slane %v366, 3
        %v1165 = vsel %vm1095, %v1162, %v1164
        %v1166 = vrot.slane %v367, 3
        %v1167 = vrot.slane %v368, 3
        %v1168 = vsel %vm1095, %v1166, %v1167
        %v1169 = vrot.slane %v369, 3
        %v1170 = vsel %vm1095, %v1167, %v1169
        %v1171 = vrot.slane %v370, 3
        %v1172 = vrot.slane %v371, 3
        %v1173 = vsel %vm1095, %v1171, %v1172
        %v1174 = vrot.slane %v372, 3
        %v1175 = vsel %vm1095, %v1172, %v1174
        %v1176 = vrot.slane %v373, 3
        %v1177 = vrot.slane %v374, 3
        %v1178 = vsel %vm1095, %v1176, %v1177
        %v1179 = vrot.slane %v375, 3
        %v1180 = vsel %vm1095, %v1177, %v1179
        %v1181 = vrot.slane %v376, 3
        %v1182 = vrot.slane %v377, 3
        %v1183 = vsel %vm1095, %v1181, %v1182
        %v1184 = vrot.slane %v378, 3
        %v1185 = vsel %vm1095, %v1182, %v1184
        %v1186 = vrot.slane %v379, 3
        %v1187 = vrot.slane %v380, 3
        %v1188 = vsel %vm1095, %v1186, %v1187
        %v1189 = vrot.slane %v381, 3
        %v1190 = vsel %vm1095, %v1187, %v1189
        %v1191 = vrot.slane %v382, 3
        %v1192 = vrot.slane %v383, 3
        %v1193 = vsel %vm1095, %v1191, %v1192
        %v1194 = vrot.slane %v384, 3
        %v1195 = vsel %vm1095, %v1192, %v1194
        %v1196 = vrot.slane %v385, 3
        %v1197 = vrot.slane %v386, 3
        %v1198 = vsel %vm1095, %v1196, %v1197
        %v1199 = vrot.slane %v387, 3
        %v1200 = vsel %vm1095, %v1197, %v1199
        %v1201 = vrot.slane %v388, 3
        %v1202 = vrot.slane %v389, 3
        %v1203 = vsel %vm1095, %v1201, %v1202
        %v1204 = vrot.slane %v390, 3
        %v1205 = vsel %vm1095, %v1202, %v1204
        %v1206 = vrot.slane %v391, 3
        %v1207 = vrot.slane %v392, 3
        %v1208 = vsel %vm1095, %v1206, %v1207
        %v1209 = vrot.slane %v393, 3
        %v1210 = vsel %vm1095, %v1207, %v1209
        %v1211 = vrot.slane %v394, 3
        %v1212 = vrot.slane %v395, 3
        %v1213 = vsel %vm1095, %v1211, %v1212
        %v1214 = vrot.slane %v396, 3
        %v1215 = vsel %vm1095, %v1212, %v1214
        %v1216 = vrot.slane %v397, 3
        %v1217 = vrot.slane %v398, 3
        %v1218 = vsel %vm1095, %v1216, %v1217
        %v1219 = vrot.slane %v399, 3
        %v1220 = vsel %vm1095, %v1217, %v1219
        %v1221 = vrot.slane %v400, 3
        %v1222 = vrot.slane %v401, 3
        %v1223 = vsel %vm1095, %v1221, %v1222
        %v1224 = vrot.slane %v402, 3
        %v1225 = vsel %vm1095, %v1222, %v1224
        %v1226 = vrot.slane %v403, 3
        %v1227 = vrot.slane %v404, 3
        %v1228 = vsel %vm1095, %v1226, %v1227
        %v1229 = vrot.slane %v405, 3
        %v1230 = vsel %vm1095, %v1227, %v1229
        %v1231 = vrot.slane %v406, 3
        %v1232 = vrot.slane %v407, 3
        %v1233 = vsel %vm1095, %v1231, %v1232
        %v1234 = vrot.slane %v408, 3
        %v1235 = vsel %vm1095, %v1232, %v1234
        %v1236 = vrot.slane %v409, 3
        %v1237 = vrot.slane %v410, 3
        %v1238 = vsel %vm1095, %v1236, %v1237
        %v1239 = vrot.slane %v411, 3
        %v1240 = vsel %vm1095, %v1237, %v1239
        %v1241 = vrot.slane %v412, 3
        %v1242 = vrot.slane %v413, 3
        %v1243 = vsel %vm1095, %v1241, %v1242
        %v1244 = vrot.slane %v414, 3
        %v1245 = vsel %vm1095, %v1242, %v1244
        %v1246 = vrot.slane %v415, 3
        %v1247 = vrot.slane %v416, 3
        %v1248 = vsel %vm1095, %v1246, %v1247
        %v1249 = vrot.slane %v417, 3
        %v1250 = vsel %vm1095, %v1247, %v1249
        %v1251 = vrot.slane %v418, 3
        %v1252 = vrot.slane %v419, 3
        %v1253 = vsel %vm1095, %v1251, %v1252
        %v1254 = vrot.slane %v420, 3
        %v1255 = vsel %vm1095, %v1252, %v1254
        %1256 = vrot.lane.b32.xlu0 %v1098, 22
        %v1257 = vpop.permute.xlu0 %1256
        %1258 = vrot.lane.b32.xlu0 %v1100, 22
        %v1259 = vpop.permute.xlu0 %1258
        %1260 = vrot.lane.b32.xlu0 %v1103, 22
        %v1261 = vpop.permute.xlu0 %1260
        %1262 = vrot.lane.b32.xlu0 %v1105, 22
        %v1263 = vpop.permute.xlu0 %1262
        %1264 = vrot.lane.b32.xlu0 %v1108, 22
        %v1265 = vpop.permute.xlu0 %1264
        %1266 = vrot.lane.b32.xlu0 %v1110, 22
        %v1267 = vpop.permute.xlu0 %1266
        %1268 = vrot.lane.b32.xlu0 %v1113, 22
        %v1269 = vpop.permute.xlu0 %1268
        %1270 = vrot.lane.b32.xlu0 %v1115, 22
        %v1271 = vpop.permute.xlu0 %1270
        %1272 = vrot.lane.b32.xlu0 %v1118, 22
        %v1273 = vpop.permute.xlu0 %1272
        %1274 = vrot.lane.b32.xlu0 %v1120, 22
        %v1275 = vpop.permute.xlu0 %1274
        %1276 = vrot.lane.b32.xlu0 %v1123, 22
        %v1277 = vpop.permute.xlu0 %1276
        %1278 = vrot.lane.b32.xlu0 %v1125, 22
        %v1279 = vpop.permute.xlu0 %1278
        %1280 = vrot.lane.b32.xlu0 %v1128, 22
        %v1281 = vpop.permute.xlu0 %1280
        %1282 = vrot.lane.b32.xlu0 %v1130, 22
        %v1283 = vpop.permute.xlu0 %1282
        %1284 = vrot.lane.b32.xlu0 %v1133, 22
        %v1285 = vpop.permute.xlu0 %1284
        %1286 = vrot.lane.b32.xlu0 %v1135, 22
        %v1287 = vpop.permute.xlu0 %1286
        %1288 = vrot.lane.b32.xlu0 %v1138, 22
        %v1289 = vpop.permute.xlu0 %1288
        %1290 = vrot.lane.b32.xlu0 %v1140, 22
        %v1291 = vpop.permute.xlu0 %1290
        %1292 = vrot.lane.b32.xlu0 %v1143, 22
        %v1293 = vpop.permute.xlu0 %1292
        %1294 = vrot.lane.b32.xlu0 %v1145, 22
        %v1295 = vpop.permute.xlu0 %1294
        %1296 = vrot.lane.b32.xlu0 %v1148, 22
        %v1297 = vpop.permute.xlu0 %1296
        %1298 = vrot.lane.b32.xlu0 %v1150, 22
        %v1299 = vpop.permute.xlu0 %1298
        %1300 = vrot.lane.b32.xlu0 %v1153, 22
        %v1301 = vpop.permute.xlu0 %1300
        %1302 = vrot.lane.b32.xlu0 %v1155, 22
        %v1303 = vpop.permute.xlu0 %1302
        %1304 = vrot.lane.b32.xlu0 %v1158, 22
        %v1305 = vpop.permute.xlu0 %1304
        %1306 = vrot.lane.b32.xlu0 %v1160, 22
        %v1307 = vpop.permute.xlu0 %1306
        %1308 = vrot.lane.b32.xlu0 %v1163, 22
        %v1309 = vpop.permute.xlu0 %1308
        %1310 = vrot.lane.b32.xlu0 %v1165, 22
        %v1311 = vpop.permute.xlu0 %1310
        %1312 = vrot.lane.b32.xlu0 %v1168, 22
        %v1313 = vpop.permute.xlu0 %1312
        %1314 = vrot.lane.b32.xlu0 %v1170, 22
        %v1315 = vpop.permute.xlu0 %1314
        %1316 = vrot.lane.b32.xlu0 %v1173, 22
        %v1317 = vpop.permute.xlu0 %1316
        %1318 = vrot.lane.b32.xlu0 %v1175, 22
        %v1319 = vpop.permute.xlu0 %1318
        %1320 = vrot.lane.b32.xlu0 %v1178, 22
        %v1321 = vpop.permute.xlu0 %1320
        %1322 = vrot.lane.b32.xlu0 %v1180, 22
        %v1323 = vpop.permute.xlu0 %1322
        %1324 = vrot.lane.b32.xlu0 %v1183, 22
        %v1325 = vpop.permute.xlu0 %1324
        %1326 = vrot.lane.b32.xlu0 %v1185, 22
        %v1327 = vpop.permute.xlu0 %1326
        %1328 = vrot.lane.b32.xlu0 %v1188, 22
        %v1329 = vpop.permute.xlu0 %1328
        %1330 = vrot.lane.b32.xlu0 %v1190, 22
        %v1331 = vpop.permute.xlu0 %1330
        %1332 = vrot.lane.b32.xlu0 %v1193, 22
        %v1333 = vpop.permute.xlu0 %1332
        %1334 = vrot.lane.b32.xlu0 %v1195, 22
        %v1335 = vpop.permute.xlu0 %1334
        %1336 = vrot.lane.b32.xlu0 %v1198, 22
        %v1337 = vpop.permute.xlu0 %1336
        %1338 = vrot.lane.b32.xlu0 %v1200, 22
        %v1339 = vpop.permute.xlu0 %1338
        %1340 = vrot.lane.b32.xlu0 %v1203, 22
        %v1341 = vpop.permute.xlu0 %1340
        %1342 = vrot.lane.b32.xlu0 %v1205, 22
        %v1343 = vpop.permute.xlu0 %1342
        %1344 = vrot.lane.b32.xlu0 %v1208, 22
        %v1345 = vpop.permute.xlu0 %1344
        %1346 = vrot.lane.b32.xlu0 %v1210, 22
        %v1347 = vpop.permute.xlu0 %1346
        %1348 = vrot.lane.b32.xlu0 %v1213, 22
        %v1349 = vpop.permute.xlu0 %1348
        %1350 = vrot.lane.b32.xlu0 %v1215, 22
        %v1351 = vpop.permute.xlu0 %1350
        %1352 = vrot.lane.b32.xlu0 %v1218, 22
        %v1353 = vpop.permute.xlu0 %1352
        %1354 = vrot.lane.b32.xlu0 %v1220, 22
        %v1355 = vpop.permute.xlu0 %1354
        %1356 = vrot.lane.b32.xlu0 %v1223, 22
        %v1357 = vpop.permute.xlu0 %1356
        %1358 = vrot.lane.b32.xlu0 %v1225, 22
        %v1359 = vpop.permute.xlu0 %1358
        %1360 = vrot.lane.b32.xlu0 %v1228, 22
        %v1361 = vpop.permute.xlu0 %1360
        %1362 = vrot.lane.b32.xlu0 %v1230, 22
        %v1363 = vpop.permute.xlu0 %1362
        %1364 = vrot.lane.b32.xlu0 %v1233, 22
        %v1365 = vpop.permute.xlu0 %1364
        %1366 = vrot.lane.b32.xlu0 %v1235, 22
        %v1367 = vpop.permute.xlu0 %1366
        %1368 = vrot.lane.b32.xlu0 %v1238, 22
        %v1369 = vpop.permute.xlu0 %1368
        %1370 = vrot.lane.b32.xlu0 %v1240, 22
        %v1371 = vpop.permute.xlu0 %1370
        %1372 = vrot.lane.b32.xlu0 %v1243, 22
        %v1373 = vpop.permute.xlu0 %1372
        %1374 = vrot.lane.b32.xlu0 %v1245, 22
        %v1375 = vpop.permute.xlu0 %1374
        %1376 = vrot.lane.b32.xlu0 %v1248, 22
        %v1377 = vpop.permute.xlu0 %1376
        %1378 = vrot.lane.b32.xlu0 %v1250, 22
        %v1379 = vpop.permute.xlu0 %1378
        %1380 = vrot.lane.b32.xlu0 %v1253, 22
        %v1381 = vpop.permute.xlu0 %1380
        %1382 = vrot.lane.b32.xlu0 %v1255, 22
        %v1383 = vpop.permute.xlu0 %1382
        %vm1448 = vcmask 1043456
        %v1449 = vrot.slane %v325, 4
        %v1450 = vrot.slane %v326, 4
        %v1451 = vsel %vm1448, %v1449, %v1450
        %v1452 = vrot.slane %v327, 4
        %v1453 = vsel %vm1448, %v1450, %v1452
        %v1454 = vrot.slane %v328, 4
        %v1455 = vrot.slane %v329, 4
        %v1456 = vsel %vm1448, %v1454, %v1455
        %v1457 = vrot.slane %v330, 4
        %v1458 = vsel %vm1448, %v1455, %v1457
        %v1459 = vrot.slane %v331, 4
        %v1460 = vrot.slane %v332, 4
        %v1461 = vsel %vm1448, %v1459, %v1460
        %v1462 = vrot.slane %v333, 4
        %v1463 = vsel %vm1448, %v1460, %v1462
        %v1464 = vrot.slane %v334, 4
        %v1465 = vrot.slane %v335, 4
        %v1466 = vsel %vm1448, %v1464, %v1465
        %v1467 = vrot.slane %v336, 4
        %v1468 = vsel %vm1448, %v1465, %v1467
        %v1469 = vrot.slane %v337, 4
        %v1470 = vrot.slane %v338, 4
        %v1471 = vsel %vm1448, %v1469, %v1470
        %v1472 = vrot.slane %v339, 4
        %v1473 = vsel %vm1448, %v1470, %v1472
        %v1474 = vrot.slane %v340, 4
        %v1475 = vrot.slane %v341, 4
        %v1476 = vsel %vm1448, %v1474, %v1475
        %v1477 = vrot.slane %v342, 4
        %v1478 = vsel %vm1448, %v1475, %v1477
        %v1479 = vrot.slane %v343, 4
        %v1480 = vrot.slane %v344, 4
        %v1481 = vsel %vm1448, %v1479, %v1480
        %v1482 = vrot.slane %v345, 4
        %v1483 = vsel %vm1448, %v1480, %v1482
        %v1484 = vrot.slane %v346, 4
        %v1485 = vrot.slane %v347, 4
        %v1486 = vsel %vm1448, %v1484, %v1485
        %v1487 = vrot.slane %v348, 4
        %v1488 = vsel %vm1448, %v1485, %v1487
        %v1489 = vrot.slane %v349, 4
        %v1490 = vrot.slane %v350, 4
        %v1491 = vsel %vm1448, %v1489, %v1490
        %v1492 = vrot.slane %v351, 4
        %v1493 = vsel %vm1448, %v1490, %v1492
        %v1494 = vrot.slane %v352, 4
        %v1495 = vrot.slane %v353, 4
        %v1496 = vsel %vm1448, %v1494, %v1495
        %v1497 = vrot.slane %v354, 4
        %v1498 = vsel %vm1448, %v1495, %v1497
        %v1499 = vrot.slane %v355, 4
        %v1500 = vrot.slane %v356, 4
        %v1501 = vsel %vm1448, %v1499, %v1500
        %v1502 = vrot.slane %v357, 4
        %v1503 = vsel %vm1448, %v1500, %v1502
        %v1504 = vrot.slane %v358, 4
        %v1505 = vrot.slane %v359, 4
        %v1506 = vsel %vm1448, %v1504, %v1505
        %v1507 = vrot.slane %v360, 4
        %v1508 = vsel %vm1448, %v1505, %v1507
        %v1509 = vrot.slane %v361, 4
        %v1510 = vrot.slane %v362, 4
        %v1511 = vsel %vm1448, %v1509, %v1510
        %v1512 = vrot.slane %v363, 4
        %v1513 = vsel %vm1448, %v1510, %v1512
        %v1514 = vrot.slane %v364, 4
        %v1515 = vrot.slane %v365, 4
        %v1516 = vsel %vm1448, %v1514, %v1515
        %v1517 = vrot.slane %v366, 4
        %v1518 = vsel %vm1448, %v1515, %v1517
        %v1519 = vrot.slane %v367, 4
        %v1520 = vrot.slane %v368, 4
        %v1521 = vsel %vm1448, %v1519, %v1520
        %v1522 = vrot.slane %v369, 4
        %v1523 = vsel %vm1448, %v1520, %v1522
        %v1524 = vrot.slane %v370, 4
        %v1525 = vrot.slane %v371, 4
        %v1526 = vsel %vm1448, %v1524, %v1525
        %v1527 = vrot.slane %v372, 4
        %v1528 = vsel %vm1448, %v1525, %v1527
        %v1529 = vrot.slane %v373, 4
        %v1530 = vrot.slane %v374, 4
        %v1531 = vsel %vm1448, %v1529, %v1530
        %v1532 = vrot.slane %v375, 4
        %v1533 = vsel %vm1448, %v1530, %v1532
        %v1534 = vrot.slane %v376, 4
        %v1535 = vrot.slane %v377, 4
        %v1536 = vsel %vm1448, %v1534, %v1535
        %v1537 = vrot.slane %v378, 4
        %v1538 = vsel %vm1448, %v1535, %v1537
        %v1539 = vrot.slane %v379, 4
        %v1540 = vrot.slane %v380, 4
        %v1541 = vsel %vm1448, %v1539, %v1540
        %v1542 = vrot.slane %v381, 4
        %v1543 = vsel %vm1448, %v1540, %v1542
        %v1544 = vrot.slane %v382, 4
        %v1545 = vrot.slane %v383, 4
        %v1546 = vsel %vm1448, %v1544, %v1545
        %v1547 = vrot.slane %v384, 4
        %v1548 = vsel %vm1448, %v1545, %v1547
        %v1549 = vrot.slane %v385, 4
        %v1550 = vrot.slane %v386, 4
        %v1551 = vsel %vm1448, %v1549, %v1550
        %v1552 = vrot.slane %v387, 4
        %v1553 = vsel %vm1448, %v1550, %v1552
        %v1554 = vrot.slane %v388, 4
        %v1555 = vrot.slane %v389, 4
        %v1556 = vsel %vm1448, %v1554, %v1555
        %v1557 = vrot.slane %v390, 4
        %v1558 = vsel %vm1448, %v1555, %v1557
        %v1559 = vrot.slane %v391, 4
        %v1560 = vrot.slane %v392, 4
        %v1561 = vsel %vm1448, %v1559, %v1560
        %v1562 = vrot.slane %v393, 4
        %v1563 = vsel %vm1448, %v1560, %v1562
        %v1564 = vrot.slane %v394, 4
        %v1565 = vrot.slane %v395, 4
        %v1566 = vsel %vm1448, %v1564, %v1565
        %v1567 = vrot.slane %v396, 4
        %v1568 = vsel %vm1448, %v1565, %v1567
        %v1569 = vrot.slane %v397, 4
        %v1570 = vrot.slane %v398, 4
        %v1571 = vsel %vm1448, %v1569, %v1570
        %v1572 = vrot.slane %v399, 4
        %v1573 = vsel %vm1448, %v1570, %v1572
        %v1574 = vrot.slane %v400, 4
        %v1575 = vrot.slane %v401, 4
        %v1576 = vsel %vm1448, %v1574, %v1575
        %v1577 = vrot.slane %v402, 4
        %v1578 = vsel %vm1448, %v1575, %v1577
        %v1579 = vrot.slane %v403, 4
        %v1580 = vrot.slane %v404, 4
        %v1581 = vsel %vm1448, %v1579, %v1580
        %v1582 = vrot.slane %v405, 4
        %v1583 = vsel %vm1448, %v1580, %v1582
        %v1584 = vrot.slane %v406, 4
        %v1585 = vrot.slane %v407, 4
        %v1586 = vsel %vm1448, %v1584, %v1585
        %v1587 = vrot.slane %v408, 4
        %v1588 = vsel %vm1448, %v1585, %v1587
        %v1589 = vrot.slane %v409, 4
        %v1590 = vrot.slane %v410, 4
        %v1591 = vsel %vm1448, %v1589, %v1590
        %v1592 = vrot.slane %v411, 4
        %v1593 = vsel %vm1448, %v1590, %v1592
        %v1594 = vrot.slane %v412, 4
        %v1595 = vrot.slane %v413, 4
        %v1596 = vsel %vm1448, %v1594, %v1595
        %v1597 = vrot.slane %v414, 4
        %v1598 = vsel %vm1448, %v1595, %v1597
        %v1599 = vrot.slane %v415, 4
        %v1600 = vrot.slane %v416, 4
        %v1601 = vsel %vm1448, %v1599, %v1600
        %v1602 = vrot.slane %v417, 4
        %v1603 = vsel %vm1448, %v1600, %v1602
        %v1604 = vrot.slane %v418, 4
        %v1605 = vrot.slane %v419, 4
        %v1606 = vsel %vm1448, %v1604, %v1605
        %v1607 = vrot.slane %v420, 4
        %v1608 = vsel %vm1448, %v1605, %v1607
        %1609 = vrot.lane.b32.xlu0 %v1451, 72
        %v1610 = vpop.permute.xlu0 %1609
        %1611 = vrot.lane.b32.xlu0 %v1453, 72
        %v1612 = vpop.permute.xlu0 %1611
        %1613 = vrot.lane.b32.xlu0 %v1456, 72
        %v1614 = vpop.permute.xlu0 %1613
        %1615 = vrot.lane.b32.xlu0 %v1458, 72
        %v1616 = vpop.permute.xlu0 %1615
        %1617 = vrot.lane.b32.xlu0 %v1461, 72
        %v1618 = vpop.permute.xlu0 %1617
        %1619 = vrot.lane.b32.xlu0 %v1463, 72
        %v1620 = vpop.permute.xlu0 %1619
        %1621 = vrot.lane.b32.xlu0 %v1466, 72
        %v1622 = vpop.permute.xlu0 %1621
        %1623 = vrot.lane.b32.xlu0 %v1468, 72
        %v1624 = vpop.permute.xlu0 %1623
        %1625 = vrot.lane.b32.xlu0 %v1471, 72
        %v1626 = vpop.permute.xlu0 %1625
        %1627 = vrot.lane.b32.xlu0 %v1473, 72
        %v1628 = vpop.permute.xlu0 %1627
        %1629 = vrot.lane.b32.xlu0 %v1476, 72
        %v1630 = vpop.permute.xlu0 %1629
        %1631 = vrot.lane.b32.xlu0 %v1478, 72
        %v1632 = vpop.permute.xlu0 %1631
        %1633 = vrot.lane.b32.xlu0 %v1481, 72
        %v1634 = vpop.permute.xlu0 %1633
        %1635 = vrot.lane.b32.xlu0 %v1483, 72
        %v1636 = vpop.permute.xlu0 %1635
        %1637 = vrot.lane.b32.xlu0 %v1486, 72
        %v1638 = vpop.permute.xlu0 %1637
        %1639 = vrot.lane.b32.xlu0 %v1488, 72
        %v1640 = vpop.permute.xlu0 %1639
        %1641 = vrot.lane.b32.xlu0 %v1491, 72
        %v1642 = vpop.permute.xlu0 %1641
        %1643 = vrot.lane.b32.xlu0 %v1493, 72
        %v1644 = vpop.permute.xlu0 %1643
        %1645 = vrot.lane.b32.xlu0 %v1496, 72
        %v1646 = vpop.permute.xlu0 %1645
        %1647 = vrot.lane.b32.xlu0 %v1498, 72
        %v1648 = vpop.permute.xlu0 %1647
        %1649 = vrot.lane.b32.xlu0 %v1501, 72
        %v1650 = vpop.permute.xlu0 %1649
        %1651 = vrot.lane.b32.xlu0 %v1503, 72
        %v1652 = vpop.permute.xlu0 %1651
        %1653 = vrot.lane.b32.xlu0 %v1506, 72
        %v1654 = vpop.permute.xlu0 %1653
        %1655 = vrot.lane.b32.xlu0 %v1508, 72
        %v1656 = vpop.permute.xlu0 %1655
        %1657 = vrot.lane.b32.xlu0 %v1511, 72
        %v1658 = vpop.permute.xlu0 %1657
        %1659 = vrot.lane.b32.xlu0 %v1513, 72
        %v1660 = vpop.permute.xlu0 %1659
        %1661 = vrot.lane.b32.xlu0 %v1516, 72
        %v1662 = vpop.permute.xlu0 %1661
        %1663 = vrot.lane.b32.xlu0 %v1518, 72
        %v1664 = vpop.permute.xlu0 %1663
        %1665 = vrot.lane.b32.xlu0 %v1521, 72
        %v1666 = vpop.permute.xlu0 %1665
        %1667 = vrot.lane.b32.xlu0 %v1523, 72
        %v1668 = vpop.permute.xlu0 %1667
        %1669 = vrot.lane.b32.xlu0 %v1526, 72
        %v1670 = vpop.permute.xlu0 %1669
        %1671 = vrot.lane.b32.xlu0 %v1528, 72
        %v1672 = vpop.permute.xlu0 %1671
        %1673 = vrot.lane.b32.xlu0 %v1531, 72
        %v1674 = vpop.permute.xlu0 %1673
        %1675 = vrot.lane.b32.xlu0 %v1533, 72
        %v1676 = vpop.permute.xlu0 %1675
        %1677 = vrot.lane.b32.xlu0 %v1536, 72
        %v1678 = vpop.permute.xlu0 %1677
        %1679 = vrot.lane.b32.xlu0 %v1538, 72
        %v1680 = vpop.permute.xlu0 %1679
        %1681 = vrot.lane.b32.xlu0 %v1541, 72
        %v1682 = vpop.permute.xlu0 %1681
        %1683 = vrot.lane.b32.xlu0 %v1543, 72
        %v1684 = vpop.permute.xlu0 %1683
        %1685 = vrot.lane.b32.xlu0 %v1546, 72
        %v1686 = vpop.permute.xlu0 %1685
        %1687 = vrot.lane.b32.xlu0 %v1548, 72
        %v1688 = vpop.permute.xlu0 %1687
        %1689 = vrot.lane.b32.xlu0 %v1551, 72
        %v1690 = vpop.permute.xlu0 %1689
        %1691 = vrot.lane.b32.xlu0 %v1553, 72
        %v1692 = vpop.permute.xlu0 %1691
        %1693 = vrot.lane.b32.xlu0 %v1556, 72
        %v1694 = vpop.permute.xlu0 %1693
        %1695 = vrot.lane.b32.xlu0 %v1558, 72
        %v1696 = vpop.permute.xlu0 %1695
        %1697 = vrot.lane.b32.xlu0 %v1561, 72
        %v1698 = vpop.permute.xlu0 %1697
        %1699 = vrot.lane.b32.xlu0 %v1563, 72
        %v1700 = vpop.permute.xlu0 %1699
        %1701 = vrot.lane.b32.xlu0 %v1566, 72
        %v1702 = vpop.permute.xlu0 %1701
        %1703 = vrot.lane.b32.xlu0 %v1568, 72
        %v1704 = vpop.permute.xlu0 %1703
        %1705 = vrot.lane.b32.xlu0 %v1571, 72
        %v1706 = vpop.permute.xlu0 %1705
        %1707 = vrot.lane.b32.xlu0 %v1573, 72
        %v1708 = vpop.permute.xlu0 %1707
        %1709 = vrot.lane.b32.xlu0 %v1576, 72
        %v1710 = vpop.permute.xlu0 %1709
        %1711 = vrot.lane.b32.xlu0 %v1578, 72
        %v1712 = vpop.permute.xlu0 %1711
        %1713 = vrot.lane.b32.xlu0 %v1581, 72
        %v1714 = vpop.permute.xlu0 %1713
        %1715 = vrot.lane.b32.xlu0 %v1583, 72
        %v1716 = vpop.permute.xlu0 %1715
        %1717 = vrot.lane.b32.xlu0 %v1586, 72
        %v1718 = vpop.permute.xlu0 %1717
        %1719 = vrot.lane.b32.xlu0 %v1588, 72
        %v1720 = vpop.permute.xlu0 %1719
        %1721 = vrot.lane.b32.xlu0 %v1591, 72
        %v1722 = vpop.permute.xlu0 %1721
        %1723 = vrot.lane.b32.xlu0 %v1593, 72
        %v1724 = vpop.permute.xlu0 %1723
        %1725 = vrot.lane.b32.xlu0 %v1596, 72
        %v1726 = vpop.permute.xlu0 %1725
        %1727 = vrot.lane.b32.xlu0 %v1598, 72
        %v1728 = vpop.permute.xlu0 %1727
        %1729 = vrot.lane.b32.xlu0 %v1601, 72
        %v1730 = vpop.permute.xlu0 %1729
        %1731 = vrot.lane.b32.xlu0 %v1603, 72
        %v1732 = vpop.permute.xlu0 %1731
        %1733 = vrot.lane.b32.xlu0 %v1606, 72
        %v1734 = vpop.permute.xlu0 %1733
        %1735 = vrot.lane.b32.xlu0 %v1608, 72
        %v1736 = vpop.permute.xlu0 %1735
        %vm1801 = vcmask 408576
        %v1802 = vsel %vm1801, %v325, %v583
        %v1803 = vsel %vm1801, %v326, %v585
        %v1804 = vsel %vm1801, %v328, %v587
        %v1805 = vsel %vm1801, %v329, %v589
        %v1806 = vsel %vm1801, %v331, %v591
        %v1807 = vsel %vm1801, %v332, %v593
        %v1808 = vsel %vm1801, %v334, %v595
        %v1809 = vsel %vm1801, %v335, %v597
        %v1810 = vsel %vm1801, %v337, %v599
        %v1811 = vsel %vm1801, %v338, %v601
        %v1812 = vsel %vm1801, %v340, %v603
        %v1813 = vsel %vm1801, %v341, %v605
        %v1814 = vsel %vm1801, %v343, %v607
        %v1815 = vsel %vm1801, %v344, %v609
        %v1816 = vsel %vm1801, %v346, %v611
        %v1817 = vsel %vm1801, %v347, %v613
        %v1818 = vsel %vm1801, %v349, %v615
        %v1819 = vsel %vm1801, %v350, %v617
        %v1820 = vsel %vm1801, %v352, %v619
        %v1821 = vsel %vm1801, %v353, %v621
        %v1822 = vsel %vm1801, %v355, %v623
        %v1823 = vsel %vm1801, %v356, %v625
        %v1824 = vsel %vm1801, %v358, %v627
        %v1825 = vsel %vm1801, %v359, %v629
        %v1826 = vsel %vm1801, %v361, %v631
        %v1827 = vsel %vm1801, %v362, %v633
        %v1828 = vsel %vm1801, %v364, %v635
        %v1829 = vsel %vm1801, %v365, %v637
        %v1830 = vsel %vm1801, %v367, %v639
        %v1831 = vsel %vm1801, %v368, %v641
        %v1832 = vsel %vm1801, %v370, %v643
        %v1833 = vsel %vm1801, %v371, %v645
        %v1834 = vsel %vm1801, %v373, %v647
        %v1835 = vsel %vm1801, %v374, %v649
        %v1836 = vsel %vm1801, %v376, %v651
        %v1837 = vsel %vm1801, %v377, %v653
        %v1838 = vsel %vm1801, %v379, %v655
        %v1839 = vsel %vm1801, %v380, %v657
        %v1840 = vsel %vm1801, %v382, %v659
        %v1841 = vsel %vm1801, %v383, %v661
        %v1842 = vsel %vm1801, %v385, %v663
        %v1843 = vsel %vm1801, %v386, %v665
        %v1844 = vsel %vm1801, %v388, %v667
        %v1845 = vsel %vm1801, %v389, %v669
        %v1846 = vsel %vm1801, %v391, %v671
        %v1847 = vsel %vm1801, %v392, %v673
        %v1848 = vsel %vm1801, %v394, %v675
        %v1849 = vsel %vm1801, %v395, %v677
        %v1850 = vsel %vm1801, %v397, %v679
        %v1851 = vsel %vm1801, %v398, %v681
        %v1852 = vsel %vm1801, %v400, %v683
        %v1853 = vsel %vm1801, %v401, %v685
        %v1854 = vsel %vm1801, %v403, %v687
        %v1855 = vsel %vm1801, %v404, %v689
        %v1856 = vsel %vm1801, %v406, %v691
        %v1857 = vsel %vm1801, %v407, %v693
        %v1858 = vsel %vm1801, %v409, %v695
        %v1859 = vsel %vm1801, %v410, %v697
        %v1860 = vsel %vm1801, %v412, %v699
        %v1861 = vsel %vm1801, %v413, %v701
        %v1862 = vsel %vm1801, %v415, %v703
        %v1863 = vsel %vm1801, %v416, %v705
        %v1864 = vsel %vm1801, %v418, %v707
        %v1865 = vsel %vm1801, %v419, %v709
        %vm1866 = vcmask 818176
        %v1867 = vsel %vm1866, %v1802, %v872
        %v1868 = vsel %vm1866, %v1803, %v874
        %v1869 = vsel %vm1866, %v1804, %v876
        %v1870 = vsel %vm1866, %v1805, %v878
        %v1871 = vsel %vm1866, %v1806, %v880
        %v1872 = vsel %vm1866, %v1807, %v882
        %v1873 = vsel %vm1866, %v1808, %v884
        %v1874 = vsel %vm1866, %v1809, %v886
        %v1875 = vsel %vm1866, %v1810, %v888
        %v1876 = vsel %vm1866, %v1811, %v890
        %v1877 = vsel %vm1866, %v1812, %v892
        %v1878 = vsel %vm1866, %v1813, %v894
        %v1879 = vsel %vm1866, %v1814, %v896
        %v1880 = vsel %vm1866, %v1815, %v898
        %v1881 = vsel %vm1866, %v1816, %v900
        %v1882 = vsel %vm1866, %v1817, %v902
        %v1883 = vsel %vm1866, %v1818, %v904
        %v1884 = vsel %vm1866, %v1819, %v906
        %v1885 = vsel %vm1866, %v1820, %v908
        %v1886 = vsel %vm1866, %v1821, %v910
        %v1887 = vsel %vm1866, %v1822, %v912
        %v1888 = vsel %vm1866, %v1823, %v914
        %v1889 = vsel %vm1866, %v1824, %v916
        %v1890 = vsel %vm1866, %v1825, %v918
        %v1891 = vsel %vm1866, %v1826, %v920
        %v1892 = vsel %vm1866, %v1827, %v922
        %v1893 = vsel %vm1866, %v1828, %v924
        %v1894 = vsel %vm1866, %v1829, %v926
        %v1895 = vsel %vm1866, %v1830, %v928
        %v1896 = vsel %vm1866, %v1831, %v930
        %v1897 = vsel %vm1866, %v1832, %v932
        %v1898 = vsel %vm1866, %v1833, %v934
        %v1899 = vsel %vm1866, %v1834, %v936
        %v1900 = vsel %vm1866, %v1835, %v938
        %v1901 = vsel %vm1866, %v1836, %v940
        %v1902 = vsel %vm1866, %v1837, %v942
        %v1903 = vsel %vm1866, %v1838, %v944
        %v1904 = vsel %vm1866, %v1839, %v946
        %v1905 = vsel %vm1866, %v1840, %v948
        %v1906 = vsel %vm1866, %v1841, %v950
        %v1907 = vsel %vm1866, %v1842, %v952
        %v1908 = vsel %vm1866, %v1843, %v954
        %v1909 = vsel %vm1866, %v1844, %v956
        %v1910 = vsel %vm1866, %v1845, %v958
        %v1911 = vsel %vm1866, %v1846, %v960
        %v1912 = vsel %vm1866, %v1847, %v962
        %v1913 = vsel %vm1866, %v1848, %v964
        %v1914 = vsel %vm1866, %v1849, %v966
        %v1915 = vsel %vm1866, %v1850, %v968
        %v1916 = vsel %vm1866, %v1851, %v970
        %v1917 = vsel %vm1866, %v1852, %v972
        %v1918 = vsel %vm1866, %v1853, %v974
        %v1919 = vsel %vm1866, %v1854, %v976
        %v1920 = vsel %vm1866, %v1855, %v978
        %v1921 = vsel %vm1866, %v1856, %v980
        %v1922 = vsel %vm1866, %v1857, %v982
        %v1923 = vsel %vm1866, %v1858, %v984
        %v1924 = vsel %vm1866, %v1859, %v986
        %v1925 = vsel %vm1866, %v1860, %v988
        %v1926 = vsel %vm1866, %v1861, %v990
        %v1927 = vsel %vm1866, %v1862, %v992
        %v1928 = vsel %vm1866, %v1863, %v994
        %v1929 = vsel %vm1866, %v1864, %v996
        %v1930 = vsel %vm1866, %v1865, %v998
        %vm1931 = vcmask 179200
        %v1932 = vsel %vm1931, %v872, %v1257
        %v1933 = vsel %vm1931, %v874, %v1259
        %v1934 = vsel %vm1931, %v876, %v1261
        %v1935 = vsel %vm1931, %v878, %v1263
        %v1936 = vsel %vm1931, %v880, %v1265
        %v1937 = vsel %vm1931, %v882, %v1267
        %v1938 = vsel %vm1931, %v884, %v1269
        %v1939 = vsel %vm1931, %v886, %v1271
        %v1940 = vsel %vm1931, %v888, %v1273
        %v1941 = vsel %vm1931, %v890, %v1275
        %v1942 = vsel %vm1931, %v892, %v1277
        %v1943 = vsel %vm1931, %v894, %v1279
        %v1944 = vsel %vm1931, %v896, %v1281
        %v1945 = vsel %vm1931, %v898, %v1283
        %v1946 = vsel %vm1931, %v900, %v1285
        %v1947 = vsel %vm1931, %v902, %v1287
        %v1948 = vsel %vm1931, %v904, %v1289
        %v1949 = vsel %vm1931, %v906, %v1291
        %v1950 = vsel %vm1931, %v908, %v1293
        %v1951 = vsel %vm1931, %v910, %v1295
        %v1952 = vsel %vm1931, %v912, %v1297
        %v1953 = vsel %vm1931, %v914, %v1299
        %v1954 = vsel %vm1931, %v916, %v1301
        %v1955 = vsel %vm1931, %v918, %v1303
        %v1956 = vsel %vm1931, %v920, %v1305
        %v1957 = vsel %vm1931, %v922, %v1307
        %v1958 = vsel %vm1931, %v924, %v1309
        %v1959 = vsel %vm1931, %v926, %v1311
        %v1960 = vsel %vm1931, %v928, %v1313
        %v1961 = vsel %vm1931, %v930, %v1315
        %v1962 = vsel %vm1931, %v932, %v1317
        %v1963 = vsel %vm1931, %v934, %v1319
        %v1964 = vsel %vm1931, %v936, %v1321
        %v1965 = vsel %vm1931, %v938, %v1323
        %v1966 = vsel %vm1931, %v940, %v1325
        %v1967 = vsel %vm1931, %v942, %v1327
        %v1968 = vsel %vm1931, %v944, %v1329
        %v1969 = vsel %vm1931, %v946, %v1331
        %v1970 = vsel %vm1931, %v948, %v1333
        %v1971 = vsel %vm1931, %v950, %v1335
        %v1972 = vsel %vm1931, %v952, %v1337
        %v1973 = vsel %vm1931, %v954, %v1339
        %v1974 = vsel %vm1931, %v956, %v1341
        %v1975 = vsel %vm1931, %v958, %v1343
        %v1976 = vsel %vm1931, %v960, %v1345
        %v1977 = vsel %vm1931, %v962, %v1347
        %v1978 = vsel %vm1931, %v964, %v1349
        %v1979 = vsel %vm1931, %v966, %v1351
        %v1980 = vsel %vm1931, %v968, %v1353
        %v1981 = vsel %vm1931, %v970, %v1355
        %v1982 = vsel %vm1931, %v972, %v1357
        %v1983 = vsel %vm1931, %v974, %v1359
        %v1984 = vsel %vm1931, %v976, %v1361
        %v1985 = vsel %vm1931, %v978, %v1363
        %v1986 = vsel %vm1931, %v980, %v1365
        %v1987 = vsel %vm1931, %v982, %v1367
        %v1988 = vsel %vm1931, %v984, %v1369
        %v1989 = vsel %vm1931, %v986, %v1371
        %v1990 = vsel %vm1931, %v988, %v1373
        %v1991 = vsel %vm1931, %v990, %v1375
        %v1992 = vsel %vm1931, %v992, %v1377
        %v1993 = vsel %vm1931, %v994, %v1379
        %v1994 = vsel %vm1931, %v996, %v1381
        %v1995 = vsel %vm1931, %v998, %v1383
        %vm1996 = vcmask 588800
        %v1997 = vsel %vm1996, %v1932, %v1610
        %v1998 = vsel %vm1996, %v1933, %v1612
        %v1999 = vsel %vm1996, %v1934, %v1614
        %v2000 = vsel %vm1996, %v1935, %v1616
        %v2001 = vsel %vm1996, %v1936, %v1618
        %v2002 = vsel %vm1996, %v1937, %v1620
        %v2003 = vsel %vm1996, %v1938, %v1622
        %v2004 = vsel %vm1996, %v1939, %v1624
        %v2005 = vsel %vm1996, %v1940, %v1626
        %v2006 = vsel %vm1996, %v1941, %v1628
        %v2007 = vsel %vm1996, %v1942, %v1630
        %v2008 = vsel %vm1996, %v1943, %v1632
        %v2009 = vsel %vm1996, %v1944, %v1634
        %v2010 = vsel %vm1996, %v1945, %v1636
        %v2011 = vsel %vm1996, %v1946, %v1638
        %v2012 = vsel %vm1996, %v1947, %v1640
        %v2013 = vsel %vm1996, %v1948, %v1642
        %v2014 = vsel %vm1996, %v1949, %v1644
        %v2015 = vsel %vm1996, %v1950, %v1646
        %v2016 = vsel %vm1996, %v1951, %v1648
        %v2017 = vsel %vm1996, %v1952, %v1650
        %v2018 = vsel %vm1996, %v1953, %v1652
        %v2019 = vsel %vm1996, %v1954, %v1654
        %v2020 = vsel %vm1996, %v1955, %v1656
        %v2021 = vsel %vm1996, %v1956, %v1658
        %v2022 = vsel %vm1996, %v1957, %v1660
        %v2023 = vsel %vm1996, %v1958, %v1662
        %v2024 = vsel %vm1996, %v1959, %v1664
        %v2025 = vsel %vm1996, %v1960, %v1666
        %v2026 = vsel %vm1996, %v1961, %v1668
        %v2027 = vsel %vm1996, %v1962, %v1670
        %v2028 = vsel %vm1996, %v1963, %v1672
        %v2029 = vsel %vm1996, %v1964, %v1674
        %v2030 = vsel %vm1996, %v1965, %v1676
        %v2031 = vsel %vm1996, %v1966, %v1678
        %v2032 = vsel %vm1996, %v1967, %v1680
        %v2033 = vsel %vm1996, %v1968, %v1682
        %v2034 = vsel %vm1996, %v1969, %v1684
        %v2035 = vsel %vm1996, %v1970, %v1686
        %v2036 = vsel %vm1996, %v1971, %v1688
        %v2037 = vsel %vm1996, %v1972, %v1690
        %v2038 = vsel %vm1996, %v1973, %v1692
        %v2039 = vsel %vm1996, %v1974, %v1694
        %v2040 = vsel %vm1996, %v1975, %v1696
        %v2041 = vsel %vm1996, %v1976, %v1698
        %v2042 = vsel %vm1996, %v1977, %v1700
        %v2043 = vsel %vm1996, %v1978, %v1702
        %v2044 = vsel %vm1996, %v1979, %v1704
        %v2045 = vsel %vm1996, %v1980, %v1706
        %v2046 = vsel %vm1996, %v1981, %v1708
        %v2047 = vsel %vm1996, %v1982, %v1710
        %v2048 = vsel %vm1996, %v1983, %v1712
        %v2049 = vsel %vm1996, %v1984, %v1714
        %v2050 = vsel %vm1996, %v1985, %v1716
        %v2051 = vsel %vm1996, %v1986, %v1718
        %v2052 = vsel %vm1996, %v1987, %v1720
        %v2053 = vsel %vm1996, %v1988, %v1722
        %v2054 = vsel %vm1996, %v1989, %v1724
        %v2055 = vsel %vm1996, %v1990, %v1726
        %v2056 = vsel %vm1996, %v1991, %v1728
        %v2057 = vsel %vm1996, %v1992, %v1730
        %v2058 = vsel %vm1996, %v1993, %v1732
        %v2059 = vsel %vm1996, %v1994, %v1734
        %v2060 = vsel %vm1996, %v1995, %v1736
        %v2061 = vld [vmem:[%s1] sm:$0xff]
        %v2062 = vld [vmem:[%s1 + $0x8] sm:$0xff]
        %v2063 = vld [vmem:[%s1 + $0x10] sm:$0xff]
        %v2064 = vld [vmem:[%s1 + $0x18] sm:$0xff]
        %v2065 = vld [vmem:[%s1 + $0x20] sm:$0xff]
        %v2066 = vld [vmem:[%s1 + $0x28] sm:$0xff]
        %v2067 = vld [vmem:[%s1 + $0x30] sm:$0xff]
        %v2068 = vld [vmem:[%s1 + $0x38] sm:$0xff]
        %v2069 = vld [vmem:[%s1 + $0x40] sm:$0xff]
        %v2070 = vld [vmem:[%s1 + $0x48] sm:$0xff]
        %v2071 = vld [vmem:[%s1 + $0x50] sm:$0xff]
        %v2072 = vld [vmem:[%s1 + $0x58] sm:$0xff]
        %v2073 = vld [vmem:[%s1 + $0x60] sm:$0xff]
        %v2074 = vld [vmem:[%s1 + $0x68] sm:$0xff]
        %v2075 = vld [vmem:[%s1 + $0x70] sm:$0xff]
        %v2076 = vld [vmem:[%s1 + $0x78] sm:$0xff]
        %v2077 = vld [vmem:[%s1 + $0x80] sm:$0xff]
        %v2078 = vld [vmem:[%s1 + $0x88] sm:$0xff]
        %v2079 = vld [vmem:[%s1 + $0x90] sm:$0xff]
        %v2080 = vld [vmem:[%s1 + $0x98] sm:$0xff]
        %v2081 = vld [vmem:[%s1 + $0xa0] sm:$0xff]
        %v2082 = vld [vmem:[%s1 + $0xa8] sm:$0xff]
        %v2083 = vld [vmem:[%s1 + $0xb0] sm:$0xff]
        %v2084 = vld [vmem:[%s1 + $0xb8] sm:$0xff]
        %v2085 = vld [vmem:[%s1 + $0xc0] sm:$0xff]
        %v2086 = vld [vmem:[%s1 + $0xc8] sm:$0xff]
        %v2087 = vld [vmem:[%s1 + $0xd0] sm:$0xff]
        %v2088 = vld [vmem:[%s1 + $0xd8] sm:$0xff]
        %v2089 = vld [vmem:[%s1 + $0xe0] sm:$0xff]
        %v2090 = vld [vmem:[%s1 + $0xe8] sm:$0xff]
        %v2091 = vld [vmem:[%s1 + $0xf0] sm:$0xff]
        %v2092 = vld [vmem:[%s1 + $0xf8] sm:$0x3]
        %v2093 = vld [vmem:[%s2] sm:$0x1]
        %v2095 = vlaneseq
        %v2096 = vshrl.u32 %v2095, 7
        %v2097 = vsub.s32 0, %v2096
        %v2098 = vrot.slane %v2093, %v2097
        %v2227 = vcombine.low %v1867, %v1997
        %v2228 = vcombine.high %v1867, %v1997
        %v2230 = vunpack.c.l.s4 1983009808
        %v2231 = vunpack.c.0.s8 %v2230
        %v2232 = vlaneseq
        %v2233 = vshrl.u32 %v2232, 7
        %v2234 = vsub.s32 %v2231, %v2233
        %v2235 = vrot.slane %v2227, %v2234
        %v2237 = vunpack.c.l.s4 1983009808
        %v2238 = vunpack.c.0.s8 %v2237
        %v2239 = vlaneseq
        %v2240 = vshrl.u32 %v2239, 7
        %v2241 = vsub.s32 %v2238, %v2240
        %v2242 = vrot.slane %v2228, %v2241
        %v2243 = vcombine.high %v2235, %v2235
        %v2244 = vcombine.high %v2242, %v2242
        %v2245 = vcombine.low %v1868, %v1998
        %v2246 = vcombine.high %v1868, %v1998
        %v2248 = vunpack.c.l.s4 1983009808
        %v2249 = vunpack.c.0.s8 %v2248
        %v2250 = vlaneseq
        %v2251 = vshrl.u32 %v2250, 7
        %v2252 = vsub.s32 %v2249, %v2251
        %v2253 = vrot.slane %v2245, %v2252
        %v2255 = vunpack.c.l.s4 1983009808
        %v2256 = vunpack.c.0.s8 %v2255
        %v2257 = vlaneseq
        %v2258 = vshrl.u32 %v2257, 7
        %v2259 = vsub.s32 %v2256, %v2258
        %v2260 = vrot.slane %v2246, %v2259
        %v2261 = vcombine.high %v2253, %v2253
        %v2262 = vcombine.low %v1869, %v1999
        %v2263 = vcombine.high %v1869, %v1999
        %v2265 = vunpack.c.l.s4 1983009808
        %v2266 = vunpack.c.0.s8 %v2265
        %v2267 = vlaneseq
        %v2268 = vshrl.u32 %v2267, 7
        %v2269 = vsub.s32 %v2266, %v2268
        %v2270 = vrot.slane %v2262, %v2269
        %v2272 = vunpack.c.l.s4 1983009808
        %v2273 = vunpack.c.0.s8 %v2272
        %v2274 = vlaneseq
        %v2275 = vshrl.u32 %v2274, 7
        %v2276 = vsub.s32 %v2273, %v2275
        %v2277 = vrot.slane %v2263, %v2276
        %v2278 = vcombine.high %v2270, %v2270
        %v2279 = vcombine.high %v2277, %v2277
        %v2280 = vcombine.low %v1870, %v2000
        %v2281 = vcombine.high %v1870, %v2000
        %v2283 = vunpack.c.l.s4 1983009808
        %v2284 = vunpack.c.0.s8 %v2283
        %v2285 = vlaneseq
        %v2286 = vshrl.u32 %v2285, 7
        %v2287 = vsub.s32 %v2284, %v2286
        %v2288 = vrot.slane %v2280, %v2287
        %v2290 = vunpack.c.l.s4 1983009808
        %v2291 = vunpack.c.0.s8 %v2290
        %v2292 = vlaneseq
        %v2293 = vshrl.u32 %v2292, 7
        %v2294 = vsub.s32 %v2291, %v2293
        %v2295 = vrot.slane %v2281, %v2294
        %v2296 = vcombine.high %v2288, %v2288
        %v2297 = vcombine.low %v1871, %v2001
        %v2298 = vcombine.high %v1871, %v2001
        %v2300 = vunpack.c.l.s4 1983009808
        %v2301 = vunpack.c.0.s8 %v2300
        %v2302 = vlaneseq
        %v2303 = vshrl.u32 %v2302, 7
        %v2304 = vsub.s32 %v2301, %v2303
        %v2305 = vrot.slane %v2297, %v2304
        %v2307 = vunpack.c.l.s4 1983009808
        %v2308 = vunpack.c.0.s8 %v2307
        %v2309 = vlaneseq
        %v2310 = vshrl.u32 %v2309, 7
        %v2311 = vsub.s32 %v2308, %v2310
        %v2312 = vrot.slane %v2298, %v2311
        %v2313 = vcombine.high %v2305, %v2305
        %v2314 = vcombine.high %v2312, %v2312
        %v2315 = vcombine.low %v1872, %v2002
        %v2316 = vcombine.high %v1872, %v2002
        %v2318 = vunpack.c.l.s4 1983009808
        %v2319 = vunpack.c.0.s8 %v2318
        %v2320 = vlaneseq
        %v2321 = vshrl.u32 %v2320, 7
        %v2322 = vsub.s32 %v2319, %v2321
        %v2323 = vrot.slane %v2315, %v2322
        %v2325 = vunpack.c.l.s4 1983009808
        %v2326 = vunpack.c.0.s8 %v2325
        %v2327 = vlaneseq
        %v2328 = vshrl.u32 %v2327, 7
        %v2329 = vsub.s32 %v2326, %v2328
        %v2330 = vrot.slane %v2316, %v2329
        %v2331 = vcombine.high %v2323, %v2323
        %v2332 = vcombine.low %v1873, %v2003
        %v2333 = vcombine.high %v1873, %v2003
        %v2335 = vunpack.c.l.s4 1983009808
        %v2336 = vunpack.c.0.s8 %v2335
        %v2337 = vlaneseq
        %v2338 = vshrl.u32 %v2337, 7
        %v2339 = vsub.s32 %v2336, %v2338
        %v2340 = vrot.slane %v2332, %v2339
        %v2342 = vunpack.c.l.s4 1983009808
        %v2343 = vunpack.c.0.s8 %v2342
        %v2344 = vlaneseq
        %v2345 = vshrl.u32 %v2344, 7
        %v2346 = vsub.s32 %v2343, %v2345
        %v2347 = vrot.slane %v2333, %v2346
        %v2348 = vcombine.high %v2340, %v2340
        %v2349 = vcombine.high %v2347, %v2347
        %v2350 = vcombine.low %v1874, %v2004
        %v2351 = vcombine.high %v1874, %v2004
        %v2353 = vunpack.c.l.s4 1983009808
        %v2354 = vunpack.c.0.s8 %v2353
        %v2355 = vlaneseq
        %v2356 = vshrl.u32 %v2355, 7
        %v2357 = vsub.s32 %v2354, %v2356
        %v2358 = vrot.slane %v2350, %v2357
        %v2360 = vunpack.c.l.s4 1983009808
        %v2361 = vunpack.c.0.s8 %v2360
        %v2362 = vlaneseq
        %v2363 = vshrl.u32 %v2362, 7
        %v2364 = vsub.s32 %v2361, %v2363
        %v2365 = vrot.slane %v2351, %v2364
        %v2366 = vcombine.high %v2358, %v2358
        %v2367 = vcombine.low %v1875, %v2005
        %v2368 = vcombine.high %v1875, %v2005
        %v2370 = vunpack.c.l.s4 1983009808
        %v2371 = vunpack.c.0.s8 %v2370
        %v2372 = vlaneseq
        %v2373 = vshrl.u32 %v2372, 7
        %v2374 = vsub.s32 %v2371, %v2373
        %v2375 = vrot.slane %v2367, %v2374
        %v2377 = vunpack.c.l.s4 1983009808
        %v2378 = vunpack.c.0.s8 %v2377
        %v2379 = vlaneseq
        %v2380 = vshrl.u32 %v2379, 7
        %v2381 = vsub.s32 %v2378, %v2380
        %v2382 = vrot.slane %v2368, %v2381
        %v2383 = vcombine.high %v2375, %v2375
        %v2384 = vcombine.high %v2382, %v2382
        %v2385 = vcombine.low %v1876, %v2006
        %v2386 = vcombine.high %v1876, %v2006
        %v2388 = vunpack.c.l.s4 1983009808
        %v2389 = vunpack.c.0.s8 %v2388
        %v2390 = vlaneseq
        %v2391 = vshrl.u32 %v2390, 7
        %v2392 = vsub.s32 %v2389, %v2391
        %v2393 = vrot.slane %v2385, %v2392
        %v2395 = vunpack.c.l.s4 1983009808
        %v2396 = vunpack.c.0.s8 %v2395
        %v2397 = vlaneseq
        %v2398 = vshrl.u32 %v2397, 7
        %v2399 = vsub.s32 %v2396, %v2398
        %v2400 = vrot.slane %v2386, %v2399
        %v2401 = vcombine.high %v2393, %v2393
        %v2402 = vcombine.low %v1877, %v2007
        %v2403 = vcombine.high %v1877, %v2007
        %v2405 = vunpack.c.l.s4 1983009808
        %v2406 = vunpack.c.0.s8 %v2405
        %v2407 = vlaneseq
        %v2408 = vshrl.u32 %v2407, 7
        %v2409 = vsub.s32 %v2406, %v2408
        %v2410 = vrot.slane %v2402, %v2409
        %v2412 = vunpack.c.l.s4 1983009808
        %v2413 = vunpack.c.0.s8 %v2412
        %v2414 = vlaneseq
        %v2415 = vshrl.u32 %v2414, 7
        %v2416 = vsub.s32 %v2413, %v2415
        %v2417 = vrot.slane %v2403, %v2416
        %v2418 = vcombine.high %v2410, %v2410
        %v2419 = vcombine.high %v2417, %v2417
        %v2420 = vcombine.low %v1878, %v2008
        %v2421 = vcombine.high %v1878, %v2008
        %v2423 = vunpack.c.l.s4 1983009808
        %v2424 = vunpack.c.0.s8 %v2423
        %v2425 = vlaneseq
        %v2426 = vshrl.u32 %v2425, 7
        %v2427 = vsub.s32 %v2424, %v2426
        %v2428 = vrot.slane %v2420, %v2427
        %v2430 = vunpack.c.l.s4 1983009808
        %v2431 = vunpack.c.0.s8 %v2430
        %v2432 = vlaneseq
        %v2433 = vshrl.u32 %v2432, 7
        %v2434 = vsub.s32 %v2431, %v2433
        %v2435 = vrot.slane %v2421, %v2434
        %v2436 = vcombine.high %v2428, %v2428
        %v2437 = vcombine.low %v1879, %v2009
        %v2438 = vcombine.high %v1879, %v2009
        %v2440 = vunpack.c.l.s4 1983009808
        %v2441 = vunpack.c.0.s8 %v2440
        %v2442 = vlaneseq
        %v2443 = vshrl.u32 %v2442, 7
        %v2444 = vsub.s32 %v2441, %v2443
        %v2445 = vrot.slane %v2437, %v2444
        %v2447 = vunpack.c.l.s4 1983009808
        %v2448 = vunpack.c.0.s8 %v2447
        %v2449 = vlaneseq
        %v2450 = vshrl.u32 %v2449, 7
        %v2451 = vsub.s32 %v2448, %v2450
        %v2452 = vrot.slane %v2438, %v2451
        %v2453 = vcombine.high %v2445, %v2445
        %v2454 = vcombine.high %v2452, %v2452
        %v2455 = vcombine.low %v1880, %v2010
        %v2456 = vcombine.high %v1880, %v2010
        %v2458 = vunpack.c.l.s4 1983009808
        %v2459 = vunpack.c.0.s8 %v2458
        %v2460 = vlaneseq
        %v2461 = vshrl.u32 %v2460, 7
        %v2462 = vsub.s32 %v2459, %v2461
        %v2463 = vrot.slane %v2455, %v2462
        %v2465 = vunpack.c.l.s4 1983009808
        %v2466 = vunpack.c.0.s8 %v2465
        %v2467 = vlaneseq
        %v2468 = vshrl.u32 %v2467, 7
        %v2469 = vsub.s32 %v2466, %v2468
        %v2470 = vrot.slane %v2456, %v2469
        %v2471 = vcombine.high %v2463, %v2463
        %v2472 = vcombine.low %v1881, %v2011
        %v2473 = vcombine.high %v1881, %v2011
        %v2475 = vunpack.c.l.s4 1983009808
        %v2476 = vunpack.c.0.s8 %v2475
        %v2477 = vlaneseq
        %v2478 = vshrl.u32 %v2477, 7
        %v2479 = vsub.s32 %v2476, %v2478
        %v2480 = vrot.slane %v2472, %v2479
        %v2482 = vunpack.c.l.s4 1983009808
        %v2483 = vunpack.c.0.s8 %v2482
        %v2484 = vlaneseq
        %v2485 = vshrl.u32 %v2484, 7
        %v2486 = vsub.s32 %v2483, %v2485
        %v2487 = vrot.slane %v2473, %v2486
        %v2488 = vcombine.high %v2480, %v2480
        %v2489 = vcombine.high %v2487, %v2487
        %v2490 = vcombine.low %v1882, %v2012
        %v2491 = vcombine.high %v1882, %v2012
        %v2493 = vunpack.c.l.s4 1983009808
        %v2494 = vunpack.c.0.s8 %v2493
        %v2495 = vlaneseq
        %v2496 = vshrl.u32 %v2495, 7
        %v2497 = vsub.s32 %v2494, %v2496
        %v2498 = vrot.slane %v2490, %v2497
        %v2500 = vunpack.c.l.s4 1983009808
        %v2501 = vunpack.c.0.s8 %v2500
        %v2502 = vlaneseq
        %v2503 = vshrl.u32 %v2502, 7
        %v2504 = vsub.s32 %v2501, %v2503
        %v2505 = vrot.slane %v2491, %v2504
        %v2506 = vcombine.high %v2498, %v2498
        %v2507 = vcombine.low %v1883, %v2013
        %v2508 = vcombine.high %v1883, %v2013
        %v2510 = vunpack.c.l.s4 1983009808
        %v2511 = vunpack.c.0.s8 %v2510
        %v2512 = vlaneseq
        %v2513 = vshrl.u32 %v2512, 7
        %v2514 = vsub.s32 %v2511, %v2513
        %v2515 = vrot.slane %v2507, %v2514
        %v2517 = vunpack.c.l.s4 1983009808
        %v2518 = vunpack.c.0.s8 %v2517
        %v2519 = vlaneseq
        %v2520 = vshrl.u32 %v2519, 7
        %v2521 = vsub.s32 %v2518, %v2520
        %v2522 = vrot.slane %v2508, %v2521
        %v2523 = vcombine.high %v2515, %v2515
        %v2524 = vcombine.high %v2522, %v2522
        %v2525 = vcombine.low %v1884, %v2014
        %v2526 = vcombine.high %v1884, %v2014
        %v2528 = vunpack.c.l.s4 1983009808
        %v2529 = vunpack.c.0.s8 %v2528
        %v2530 = vlaneseq
        %v2531 = vshrl.u32 %v2530, 7
        %v2532 = vsub.s32 %v2529, %v2531
        %v2533 = vrot.slane %v2525, %v2532
        %v2535 = vunpack.c.l.s4 1983009808
        %v2536 = vunpack.c.0.s8 %v2535
        %v2537 = vlaneseq
        %v2538 = vshrl.u32 %v2537, 7
        %v2539 = vsub.s32 %v2536, %v2538
        %v2540 = vrot.slane %v2526, %v2539
        %v2541 = vcombine.high %v2533, %v2533
        %v2542 = vcombine.low %v1885, %v2015
        %v2543 = vcombine.high %v1885, %v2015
        %v2545 = vunpack.c.l.s4 1983009808
        %v2546 = vunpack.c.0.s8 %v2545
        %v2547 = vlaneseq
        %v2548 = vshrl.u32 %v2547, 7
        %v2549 = vsub.s32 %v2546, %v2548
        %v2550 = vrot.slane %v2542, %v2549
        %v2552 = vunpack.c.l.s4 1983009808
        %v2553 = vunpack.c.0.s8 %v2552
        %v2554 = vlaneseq
        %v2555 = vshrl.u32 %v2554, 7
        %v2556 = vsub.s32 %v2553, %v2555
        %v2557 = vrot.slane %v2543, %v2556
        %v2558 = vcombine.high %v2550, %v2550
        %v2559 = vcombine.high %v2557, %v2557
        %v2560 = vcombine.low %v1886, %v2016
        %v2561 = vcombine.high %v1886, %v2016
        %v2563 = vunpack.c.l.s4 1983009808
        %v2564 = vunpack.c.0.s8 %v2563
        %v2565 = vlaneseq
        %v2566 = vshrl.u32 %v2565, 7
        %v2567 = vsub.s32 %v2564, %v2566
        %v2568 = vrot.slane %v2560, %v2567
        %v2570 = vunpack.c.l.s4 1983009808
        %v2571 = vunpack.c.0.s8 %v2570
        %v2572 = vlaneseq
        %v2573 = vshrl.u32 %v2572, 7
        %v2574 = vsub.s32 %v2571, %v2573
        %v2575 = vrot.slane %v2561, %v2574
        %v2576 = vcombine.high %v2568, %v2568
        %v2577 = vcombine.low %v1887, %v2017
        %v2578 = vcombine.high %v1887, %v2017
        %v2580 = vunpack.c.l.s4 1983009808
        %v2581 = vunpack.c.0.s8 %v2580
        %v2582 = vlaneseq
        %v2583 = vshrl.u32 %v2582, 7
        %v2584 = vsub.s32 %v2581, %v2583
        %v2585 = vrot.slane %v2577, %v2584
        %v2587 = vunpack.c.l.s4 1983009808
        %v2588 = vunpack.c.0.s8 %v2587
        %v2589 = vlaneseq
        %v2590 = vshrl.u32 %v2589, 7
        %v2591 = vsub.s32 %v2588, %v2590
        %v2592 = vrot.slane %v2578, %v2591
        %v2593 = vcombine.high %v2585, %v2585
        %v2594 = vcombine.high %v2592, %v2592
        %v2595 = vcombine.low %v1888, %v2018
        %v2596 = vcombine.high %v1888, %v2018
        %v2598 = vunpack.c.l.s4 1983009808
        %v2599 = vunpack.c.0.s8 %v2598
        %v2600 = vlaneseq
        %v2601 = vshrl.u32 %v2600, 7
        %v2602 = vsub.s32 %v2599, %v2601
        %v2603 = vrot.slane %v2595, %v2602
        %v2605 = vunpack.c.l.s4 1983009808
        %v2606 = vunpack.c.0.s8 %v2605
        %v2607 = vlaneseq
        %v2608 = vshrl.u32 %v2607, 7
        %v2609 = vsub.s32 %v2606, %v2608
        %v2610 = vrot.slane %v2596, %v2609
        %v2611 = vcombine.high %v2603, %v2603
        %v2612 = vcombine.low %v1889, %v2019
        %v2613 = vcombine.high %v1889, %v2019
        %v2615 = vunpack.c.l.s4 1983009808
        %v2616 = vunpack.c.0.s8 %v2615
        %v2617 = vlaneseq
        %v2618 = vshrl.u32 %v2617, 7
        %v2619 = vsub.s32 %v2616, %v2618
        %v2620 = vrot.slane %v2612, %v2619
        %v2622 = vunpack.c.l.s4 1983009808
        %v2623 = vunpack.c.0.s8 %v2622
        %v2624 = vlaneseq
        %v2625 = vshrl.u32 %v2624, 7
        %v2626 = vsub.s32 %v2623, %v2625
        %v2627 = vrot.slane %v2613, %v2626
        %v2628 = vcombine.high %v2620, %v2620
        %v2629 = vcombine.high %v2627, %v2627
        %v2630 = vcombine.low %v1890, %v2020
        %v2631 = vcombine.high %v1890, %v2020
        %v2633 = vunpack.c.l.s4 1983009808
        %v2634 = vunpack.c.0.s8 %v2633
        %v2635 = vlaneseq
        %v2636 = vshrl.u32 %v2635, 7
        %v2637 = vsub.s32 %v2634, %v2636
        %v2638 = vrot.slane %v2630, %v2637
        %v2640 = vunpack.c.l.s4 1983009808
        %v2641 = vunpack.c.0.s8 %v2640
        %v2642 = vlaneseq
        %v2643 = vshrl.u32 %v2642, 7
        %v2644 = vsub.s32 %v2641, %v2643
        %v2645 = vrot.slane %v2631, %v2644
        %v2646 = vcombine.high %v2638, %v2638
        %v2647 = vcombine.low %v1891, %v2021
        %v2648 = vcombine.high %v1891, %v2021
        %v2650 = vunpack.c.l.s4 1983009808
        %v2651 = vunpack.c.0.s8 %v2650
        %v2652 = vlaneseq
        %v2653 = vshrl.u32 %v2652, 7
        %v2654 = vsub.s32 %v2651, %v2653
        %v2655 = vrot.slane %v2647, %v2654
        %v2657 = vunpack.c.l.s4 1983009808
        %v2658 = vunpack.c.0.s8 %v2657
        %v2659 = vlaneseq
        %v2660 = vshrl.u32 %v2659, 7
        %v2661 = vsub.s32 %v2658, %v2660
        %v2662 = vrot.slane %v2648, %v2661
        %v2663 = vcombine.high %v2655, %v2655
        %v2664 = vcombine.high %v2662, %v2662
        %v2665 = vcombine.low %v1892, %v2022
        %v2666 = vcombine.high %v1892, %v2022
        %v2668 = vunpack.c.l.s4 1983009808
        %v2669 = vunpack.c.0.s8 %v2668
        %v2670 = vlaneseq
        %v2671 = vshrl.u32 %v2670, 7
        %v2672 = vsub.s32 %v2669, %v2671
        %v2673 = vrot.slane %v2665, %v2672
        %v2675 = vunpack.c.l.s4 1983009808
        %v2676 = vunpack.c.0.s8 %v2675
        %v2677 = vlaneseq
        %v2678 = vshrl.u32 %v2677, 7
        %v2679 = vsub.s32 %v2676, %v2678
        %v2680 = vrot.slane %v2666, %v2679
        %v2681 = vcombine.high %v2673, %v2673
        %v2682 = vcombine.low %v1893, %v2023
        %v2683 = vcombine.high %v1893, %v2023
        %v2685 = vunpack.c.l.s4 1983009808
        %v2686 = vunpack.c.0.s8 %v2685
        %v2687 = vlaneseq
        %v2688 = vshrl.u32 %v2687, 7
        %v2689 = vsub.s32 %v2686, %v2688
        %v2690 = vrot.slane %v2682, %v2689
        %v2692 = vunpack.c.l.s4 1983009808
        %v2693 = vunpack.c.0.s8 %v2692
        %v2694 = vlaneseq
        %v2695 = vshrl.u32 %v2694, 7
        %v2696 = vsub.s32 %v2693, %v2695
        %v2697 = vrot.slane %v2683, %v2696
        %v2698 = vcombine.high %v2690, %v2690
        %v2699 = vcombine.high %v2697, %v2697
        %v2700 = vcombine.low %v1894, %v2024
        %v2701 = vcombine.high %v1894, %v2024
        %v2703 = vunpack.c.l.s4 1983009808
        %v2704 = vunpack.c.0.s8 %v2703
        %v2705 = vlaneseq
        %v2706 = vshrl.u32 %v2705, 7
        %v2707 = vsub.s32 %v2704, %v2706
        %v2708 = vrot.slane %v2700, %v2707
        %v2710 = vunpack.c.l.s4 1983009808
        %v2711 = vunpack.c.0.s8 %v2710
        %v2712 = vlaneseq
        %v2713 = vshrl.u32 %v2712, 7
        %v2714 = vsub.s32 %v2711, %v2713
        %v2715 = vrot.slane %v2701, %v2714
        %v2716 = vcombine.high %v2708, %v2708
        %v2717 = vcombine.low %v1895, %v2025
        %v2718 = vcombine.high %v1895, %v2025
        %v2720 = vunpack.c.l.s4 1983009808
        %v2721 = vunpack.c.0.s8 %v2720
        %v2722 = vlaneseq
        %v2723 = vshrl.u32 %v2722, 7
        %v2724 = vsub.s32 %v2721, %v2723
        %v2725 = vrot.slane %v2717, %v2724
        %v2727 = vunpack.c.l.s4 1983009808
        %v2728 = vunpack.c.0.s8 %v2727
        %v2729 = vlaneseq
        %v2730 = vshrl.u32 %v2729, 7
        %v2731 = vsub.s32 %v2728, %v2730
        %v2732 = vrot.slane %v2718, %v2731
        %v2733 = vcombine.high %v2725, %v2725
        %v2734 = vcombine.high %v2732, %v2732
        %v2735 = vcombine.low %v1896, %v2026
        %v2736 = vcombine.high %v1896, %v2026
        %v2738 = vunpack.c.l.s4 1983009808
        %v2739 = vunpack.c.0.s8 %v2738
        %v2740 = vlaneseq
        %v2741 = vshrl.u32 %v2740, 7
        %v2742 = vsub.s32 %v2739, %v2741
        %v2743 = vrot.slane %v2735, %v2742
        %v2745 = vunpack.c.l.s4 1983009808
        %v2746 = vunpack.c.0.s8 %v2745
        %v2747 = vlaneseq
        %v2748 = vshrl.u32 %v2747, 7
        %v2749 = vsub.s32 %v2746, %v2748
        %v2750 = vrot.slane %v2736, %v2749
        %v2751 = vcombine.high %v2743, %v2743
        %v2752 = vcombine.low %v1897, %v2027
        %v2753 = vcombine.high %v1897, %v2027
        %v2755 = vunpack.c.l.s4 1983009808
        %v2756 = vunpack.c.0.s8 %v2755
        %v2757 = vlaneseq
        %v2758 = vshrl.u32 %v2757, 7
        %v2759 = vsub.s32 %v2756, %v2758
        %v2760 = vrot.slane %v2752, %v2759
        %v2762 = vunpack.c.l.s4 1983009808
        %v2763 = vunpack.c.0.s8 %v2762
        %v2764 = vlaneseq
        %v2765 = vshrl.u32 %v2764, 7
        %v2766 = vsub.s32 %v2763, %v2765
        %v2767 = vrot.slane %v2753, %v2766
        %v2768 = vcombine.high %v2760, %v2760
        %v2769 = vcombine.high %v2767, %v2767
        %v2770 = vcombine.low %v1898, %v2028
        %v2771 = vcombine.high %v1898, %v2028
        %v2773 = vunpack.c.l.s4 1983009808
        %v2774 = vunpack.c.0.s8 %v2773
        %v2775 = vlaneseq
        %v2776 = vshrl.u32 %v2775, 7
        %v2777 = vsub.s32 %v2774, %v2776
        %v2778 = vrot.slane %v2770, %v2777
        %v2780 = vunpack.c.l.s4 1983009808
        %v2781 = vunpack.c.0.s8 %v2780
        %v2782 = vlaneseq
        %v2783 = vshrl.u32 %v2782, 7
        %v2784 = vsub.s32 %v2781, %v2783
        %v2785 = vrot.slane %v2771, %v2784
        %v2786 = vcombine.high %v2778, %v2778
        %v2787 = vcombine.low %v1899, %v2029
        %v2788 = vcombine.high %v1899, %v2029
        %v2790 = vunpack.c.l.s4 1983009808
        %v2791 = vunpack.c.0.s8 %v2790
        %v2792 = vlaneseq
        %v2793 = vshrl.u32 %v2792, 7
        %v2794 = vsub.s32 %v2791, %v2793
        %v2795 = vrot.slane %v2787, %v2794
        %v2797 = vunpack.c.l.s4 1983009808
        %v2798 = vunpack.c.0.s8 %v2797
        %v2799 = vlaneseq
        %v2800 = vshrl.u32 %v2799, 7
        %v2801 = vsub.s32 %v2798, %v2800
        %v2802 = vrot.slane %v2788, %v2801
        %v2803 = vcombine.high %v2795, %v2795
        %v2804 = vcombine.high %v2802, %v2802
        %v2805 = vcombine.low %v1900, %v2030
        %v2806 = vcombine.high %v1900, %v2030
        %v2808 = vunpack.c.l.s4 1983009808
        %v2809 = vunpack.c.0.s8 %v2808
        %v2810 = vlaneseq
        %v2811 = vshrl.u32 %v2810, 7
        %v2812 = vsub.s32 %v2809, %v2811
        %v2813 = vrot.slane %v2805, %v2812
        %v2815 = vunpack.c.l.s4 1983009808
        %v2816 = vunpack.c.0.s8 %v2815
        %v2817 = vlaneseq
        %v2818 = vshrl.u32 %v2817, 7
        %v2819 = vsub.s32 %v2816, %v2818
        %v2820 = vrot.slane %v2806, %v2819
        %v2821 = vcombine.high %v2813, %v2813
        %v2822 = vcombine.low %v1901, %v2031
        %v2823 = vcombine.high %v1901, %v2031
        %v2825 = vunpack.c.l.s4 1983009808
        %v2826 = vunpack.c.0.s8 %v2825
        %v2827 = vlaneseq
        %v2828 = vshrl.u32 %v2827, 7
        %v2829 = vsub.s32 %v2826, %v2828
        %v2830 = vrot.slane %v2822, %v2829
        %v2832 = vunpack.c.l.s4 1983009808
        %v2833 = vunpack.c.0.s8 %v2832
        %v2834 = vlaneseq
        %v2835 = vshrl.u32 %v2834, 7
        %v2836 = vsub.s32 %v2833, %v2835
        %v2837 = vrot.slane %v2823, %v2836
        %v2838 = vcombine.high %v2830, %v2830
        %v2839 = vcombine.high %v2837, %v2837
        %v2840 = vcombine.low %v1902, %v2032
        %v2841 = vcombine.high %v1902, %v2032
        %v2843 = vunpack.c.l.s4 1983009808
        %v2844 = vunpack.c.0.s8 %v2843
        %v2845 = vlaneseq
        %v2846 = vshrl.u32 %v2845, 7
        %v2847 = vsub.s32 %v2844, %v2846
        %v2848 = vrot.slane %v2840, %v2847
        %v2850 = vunpack.c.l.s4 1983009808
        %v2851 = vunpack.c.0.s8 %v2850
        %v2852 = vlaneseq
        %v2853 = vshrl.u32 %v2852, 7
        %v2854 = vsub.s32 %v2851, %v2853
        %v2855 = vrot.slane %v2841, %v2854
        %v2856 = vcombine.high %v2848, %v2848
        %v2857 = vcombine.low %v1903, %v2033
        %v2858 = vcombine.high %v1903, %v2033
        %v2860 = vunpack.c.l.s4 1983009808
        %v2861 = vunpack.c.0.s8 %v2860
        %v2862 = vlaneseq
        %v2863 = vshrl.u32 %v2862, 7
        %v2864 = vsub.s32 %v2861, %v2863
        %v2865 = vrot.slane %v2857, %v2864
        %v2867 = vunpack.c.l.s4 1983009808
        %v2868 = vunpack.c.0.s8 %v2867
        %v2869 = vlaneseq
        %v2870 = vshrl.u32 %v2869, 7
        %v2871 = vsub.s32 %v2868, %v2870
        %v2872 = vrot.slane %v2858, %v2871
        %v2873 = vcombine.high %v2865, %v2865
        %v2874 = vcombine.high %v2872, %v2872
        %v2875 = vcombine.low %v1904, %v2034
        %v2876 = vcombine.high %v1904, %v2034
        %v2878 = vunpack.c.l.s4 1983009808
        %v2879 = vunpack.c.0.s8 %v2878
        %v2880 = vlaneseq
        %v2881 = vshrl.u32 %v2880, 7
        %v2882 = vsub.s32 %v2879, %v2881
        %v2883 = vrot.slane %v2875, %v2882
        %v2885 = vunpack.c.l.s4 1983009808
        %v2886 = vunpack.c.0.s8 %v2885
        %v2887 = vlaneseq
        %v2888 = vshrl.u32 %v2887, 7
        %v2889 = vsub.s32 %v2886, %v2888
        %v2890 = vrot.slane %v2876, %v2889
        %v2891 = vcombine.high %v2883, %v2883
        %v2892 = vcombine.low %v1905, %v2035
        %v2893 = vcombine.high %v1905, %v2035
        %v2895 = vunpack.c.l.s4 1983009808
        %v2896 = vunpack.c.0.s8 %v2895
        %v2897 = vlaneseq
        %v2898 = vshrl.u32 %v2897, 7
        %v2899 = vsub.s32 %v2896, %v2898
        %v2900 = vrot.slane %v2892, %v2899
        %v2902 = vunpack.c.l.s4 1983009808
        %v2903 = vunpack.c.0.s8 %v2902
        %v2904 = vlaneseq
        %v2905 = vshrl.u32 %v2904, 7
        %v2906 = vsub.s32 %v2903, %v2905
        %v2907 = vrot.slane %v2893, %v2906
        %v2908 = vcombine.high %v2900, %v2900
        %v2909 = vcombine.high %v2907, %v2907
        %v2910 = vcombine.low %v1906, %v2036
        %v2911 = vcombine.high %v1906, %v2036
        %v2913 = vunpack.c.l.s4 1983009808
        %v2914 = vunpack.c.0.s8 %v2913
        %v2915 = vlaneseq
        %v2916 = vshrl.u32 %v2915, 7
        %v2917 = vsub.s32 %v2914, %v2916
        %v2918 = vrot.slane %v2910, %v2917
        %v2920 = vunpack.c.l.s4 1983009808
        %v2921 = vunpack.c.0.s8 %v2920
        %v2922 = vlaneseq
        %v2923 = vshrl.u32 %v2922, 7
        %v2924 = vsub.s32 %v2921, %v2923
        %v2925 = vrot.slane %v2911, %v2924
        %v2926 = vcombine.high %v2918, %v2918
        %v2927 = vcombine.low %v1907, %v2037
        %v2928 = vcombine.high %v1907, %v2037
        %v2930 = vunpack.c.l.s4 1983009808
        %v2931 = vunpack.c.0.s8 %v2930
        %v2932 = vlaneseq
        %v2933 = vshrl.u32 %v2932, 7
        %v2934 = vsub.s32 %v2931, %v2933
        %v2935 = vrot.slane %v2927, %v2934
        %v2937 = vunpack.c.l.s4 1983009808
        %v2938 = vunpack.c.0.s8 %v2937
        %v2939 = vlaneseq
        %v2940 = vshrl.u32 %v2939, 7
        %v2941 = vsub.s32 %v2938, %v2940
        %v2942 = vrot.slane %v2928, %v2941
        %v2943 = vcombine.high %v2935, %v2935
        %v2944 = vcombine.high %v2942, %v2942
        %v2945 = vcombine.low %v1908, %v2038
        %v2946 = vcombine.high %v1908, %v2038
        %v2948 = vunpack.c.l.s4 1983009808
        %v2949 = vunpack.c.0.s8 %v2948
        %v2950 = vlaneseq
        %v2951 = vshrl.u32 %v2950, 7
        %v2952 = vsub.s32 %v2949, %v2951
        %v2953 = vrot.slane %v2945, %v2952
        %v2955 = vunpack.c.l.s4 1983009808
        %v2956 = vunpack.c.0.s8 %v2955
        %v2957 = vlaneseq
        %v2958 = vshrl.u32 %v2957, 7
        %v2959 = vsub.s32 %v2956, %v2958
        %v2960 = vrot.slane %v2946, %v2959
        %v2961 = vcombine.high %v2953, %v2953
        %v2962 = vcombine.low %v1909, %v2039
        %v2963 = vcombine.high %v1909, %v2039
        %v2965 = vunpack.c.l.s4 1983009808
        %v2966 = vunpack.c.0.s8 %v2965
        %v2967 = vlaneseq
        %v2968 = vshrl.u32 %v2967, 7
        %v2969 = vsub.s32 %v2966, %v2968
        %v2970 = vrot.slane %v2962, %v2969
        %v2972 = vunpack.c.l.s4 1983009808
        %v2973 = vunpack.c.0.s8 %v2972
        %v2974 = vlaneseq
        %v2975 = vshrl.u32 %v2974, 7
        %v2976 = vsub.s32 %v2973, %v2975
        %v2977 = vrot.slane %v2963, %v2976
        %v2978 = vcombine.high %v2970, %v2970
        %v2979 = vcombine.high %v2977, %v2977
        %v2980 = vcombine.low %v1910, %v2040
        %v2981 = vcombine.high %v1910, %v2040
        %v2983 = vunpack.c.l.s4 1983009808
        %v2984 = vunpack.c.0.s8 %v2983
        %v2985 = vlaneseq
        %v2986 = vshrl.u32 %v2985, 7
        %v2987 = vsub.s32 %v2984, %v2986
        %v2988 = vrot.slane %v2980, %v2987
        %v2990 = vunpack.c.l.s4 1983009808
        %v2991 = vunpack.c.0.s8 %v2990
        %v2992 = vlaneseq
        %v2993 = vshrl.u32 %v2992, 7
        %v2994 = vsub.s32 %v2991, %v2993
        %v2995 = vrot.slane %v2981, %v2994
        %v2996 = vcombine.high %v2988, %v2988
        %v2997 = vcombine.low %v1911, %v2041
        %v2998 = vcombine.high %v1911, %v2041
        %v3000 = vunpack.c.l.s4 1983009808
        %v3001 = vunpack.c.0.s8 %v3000
        %v3002 = vlaneseq
        %v3003 = vshrl.u32 %v3002, 7
        %v3004 = vsub.s32 %v3001, %v3003
        %v3005 = vrot.slane %v2997, %v3004
        %v3007 = vunpack.c.l.s4 1983009808
        %v3008 = vunpack.c.0.s8 %v3007
        %v3009 = vlaneseq
        %v3010 = vshrl.u32 %v3009, 7
        %v3011 = vsub.s32 %v3008, %v3010
        %v3012 = vrot.slane %v2998, %v3011
        %v3013 = vcombine.high %v3005, %v3005
        %v3014 = vcombine.high %v3012, %v3012
        %v3015 = vcombine.low %v1912, %v2042
        %v3016 = vcombine.high %v1912, %v2042
        %v3018 = vunpack.c.l.s4 1983009808
        %v3019 = vunpack.c.0.s8 %v3018
        %v3020 = vlaneseq
        %v3021 = vshrl.u32 %v3020, 7
        %v3022 = vsub.s32 %v3019, %v3021
        %v3023 = vrot.slane %v3015, %v3022
        %v3025 = vunpack.c.l.s4 1983009808
        %v3026 = vunpack.c.0.s8 %v3025
        %v3027 = vlaneseq
        %v3028 = vshrl.u32 %v3027, 7
        %v3029 = vsub.s32 %v3026, %v3028
        %v3030 = vrot.slane %v3016, %v3029
        %v3031 = vcombine.high %v3023, %v3023
        %v3032 = vcombine.low %v1913, %v2043
        %v3033 = vcombine.high %v1913, %v2043
        %v3035 = vunpack.c.l.s4 1983009808
        %v3036 = vunpack.c.0.s8 %v3035
        %v3037 = vlaneseq
        %v3038 = vshrl.u32 %v3037, 7
        %v3039 = vsub.s32 %v3036, %v3038
        %v3040 = vrot.slane %v3032, %v3039
        %v3042 = vunpack.c.l.s4 1983009808
        %v3043 = vunpack.c.0.s8 %v3042
        %v3044 = vlaneseq
        %v3045 = vshrl.u32 %v3044, 7
        %v3046 = vsub.s32 %v3043, %v3045
        %v3047 = vrot.slane %v3033, %v3046
        %v3048 = vcombine.high %v3040, %v3040
        %v3049 = vcombine.high %v3047, %v3047
        %v3050 = vcombine.low %v1914, %v2044
        %v3051 = vcombine.high %v1914, %v2044
        %v3053 = vunpack.c.l.s4 1983009808
        %v3054 = vunpack.c.0.s8 %v3053
        %v3055 = vlaneseq
        %v3056 = vshrl.u32 %v3055, 7
        %v3057 = vsub.s32 %v3054, %v3056
        %v3058 = vrot.slane %v3050, %v3057
        %v3060 = vunpack.c.l.s4 1983009808
        %v3061 = vunpack.c.0.s8 %v3060
        %v3062 = vlaneseq
        %v3063 = vshrl.u32 %v3062, 7
        %v3064 = vsub.s32 %v3061, %v3063
        %v3065 = vrot.slane %v3051, %v3064
        %v3066 = vcombine.high %v3058, %v3058
        %v3067 = vcombine.low %v1915, %v2045
        %v3068 = vcombine.high %v1915, %v2045
        %v3070 = vunpack.c.l.s4 1983009808
        %v3071 = vunpack.c.0.s8 %v3070
        %v3072 = vlaneseq
        %v3073 = vshrl.u32 %v3072, 7
        %v3074 = vsub.s32 %v3071, %v3073
        %v3075 = vrot.slane %v3067, %v3074
        %v3077 = vunpack.c.l.s4 1983009808
        %v3078 = vunpack.c.0.s8 %v3077
        %v3079 = vlaneseq
        %v3080 = vshrl.u32 %v3079, 7
        %v3081 = vsub.s32 %v3078, %v3080
        %v3082 = vrot.slane %v3068, %v3081
        %v3083 = vcombine.high %v3075, %v3075
        %v3084 = vcombine.high %v3082, %v3082
        %v3085 = vcombine.low %v1916, %v2046
        %v3086 = vcombine.high %v1916, %v2046
        %v3088 = vunpack.c.l.s4 1983009808
        %v3089 = vunpack.c.0.s8 %v3088
        %v3090 = vlaneseq
        %v3091 = vshrl.u32 %v3090, 7
        %v3092 = vsub.s32 %v3089, %v3091
        %v3093 = vrot.slane %v3085, %v3092
        %v3095 = vunpack.c.l.s4 1983009808
        %v3096 = vunpack.c.0.s8 %v3095
        %v3097 = vlaneseq
        %v3098 = vshrl.u32 %v3097, 7
        %v3099 = vsub.s32 %v3096, %v3098
        %v3100 = vrot.slane %v3086, %v3099
        %v3101 = vcombine.high %v3093, %v3093
        %v3102 = vcombine.low %v1917, %v2047
        %v3103 = vcombine.high %v1917, %v2047
        %v3105 = vunpack.c.l.s4 1983009808
        %v3106 = vunpack.c.0.s8 %v3105
        %v3107 = vlaneseq
        %v3108 = vshrl.u32 %v3107, 7
        %v3109 = vsub.s32 %v3106, %v3108
        %v3110 = vrot.slane %v3102, %v3109
        %v3112 = vunpack.c.l.s4 1983009808
        %v3113 = vunpack.c.0.s8 %v3112
        %v3114 = vlaneseq
        %v3115 = vshrl.u32 %v3114, 7
        %v3116 = vsub.s32 %v3113, %v3115
        %v3117 = vrot.slane %v3103, %v3116
        %v3118 = vcombine.high %v3110, %v3110
        %v3119 = vcombine.high %v3117, %v3117
        %v3120 = vcombine.low %v1918, %v2048
        %v3121 = vcombine.high %v1918, %v2048
        %v3123 = vunpack.c.l.s4 1983009808
        %v3124 = vunpack.c.0.s8 %v3123
        %v3125 = vlaneseq
        %v3126 = vshrl.u32 %v3125, 7
        %v3127 = vsub.s32 %v3124, %v3126
        %v3128 = vrot.slane %v3120, %v3127
        %v3130 = vunpack.c.l.s4 1983009808
        %v3131 = vunpack.c.0.s8 %v3130
        %v3132 = vlaneseq
        %v3133 = vshrl.u32 %v3132, 7
        %v3134 = vsub.s32 %v3131, %v3133
        %v3135 = vrot.slane %v3121, %v3134
        %v3136 = vcombine.high %v3128, %v3128
        %v3137 = vcombine.low %v1919, %v2049
        %v3138 = vcombine.high %v1919, %v2049
        %v3140 = vunpack.c.l.s4 1983009808
        %v3141 = vunpack.c.0.s8 %v3140
        %v3142 = vlaneseq
        %v3143 = vshrl.u32 %v3142, 7
        %v3144 = vsub.s32 %v3141, %v3143
        %v3145 = vrot.slane %v3137, %v3144
        %v3147 = vunpack.c.l.s4 1983009808
        %v3148 = vunpack.c.0.s8 %v3147
        %v3149 = vlaneseq
        %v3150 = vshrl.u32 %v3149, 7
        %v3151 = vsub.s32 %v3148, %v3150
        %v3152 = vrot.slane %v3138, %v3151
        %v3153 = vcombine.high %v3145, %v3145
        %v3154 = vcombine.high %v3152, %v3152
        %v3155 = vcombine.low %v1920, %v2050
        %v3156 = vcombine.high %v1920, %v2050
        %v3158 = vunpack.c.l.s4 1983009808
        %v3159 = vunpack.c.0.s8 %v3158
        %v3160 = vlaneseq
        %v3161 = vshrl.u32 %v3160, 7
        %v3162 = vsub.s32 %v3159, %v3161
        %v3163 = vrot.slane %v3155, %v3162
        %v3165 = vunpack.c.l.s4 1983009808
        %v3166 = vunpack.c.0.s8 %v3165
        %v3167 = vlaneseq
        %v3168 = vshrl.u32 %v3167, 7
        %v3169 = vsub.s32 %v3166, %v3168
        %v3170 = vrot.slane %v3156, %v3169
        %v3171 = vcombine.high %v3163, %v3163
        %v3172 = vcombine.low %v1921, %v2051
        %v3173 = vcombine.high %v1921, %v2051
        %v3175 = vunpack.c.l.s4 1983009808
        %v3176 = vunpack.c.0.s8 %v3175
        %v3177 = vlaneseq
        %v3178 = vshrl.u32 %v3177, 7
        %v3179 = vsub.s32 %v3176, %v3178
        %v3180 = vrot.slane %v3172, %v3179
        %v3182 = vunpack.c.l.s4 1983009808
        %v3183 = vunpack.c.0.s8 %v3182
        %v3184 = vlaneseq
        %v3185 = vshrl.u32 %v3184, 7
        %v3186 = vsub.s32 %v3183, %v3185
        %v3187 = vrot.slane %v3173, %v3186
        %v3188 = vcombine.high %v3180, %v3180
        %v3189 = vcombine.high %v3187, %v3187
        %v3190 = vcombine.low %v1922, %v2052
        %v3191 = vcombine.high %v1922, %v2052
        %v3193 = vunpack.c.l.s4 1983009808
        %v3194 = vunpack.c.0.s8 %v3193
        %v3195 = vlaneseq
        %v3196 = vshrl.u32 %v3195, 7
        %v3197 = vsub.s32 %v3194, %v3196
        %v3198 = vrot.slane %v3190, %v3197
        %v3200 = vunpack.c.l.s4 1983009808
        %v3201 = vunpack.c.0.s8 %v3200
        %v3202 = vlaneseq
        %v3203 = vshrl.u32 %v3202, 7
        %v3204 = vsub.s32 %v3201, %v3203
        %v3205 = vrot.slane %v3191, %v3204
        %v3206 = vcombine.high %v3198, %v3198
        %v3207 = vcombine.low %v1923, %v2053
        %v3208 = vcombine.high %v1923, %v2053
        %v3210 = vunpack.c.l.s4 1983009808
        %v3211 = vunpack.c.0.s8 %v3210
        %v3212 = vlaneseq
        %v3213 = vshrl.u32 %v3212, 7
        %v3214 = vsub.s32 %v3211, %v3213
        %v3215 = vrot.slane %v3207, %v3214
        %v3217 = vunpack.c.l.s4 1983009808
        %v3218 = vunpack.c.0.s8 %v3217
        %v3219 = vlaneseq
        %v3220 = vshrl.u32 %v3219, 7
        %v3221 = vsub.s32 %v3218, %v3220
        %v3222 = vrot.slane %v3208, %v3221
        %v3223 = vcombine.high %v3215, %v3215
        %v3224 = vcombine.high %v3222, %v3222
        %v3225 = vcombine.low %v1924, %v2054
        %v3226 = vcombine.high %v1924, %v2054
        %v3228 = vunpack.c.l.s4 1983009808
        %v3229 = vunpack.c.0.s8 %v3228
        %v3230 = vlaneseq
        %v3231 = vshrl.u32 %v3230, 7
        %v3232 = vsub.s32 %v3229, %v3231
        %v3233 = vrot.slane %v3225, %v3232
        %v3235 = vunpack.c.l.s4 1983009808
        %v3236 = vunpack.c.0.s8 %v3235
        %v3237 = vlaneseq
        %v3238 = vshrl.u32 %v3237, 7
        %v3239 = vsub.s32 %v3236, %v3238
        %v3240 = vrot.slane %v3226, %v3239
        %v3241 = vcombine.high %v3233, %v3233
        %v3242 = vcombine.low %v1925, %v2055
        %v3243 = vcombine.high %v1925, %v2055
        %v3245 = vunpack.c.l.s4 1983009808
        %v3246 = vunpack.c.0.s8 %v3245
        %v3247 = vlaneseq
        %v3248 = vshrl.u32 %v3247, 7
        %v3249 = vsub.s32 %v3246, %v3248
        %v3250 = vrot.slane %v3242, %v3249
        %v3252 = vunpack.c.l.s4 1983009808
        %v3253 = vunpack.c.0.s8 %v3252
        %v3254 = vlaneseq
        %v3255 = vshrl.u32 %v3254, 7
        %v3256 = vsub.s32 %v3253, %v3255
        %v3257 = vrot.slane %v3243, %v3256
        %v3258 = vcombine.high %v3250, %v3250
        %v3259 = vcombine.high %v3257, %v3257
        %v3260 = vcombine.low %v1926, %v2056
        %v3261 = vcombine.high %v1926, %v2056
        %v3263 = vunpack.c.l.s4 1983009808
        %v3264 = vunpack.c.0.s8 %v3263
        %v3265 = vlaneseq
        %v3266 = vshrl.u32 %v3265, 7
        %v3267 = vsub.s32 %v3264, %v3266
        %v3268 = vrot.slane %v3260, %v3267
        %v3270 = vunpack.c.l.s4 1983009808
        %v3271 = vunpack.c.0.s8 %v3270
        %v3272 = vlaneseq
        %v3273 = vshrl.u32 %v3272, 7
        %v3274 = vsub.s32 %v3271, %v3273
        %v3275 = vrot.slane %v3261, %v3274
        %v3276 = vcombine.high %v3268, %v3268
        %v3277 = vcombine.low %v1927, %v2057
        %v3278 = vcombine.high %v1927, %v2057
        %v3280 = vunpack.c.l.s4 1983009808
        %v3281 = vunpack.c.0.s8 %v3280
        %v3282 = vlaneseq
        %v3283 = vshrl.u32 %v3282, 7
        %v3284 = vsub.s32 %v3281, %v3283
        %v3285 = vrot.slane %v3277, %v3284
        %v3287 = vunpack.c.l.s4 1983009808
        %v3288 = vunpack.c.0.s8 %v3287
        %v3289 = vlaneseq
        %v3290 = vshrl.u32 %v3289, 7
        %v3291 = vsub.s32 %v3288, %v3290
        %v3292 = vrot.slane %v3278, %v3291
        %v3293 = vcombine.high %v3285, %v3285
        %v3294 = vcombine.high %v3292, %v3292
        %v3295 = vcombine.low %v1928, %v2058
        %v3296 = vcombine.high %v1928, %v2058
        %v3298 = vunpack.c.l.s4 1983009808
        %v3299 = vunpack.c.0.s8 %v3298
        %v3300 = vlaneseq
        %v3301 = vshrl.u32 %v3300, 7
        %v3302 = vsub.s32 %v3299, %v3301
        %v3303 = vrot.slane %v3295, %v3302
        %v3305 = vunpack.c.l.s4 1983009808
        %v3306 = vunpack.c.0.s8 %v3305
        %v3307 = vlaneseq
        %v3308 = vshrl.u32 %v3307, 7
        %v3309 = vsub.s32 %v3306, %v3308
        %v3310 = vrot.slane %v3296, %v3309
        %v3311 = vcombine.high %v3303, %v3303
        %v3312 = vcombine.low %v1929, %v2059
        %v3313 = vcombine.high %v1929, %v2059
        %v3315 = vunpack.c.l.s4 1983009808
        %v3316 = vunpack.c.0.s8 %v3315
        %v3317 = vlaneseq
        %v3318 = vshrl.u32 %v3317, 7
        %v3319 = vsub.s32 %v3316, %v3318
        %v3320 = vrot.slane %v3312, %v3319
        %v3322 = vunpack.c.l.s4 1983009808
        %v3323 = vunpack.c.0.s8 %v3322
        %v3324 = vlaneseq
        %v3325 = vshrl.u32 %v3324, 7
        %v3326 = vsub.s32 %v3323, %v3325
        %v3327 = vrot.slane %v3313, %v3326
        %v3328 = vcombine.high %v3320, %v3320
        %v3329 = vcombine.high %v3327, %v3327
        %v3330 = vcombine.low %v1930, %v2060
        %v3331 = vcombine.high %v1930, %v2060
        %v3333 = vunpack.c.l.s4 1983009808
        %v3334 = vunpack.c.0.s8 %v3333
        %v3335 = vlaneseq
        %v3336 = vshrl.u32 %v3335, 7
        %v3337 = vsub.s32 %v3334, %v3336
        %v3338 = vrot.slane %v3330, %v3337
        %v3340 = vunpack.c.l.s4 1983009808
        %v3341 = vunpack.c.0.s8 %v3340
        %v3342 = vlaneseq
        %v3343 = vshrl.u32 %v3342, 7
        %v3344 = vsub.s32 %v3341, %v3343
        %v3345 = vrot.slane %v3331, %v3344
        %v3346 = vcombine.high %v3338, %v3338
        %v3347 = vcombine.high %v2098, %v2098
        %v3349 = vunpack.c.l.s4 1983009808
        %v3350 = vunpack.c.0.s8 %v3349
        %v3351 = vlaneseq
        %v3352 = vshrl.u32 %v3351, 7
        %v3353 = vsub.s32 %v3350, %v3352
        %v3354 = vrot.slane %v2098, %v3353
        %v3356 = vunpack.c.l.s4 1983009808
        %v3357 = vunpack.c.0.s8 %v3356
        %v3358 = vlaneseq
        %v3359 = vshrl.u32 %v3358, 7
        %v3360 = vsub.s32 %v3357, %v3359
        %v3361 = vrot.slane %v3347, %v3360
        %v3362 = vcombine.high %v3354, %v3354
        %v3363 = vcombine.high %v3361, %v3361
        %v3364 = vcombine.low %v2235, %v2243
        %v3365 = vcombine.low %v2242, %v2244
        %v3367 = vunpack.c.l.s4 1983009808
        %v3368 = vunpack.c.0.s8 %v3367
        %v3369 = vlaneseq
        %v3370 = vshrl.u32 %v3369, 7
        %v3371 = vsub.s32 %v3368, %v3370
        %v3372 = vrot.slane %v3364, %v3371
        %v3374 = vunpack.c.l.s4 1983009808
        %v3375 = vunpack.c.0.s8 %v3374
        %v3376 = vlaneseq
        %v3377 = vshrl.u32 %v3376, 7
        %v3378 = vsub.s32 %v3375, %v3377
        %v3379 = vrot.slane %v3365, %v3378
        %v3380 = vcombine.low %v3372, %v3379
        %v3381 = vcombine.high %v3372, %v3379
        %v3382 = vcombine.low %v2253, %v2261
        %v3383 = vcombine.low %v2260, %v2270
        %v3385 = vunpack.c.l.s4 1983009808
        %v3386 = vunpack.c.0.s8 %v3385
        %v3387 = vlaneseq
        %v3388 = vshrl.u32 %v3387, 7
        %v3389 = vsub.s32 %v3386, %v3388
        %v3390 = vrot.slane %v3382, %v3389
        %v3392 = vunpack.c.l.s4 1983009808
        %v3393 = vunpack.c.0.s8 %v3392
        %v3394 = vlaneseq
        %v3395 = vshrl.u32 %v3394, 7
        %v3396 = vsub.s32 %v3393, %v3395
        %v3397 = vrot.slane %v3383, %v3396
        %v3398 = vcombine.low %v3390, %v3397
        %v3399 = vcombine.high %v3390, %v3397
        %v3400 = vcombine.low %v2278, %v2277
        %v3401 = vcombine.low %v2279, %v2288
        %v3403 = vunpack.c.l.s4 1983009808
        %v3404 = vunpack.c.0.s8 %v3403
        %v3405 = vlaneseq
        %v3406 = vshrl.u32 %v3405, 7
        %v3407 = vsub.s32 %v3404, %v3406
        %v3408 = vrot.slane %v3400, %v3407
        %v3410 = vunpack.c.l.s4 1983009808
        %v3411 = vunpack.c.0.s8 %v3410
        %v3412 = vlaneseq
        %v3413 = vshrl.u32 %v3412, 7
        %v3414 = vsub.s32 %v3411, %v3413
        %v3415 = vrot.slane %v3401, %v3414
        %v3416 = vcombine.low %v3408, %v3415
        %v3417 = vcombine.high %v3408, %v3415
        %v3418 = vcombine.low %v2296, %v2295
        %v3419 = vcombine.low %v2305, %v2313
        %v3421 = vunpack.c.l.s4 1983009808
        %v3422 = vunpack.c.0.s8 %v3421
        %v3423 = vlaneseq
        %v3424 = vshrl.u32 %v3423, 7
        %v3425 = vsub.s32 %v3422, %v3424
        %v3426 = vrot.slane %v3418, %v3425
        %v3428 = vunpack.c.l.s4 1983009808
        %v3429 = vunpack.c.0.s8 %v3428
        %v3430 = vlaneseq
        %v3431 = vshrl.u32 %v3430, 7
        %v3432 = vsub.s32 %v3429, %v3431
        %v3433 = vrot.slane %v3419, %v3432
        %v3434 = vcombine.low %v3426, %v3433
        %v3435 = vcombine.high %v3426, %v3433
        %v3436 = vcombine.low %v2312, %v2314
        %v3437 = vcombine.low %v2323, %v2331
        %v3439 = vunpack.c.l.s4 1983009808
        %v3440 = vunpack.c.0.s8 %v3439
        %v3441 = vlaneseq
        %v3442 = vshrl.u32 %v3441, 7
        %v3443 = vsub.s32 %v3440, %v3442
        %v3444 = vrot.slane %v3436, %v3443
        %v3446 = vunpack.c.l.s4 1983009808
        %v3447 = vunpack.c.0.s8 %v3446
        %v3448 = vlaneseq
        %v3449 = vshrl.u32 %v3448, 7
        %v3450 = vsub.s32 %v3447, %v3449
        %v3451 = vrot.slane %v3437, %v3450
        %v3452 = vcombine.low %v3444, %v3451
        %v3453 = vcombine.high %v3444, %v3451
        %v3454 = vcombine.low %v2330, %v2340
        %v3455 = vcombine.low %v2348, %v2347
        %v3457 = vunpack.c.l.s4 1983009808
        %v3458 = vunpack.c.0.s8 %v3457
        %v3459 = vlaneseq
        %v3460 = vshrl.u32 %v3459, 7
        %v3461 = vsub.s32 %v3458, %v3460
        %v3462 = vrot.slane %v3454, %v3461
        %v3464 = vunpack.c.l.s4 1983009808
        %v3465 = vunpack.c.0.s8 %v3464
        %v3466 = vlaneseq
        %v3467 = vshrl.u32 %v3466, 7
        %v3468 = vsub.s32 %v3465, %v3467
        %v3469 = vrot.slane %v3455, %v3468
        %v3470 = vcombine.low %v3462, %v3469
        %v3471 = vcombine.high %v3462, %v3469
        %v3472 = vcombine.low %v2349, %v2358
        %v3473 = vcombine.low %v2366, %v2365
        %v3475 = vunpack.c.l.s4 1983009808
        %v3476 = vunpack.c.0.s8 %v3475
        %v3477 = vlaneseq
        %v3478 = vshrl.u32 %v3477, 7
        %v3479 = vsub.s32 %v3476, %v3478
        %v3480 = vrot.slane %v3472, %v3479
        %v3482 = vunpack.c.l.s4 1983009808
        %v3483 = vunpack.c.0.s8 %v3482
        %v3484 = vlaneseq
        %v3485 = vshrl.u32 %v3484, 7
        %v3486 = vsub.s32 %v3483, %v3485
        %v3487 = vrot.slane %v3473, %v3486
        %v3488 = vcombine.low %v3480, %v3487
        %v3489 = vcombine.high %v3480, %v3487
        %v3490 = vcombine.low %v2375, %v2383
        %v3491 = vcombine.low %v2382, %v2384
        %v3493 = vunpack.c.l.s4 1983009808
        %v3494 = vunpack.c.0.s8 %v3493
        %v3495 = vlaneseq
        %v3496 = vshrl.u32 %v3495, 7
        %v3497 = vsub.s32 %v3494, %v3496
        %v3498 = vrot.slane %v3490, %v3497
        %v3500 = vunpack.c.l.s4 1983009808
        %v3501 = vunpack.c.0.s8 %v3500
        %v3502 = vlaneseq
        %v3503 = vshrl.u32 %v3502, 7
        %v3504 = vsub.s32 %v3501, %v3503
        %v3505 = vrot.slane %v3491, %v3504
        %v3506 = vcombine.low %v3498, %v3505
        %v3507 = vcombine.high %v3498, %v3505
        %v3508 = vcombine.low %v2393, %v2401
        %v3509 = vcombine.low %v2400, %v2410
        %v3511 = vunpack.c.l.s4 1983009808
        %v3512 = vunpack.c.0.s8 %v3511
        %v3513 = vlaneseq
        %v3514 = vshrl.u32 %v3513, 7
        %v3515 = vsub.s32 %v3512, %v3514
        %v3516 = vrot.slane %v3508, %v3515
        %v3518 = vunpack.c.l.s4 1983009808
        %v3519 = vunpack.c.0.s8 %v3518
        %v3520 = vlaneseq
        %v3521 = vshrl.u32 %v3520, 7
        %v3522 = vsub.s32 %v3519, %v3521
        %v3523 = vrot.slane %v3509, %v3522
        %v3524 = vcombine.low %v3516, %v3523
        %v3525 = vcombine.high %v3516, %v3523
        %v3526 = vcombine.low %v2418, %v2417
        %v3527 = vcombine.low %v2419, %v2428
        %v3529 = vunpack.c.l.s4 1983009808
        %v3530 = vunpack.c.0.s8 %v3529
        %v3531 = vlaneseq
        %v3532 = vshrl.u32 %v3531, 7
        %v3533 = vsub.s32 %v3530, %v3532
        %v3534 = vrot.slane %v3526, %v3533
        %v3536 = vunpack.c.l.s4 1983009808
        %v3537 = vunpack.c.0.s8 %v3536
        %v3538 = vlaneseq
        %v3539 = vshrl.u32 %v3538, 7
        %v3540 = vsub.s32 %v3537, %v3539
        %v3541 = vrot.slane %v3527, %v3540
        %v3542 = vcombine.low %v3534, %v3541
        %v3543 = vcombine.high %v3534, %v3541
        %v3544 = vcombine.low %v2436, %v2435
        %v3545 = vcombine.low %v2445, %v2453
        %v3547 = vunpack.c.l.s4 1983009808
        %v3548 = vunpack.c.0.s8 %v3547
        %v3549 = vlaneseq
        %v3550 = vshrl.u32 %v3549, 7
        %v3551 = vsub.s32 %v3548, %v3550
        %v3552 = vrot.slane %v3544, %v3551
        %v3554 = vunpack.c.l.s4 1983009808
        %v3555 = vunpack.c.0.s8 %v3554
        %v3556 = vlaneseq
        %v3557 = vshrl.u32 %v3556, 7
        %v3558 = vsub.s32 %v3555, %v3557
        %v3559 = vrot.slane %v3545, %v3558
        %v3560 = vcombine.low %v3552, %v3559
        %v3561 = vcombine.high %v3552, %v3559
        %v3562 = vcombine.low %v2452, %v2454
        %v3563 = vcombine.low %v2463, %v2471
        %v3565 = vunpack.c.l.s4 1983009808
        %v3566 = vunpack.c.0.s8 %v3565
        %v3567 = vlaneseq
        %v3568 = vshrl.u32 %v3567, 7
        %v3569 = vsub.s32 %v3566, %v3568
        %v3570 = vrot.slane %v3562, %v3569
        %v3572 = vunpack.c.l.s4 1983009808
        %v3573 = vunpack.c.0.s8 %v3572
        %v3574 = vlaneseq
        %v3575 = vshrl.u32 %v3574, 7
        %v3576 = vsub.s32 %v3573, %v3575
        %v3577 = vrot.slane %v3563, %v3576
        %v3578 = vcombine.low %v3570, %v3577
        %v3579 = vcombine.high %v3570, %v3577
        %v3580 = vcombine.low %v2470, %v2480
        %v3581 = vcombine.low %v2488, %v2487
        %v3583 = vunpack.c.l.s4 1983009808
        %v3584 = vunpack.c.0.s8 %v3583
        %v3585 = vlaneseq
        %v3586 = vshrl.u32 %v3585, 7
        %v3587 = vsub.s32 %v3584, %v3586
        %v3588 = vrot.slane %v3580, %v3587
        %v3590 = vunpack.c.l.s4 1983009808
        %v3591 = vunpack.c.0.s8 %v3590
        %v3592 = vlaneseq
        %v3593 = vshrl.u32 %v3592, 7
        %v3594 = vsub.s32 %v3591, %v3593
        %v3595 = vrot.slane %v3581, %v3594
        %v3596 = vcombine.low %v3588, %v3595
        %v3597 = vcombine.high %v3588, %v3595
        %v3598 = vcombine.low %v2489, %v2498
        %v3599 = vcombine.low %v2506, %v2505
        %v3601 = vunpack.c.l.s4 1983009808
        %v3602 = vunpack.c.0.s8 %v3601
        %v3603 = vlaneseq
        %v3604 = vshrl.u32 %v3603, 7
        %v3605 = vsub.s32 %v3602, %v3604
        %v3606 = vrot.slane %v3598, %v3605
        %v3608 = vunpack.c.l.s4 1983009808
        %v3609 = vunpack.c.0.s8 %v3608
        %v3610 = vlaneseq
        %v3611 = vshrl.u32 %v3610, 7
        %v3612 = vsub.s32 %v3609, %v3611
        %v3613 = vrot.slane %v3599, %v3612
        %v3614 = vcombine.low %v3606, %v3613
        %v3615 = vcombine.high %v3606, %v3613
        %v3616 = vcombine.low %v2515, %v2523
        %v3617 = vcombine.low %v2522, %v2524
        %v3619 = vunpack.c.l.s4 1983009808
        %v3620 = vunpack.c.0.s8 %v3619
        %v3621 = vlaneseq
        %v3622 = vshrl.u32 %v3621, 7
        %v3623 = vsub.s32 %v3620, %v3622
        %v3624 = vrot.slane %v3616, %v3623
        %v3626 = vunpack.c.l.s4 1983009808
        %v3627 = vunpack.c.0.s8 %v3626
        %v3628 = vlaneseq
        %v3629 = vshrl.u32 %v3628, 7
        %v3630 = vsub.s32 %v3627, %v3629
        %v3631 = vrot.slane %v3617, %v3630
        %v3632 = vcombine.low %v3624, %v3631
        %v3633 = vcombine.high %v3624, %v3631
        %v3634 = vcombine.low %v2533, %v2541
        %v3635 = vcombine.low %v2540, %v2550
        %v3637 = vunpack.c.l.s4 1983009808
        %v3638 = vunpack.c.0.s8 %v3637
        %v3639 = vlaneseq
        %v3640 = vshrl.u32 %v3639, 7
        %v3641 = vsub.s32 %v3638, %v3640
        %v3642 = vrot.slane %v3634, %v3641
        %v3644 = vunpack.c.l.s4 1983009808
        %v3645 = vunpack.c.0.s8 %v3644
        %v3646 = vlaneseq
        %v3647 = vshrl.u32 %v3646, 7
        %v3648 = vsub.s32 %v3645, %v3647
        %v3649 = vrot.slane %v3635, %v3648
        %v3650 = vcombine.low %v3642, %v3649
        %v3651 = vcombine.high %v3642, %v3649
        %v3652 = vcombine.low %v2558, %v2557
        %v3653 = vcombine.low %v2559, %v2568
        %v3655 = vunpack.c.l.s4 1983009808
        %v3656 = vunpack.c.0.s8 %v3655
        %v3657 = vlaneseq
        %v3658 = vshrl.u32 %v3657, 7
        %v3659 = vsub.s32 %v3656, %v3658
        %v3660 = vrot.slane %v3652, %v3659
        %v3662 = vunpack.c.l.s4 1983009808
        %v3663 = vunpack.c.0.s8 %v3662
        %v3664 = vlaneseq
        %v3665 = vshrl.u32 %v3664, 7
        %v3666 = vsub.s32 %v3663, %v3665
        %v3667 = vrot.slane %v3653, %v3666
        %v3668 = vcombine.low %v3660, %v3667
        %v3669 = vcombine.high %v3660, %v3667
        %v3670 = vcombine.low %v2576, %v2575
        %v3671 = vcombine.low %v2585, %v2593
        %v3673 = vunpack.c.l.s4 1983009808
        %v3674 = vunpack.c.0.s8 %v3673
        %v3675 = vlaneseq
        %v3676 = vshrl.u32 %v3675, 7
        %v3677 = vsub.s32 %v3674, %v3676
        %v3678 = vrot.slane %v3670, %v3677
        %v3680 = vunpack.c.l.s4 1983009808
        %v3681 = vunpack.c.0.s8 %v3680
        %v3682 = vlaneseq
        %v3683 = vshrl.u32 %v3682, 7
        %v3684 = vsub.s32 %v3681, %v3683
        %v3685 = vrot.slane %v3671, %v3684
        %v3686 = vcombine.low %v3678, %v3685
        %v3687 = vcombine.high %v3678, %v3685
        %v3688 = vcombine.low %v2592, %v2594
        %v3689 = vcombine.low %v2603, %v2611
        %v3691 = vunpack.c.l.s4 1983009808
        %v3692 = vunpack.c.0.s8 %v3691
        %v3693 = vlaneseq
        %v3694 = vshrl.u32 %v3693, 7
        %v3695 = vsub.s32 %v3692, %v3694
        %v3696 = vrot.slane %v3688, %v3695
        %v3698 = vunpack.c.l.s4 1983009808
        %v3699 = vunpack.c.0.s8 %v3698
        %v3700 = vlaneseq
        %v3701 = vshrl.u32 %v3700, 7
        %v3702 = vsub.s32 %v3699, %v3701
        %v3703 = vrot.slane %v3689, %v3702
        %v3704 = vcombine.low %v3696, %v3703
        %v3705 = vcombine.high %v3696, %v3703
        %v3706 = vcombine.low %v2610, %v2620
        %v3707 = vcombine.low %v2628, %v2627
        %v3709 = vunpack.c.l.s4 1983009808
        %v3710 = vunpack.c.0.s8 %v3709
        %v3711 = vlaneseq
        %v3712 = vshrl.u32 %v3711, 7
        %v3713 = vsub.s32 %v3710, %v3712
        %v3714 = vrot.slane %v3706, %v3713
        %v3716 = vunpack.c.l.s4 1983009808
        %v3717 = vunpack.c.0.s8 %v3716
        %v3718 = vlaneseq
        %v3719 = vshrl.u32 %v3718, 7
        %v3720 = vsub.s32 %v3717, %v3719
        %v3721 = vrot.slane %v3707, %v3720
        %v3722 = vcombine.low %v3714, %v3721
        %v3723 = vcombine.high %v3714, %v3721
        %v3724 = vcombine.low %v2629, %v2638
        %v3725 = vcombine.low %v2646, %v2645
        %v3727 = vunpack.c.l.s4 1983009808
        %v3728 = vunpack.c.0.s8 %v3727
        %v3729 = vlaneseq
        %v3730 = vshrl.u32 %v3729, 7
        %v3731 = vsub.s32 %v3728, %v3730
        %v3732 = vrot.slane %v3724, %v3731
        %v3734 = vunpack.c.l.s4 1983009808
        %v3735 = vunpack.c.0.s8 %v3734
        %v3736 = vlaneseq
        %v3737 = vshrl.u32 %v3736, 7
        %v3738 = vsub.s32 %v3735, %v3737
        %v3739 = vrot.slane %v3725, %v3738
        %v3740 = vcombine.low %v3732, %v3739
        %v3741 = vcombine.high %v3732, %v3739
        %v3742 = vcombine.low %v2655, %v2663
        %v3743 = vcombine.low %v2662, %v2664
        %v3745 = vunpack.c.l.s4 1983009808
        %v3746 = vunpack.c.0.s8 %v3745
        %v3747 = vlaneseq
        %v3748 = vshrl.u32 %v3747, 7
        %v3749 = vsub.s32 %v3746, %v3748
        %v3750 = vrot.slane %v3742, %v3749
        %v3752 = vunpack.c.l.s4 1983009808
        %v3753 = vunpack.c.0.s8 %v3752
        %v3754 = vlaneseq
        %v3755 = vshrl.u32 %v3754, 7
        %v3756 = vsub.s32 %v3753, %v3755
        %v3757 = vrot.slane %v3743, %v3756
        %v3758 = vcombine.low %v3750, %v3757
        %v3759 = vcombine.high %v3750, %v3757
        %v3760 = vcombine.low %v2673, %v2681
        %v3761 = vcombine.low %v2680, %v2690
        %v3763 = vunpack.c.l.s4 1983009808
        %v3764 = vunpack.c.0.s8 %v3763
        %v3765 = vlaneseq
        %v3766 = vshrl.u32 %v3765, 7
        %v3767 = vsub.s32 %v3764, %v3766
        %v3768 = vrot.slane %v3760, %v3767
        %v3770 = vunpack.c.l.s4 1983009808
        %v3771 = vunpack.c.0.s8 %v3770
        %v3772 = vlaneseq
        %v3773 = vshrl.u32 %v3772, 7
        %v3774 = vsub.s32 %v3771, %v3773
        %v3775 = vrot.slane %v3761, %v3774
        %v3776 = vcombine.low %v3768, %v3775
        %v3777 = vcombine.high %v3768, %v3775
        %v3778 = vcombine.low %v2698, %v2697
        %v3779 = vcombine.low %v2699, %v2708
        %v3781 = vunpack.c.l.s4 1983009808
        %v3782 = vunpack.c.0.s8 %v3781
        %v3783 = vlaneseq
        %v3784 = vshrl.u32 %v3783, 7
        %v3785 = vsub.s32 %v3782, %v3784
        %v3786 = vrot.slane %v3778, %v3785
        %v3788 = vunpack.c.l.s4 1983009808
        %v3789 = vunpack.c.0.s8 %v3788
        %v3790 = vlaneseq
        %v3791 = vshrl.u32 %v3790, 7
        %v3792 = vsub.s32 %v3789, %v3791
        %v3793 = vrot.slane %v3779, %v3792
        %v3794 = vcombine.low %v3786, %v3793
        %v3795 = vcombine.high %v3786, %v3793
        %v3796 = vcombine.low %v2716, %v2715
        %v3797 = vcombine.low %v2725, %v2733
        %v3799 = vunpack.c.l.s4 1983009808
        %v3800 = vunpack.c.0.s8 %v3799
        %v3801 = vlaneseq
        %v3802 = vshrl.u32 %v3801, 7
        %v3803 = vsub.s32 %v3800, %v3802
        %v3804 = vrot.slane %v3796, %v3803
        %v3806 = vunpack.c.l.s4 1983009808
        %v3807 = vunpack.c.0.s8 %v3806
        %v3808 = vlaneseq
        %v3809 = vshrl.u32 %v3808, 7
        %v3810 = vsub.s32 %v3807, %v3809
        %v3811 = vrot.slane %v3797, %v3810
        %v3812 = vcombine.low %v3804, %v3811
        %v3813 = vcombine.high %v3804, %v3811
        %v3814 = vcombine.low %v2732, %v2734
        %v3815 = vcombine.low %v2743, %v2751
        %v3817 = vunpack.c.l.s4 1983009808
        %v3818 = vunpack.c.0.s8 %v3817
        %v3819 = vlaneseq
        %v3820 = vshrl.u32 %v3819, 7
        %v3821 = vsub.s32 %v3818, %v3820
        %v3822 = vrot.slane %v3814, %v3821
        %v3824 = vunpack.c.l.s4 1983009808
        %v3825 = vunpack.c.0.s8 %v3824
        %v3826 = vlaneseq
        %v3827 = vshrl.u32 %v3826, 7
        %v3828 = vsub.s32 %v3825, %v3827
        %v3829 = vrot.slane %v3815, %v3828
        %v3830 = vcombine.low %v3822, %v3829
        %v3831 = vcombine.high %v3822, %v3829
        %v3832 = vcombine.low %v2750, %v2760
        %v3833 = vcombine.low %v2768, %v2767
        %v3835 = vunpack.c.l.s4 1983009808
        %v3836 = vunpack.c.0.s8 %v3835
        %v3837 = vlaneseq
        %v3838 = vshrl.u32 %v3837, 7
        %v3839 = vsub.s32 %v3836, %v3838
        %v3840 = vrot.slane %v3832, %v3839
        %v3842 = vunpack.c.l.s4 1983009808
        %v3843 = vunpack.c.0.s8 %v3842
        %v3844 = vlaneseq
        %v3845 = vshrl.u32 %v3844, 7
        %v3846 = vsub.s32 %v3843, %v3845
        %v3847 = vrot.slane %v3833, %v3846
        %v3848 = vcombine.low %v3840, %v3847
        %v3849 = vcombine.high %v3840, %v3847
        %v3850 = vcombine.low %v2769, %v2778
        %v3851 = vcombine.low %v2786, %v2785
        %v3853 = vunpack.c.l.s4 1983009808
        %v3854 = vunpack.c.0.s8 %v3853
        %v3855 = vlaneseq
        %v3856 = vshrl.u32 %v3855, 7
        %v3857 = vsub.s32 %v3854, %v3856
        %v3858 = vrot.slane %v3850, %v3857
        %v3860 = vunpack.c.l.s4 1983009808
        %v3861 = vunpack.c.0.s8 %v3860
        %v3862 = vlaneseq
        %v3863 = vshrl.u32 %v3862, 7
        %v3864 = vsub.s32 %v3861, %v3863
        %v3865 = vrot.slane %v3851, %v3864
        %v3866 = vcombine.low %v3858, %v3865
        %v3867 = vcombine.high %v3858, %v3865
        %v3868 = vcombine.low %v2795, %v2803
        %v3869 = vcombine.low %v2802, %v2804
        %v3871 = vunpack.c.l.s4 1983009808
        %v3872 = vunpack.c.0.s8 %v3871
        %v3873 = vlaneseq
        %v3874 = vshrl.u32 %v3873, 7
        %v3875 = vsub.s32 %v3872, %v3874
        %v3876 = vrot.slane %v3868, %v3875
        %v3878 = vunpack.c.l.s4 1983009808
        %v3879 = vunpack.c.0.s8 %v3878
        %v3880 = vlaneseq
        %v3881 = vshrl.u32 %v3880, 7
        %v3882 = vsub.s32 %v3879, %v3881
        %v3883 = vrot.slane %v3869, %v3882
        %v3884 = vcombine.low %v3876, %v3883
        %v3885 = vcombine.high %v3876, %v3883
        %v3886 = vcombine.low %v2813, %v2821
        %v3887 = vcombine.low %v2820, %v2830
        %v3889 = vunpack.c.l.s4 1983009808
        %v3890 = vunpack.c.0.s8 %v3889
        %v3891 = vlaneseq
        %v3892 = vshrl.u32 %v3891, 7
        %v3893 = vsub.s32 %v3890, %v3892
        %v3894 = vrot.slane %v3886, %v3893
        %v3896 = vunpack.c.l.s4 1983009808
        %v3897 = vunpack.c.0.s8 %v3896
        %v3898 = vlaneseq
        %v3899 = vshrl.u32 %v3898, 7
        %v3900 = vsub.s32 %v3897, %v3899
        %v3901 = vrot.slane %v3887, %v3900
        %v3902 = vcombine.low %v3894, %v3901
        %v3903 = vcombine.high %v3894, %v3901
        %v3904 = vcombine.low %v2838, %v2837
        %v3905 = vcombine.low %v2839, %v2848
        %v3907 = vunpack.c.l.s4 1983009808
        %v3908 = vunpack.c.0.s8 %v3907
        %v3909 = vlaneseq
        %v3910 = vshrl.u32 %v3909, 7
        %v3911 = vsub.s32 %v3908, %v3910
        %v3912 = vrot.slane %v3904, %v3911
        %v3914 = vunpack.c.l.s4 1983009808
        %v3915 = vunpack.c.0.s8 %v3914
        %v3916 = vlaneseq
        %v3917 = vshrl.u32 %v3916, 7
        %v3918 = vsub.s32 %v3915, %v3917
        %v3919 = vrot.slane %v3905, %v3918
        %v3920 = vcombine.low %v3912, %v3919
        %v3921 = vcombine.high %v3912, %v3919
        %v3922 = vcombine.low %v2856, %v2855
        %v3923 = vcombine.low %v2865, %v2873
        %v3925 = vunpack.c.l.s4 1983009808
        %v3926 = vunpack.c.0.s8 %v3925
        %v3927 = vlaneseq
        %v3928 = vshrl.u32 %v3927, 7
        %v3929 = vsub.s32 %v3926, %v3928
        %v3930 = vrot.slane %v3922, %v3929
        %v3932 = vunpack.c.l.s4 1983009808
        %v3933 = vunpack.c.0.s8 %v3932
        %v3934 = vlaneseq
        %v3935 = vshrl.u32 %v3934, 7
        %v3936 = vsub.s32 %v3933, %v3935
        %v3937 = vrot.slane %v3923, %v3936
        %v3938 = vcombine.low %v3930, %v3937
        %v3939 = vcombine.high %v3930, %v3937
        %v3940 = vcombine.low %v2872, %v2874
        %v3941 = vcombine.low %v2883, %v2891
        %v3943 = vunpack.c.l.s4 1983009808
        %v3944 = vunpack.c.0.s8 %v3943
        %v3945 = vlaneseq
        %v3946 = vshrl.u32 %v3945, 7
        %v3947 = vsub.s32 %v3944, %v3946
        %v3948 = vrot.slane %v3940, %v3947
        %v3950 = vunpack.c.l.s4 1983009808
        %v3951 = vunpack.c.0.s8 %v3950
        %v3952 = vlaneseq
        %v3953 = vshrl.u32 %v3952, 7
        %v3954 = vsub.s32 %v3951, %v3953
        %v3955 = vrot.slane %v3941, %v3954
        %v3956 = vcombine.low %v3948, %v3955
        %v3957 = vcombine.high %v3948, %v3955
        %v3958 = vcombine.low %v2890, %v2900
        %v3959 = vcombine.low %v2908, %v2907
        %v3961 = vunpack.c.l.s4 1983009808
        %v3962 = vunpack.c.0.s8 %v3961
        %v3963 = vlaneseq
        %v3964 = vshrl.u32 %v3963, 7
        %v3965 = vsub.s32 %v3962, %v3964
        %v3966 = vrot.slane %v3958, %v3965
        %v3968 = vunpack.c.l.s4 1983009808
        %v3969 = vunpack.c.0.s8 %v3968
        %v3970 = vlaneseq
        %v3971 = vshrl.u32 %v3970, 7
        %v3972 = vsub.s32 %v3969, %v3971
        %v3973 = vrot.slane %v3959, %v3972
        %v3974 = vcombine.low %v3966, %v3973
        %v3975 = vcombine.high %v3966, %v3973
        %v3976 = vcombine.low %v2909, %v2918
        %v3977 = vcombine.low %v2926, %v2925
        %v3979 = vunpack.c.l.s4 1983009808
        %v3980 = vunpack.c.0.s8 %v3979
        %v3981 = vlaneseq
        %v3982 = vshrl.u32 %v3981, 7
        %v3983 = vsub.s32 %v3980, %v3982
        %v3984 = vrot.slane %v3976, %v3983
        %v3986 = vunpack.c.l.s4 1983009808
        %v3987 = vunpack.c.0.s8 %v3986
        %v3988 = vlaneseq
        %v3989 = vshrl.u32 %v3988, 7
        %v3990 = vsub.s32 %v3987, %v3989
        %v3991 = vrot.slane %v3977, %v3990
        %v3992 = vcombine.low %v3984, %v3991
        %v3993 = vcombine.high %v3984, %v3991
        %v3994 = vcombine.low %v2935, %v2943
        %v3995 = vcombine.low %v2942, %v2944
        %v3997 = vunpack.c.l.s4 1983009808
        %v3998 = vunpack.c.0.s8 %v3997
        %v3999 = vlaneseq
        %v4000 = vshrl.u32 %v3999, 7
        %v4001 = vsub.s32 %v3998, %v4000
        %v4002 = vrot.slane %v3994, %v4001
        %v4004 = vunpack.c.l.s4 1983009808
        %v4005 = vunpack.c.0.s8 %v4004
        %v4006 = vlaneseq
        %v4007 = vshrl.u32 %v4006, 7
        %v4008 = vsub.s32 %v4005, %v4007
        %v4009 = vrot.slane %v3995, %v4008
        %v4010 = vcombine.low %v4002, %v4009
        %v4011 = vcombine.high %v4002, %v4009
        %v4012 = vcombine.low %v2953, %v2961
        %v4013 = vcombine.low %v2960, %v2970
        %v4015 = vunpack.c.l.s4 1983009808
        %v4016 = vunpack.c.0.s8 %v4015
        %v4017 = vlaneseq
        %v4018 = vshrl.u32 %v4017, 7
        %v4019 = vsub.s32 %v4016, %v4018
        %v4020 = vrot.slane %v4012, %v4019
        %v4022 = vunpack.c.l.s4 1983009808
        %v4023 = vunpack.c.0.s8 %v4022
        %v4024 = vlaneseq
        %v4025 = vshrl.u32 %v4024, 7
        %v4026 = vsub.s32 %v4023, %v4025
        %v4027 = vrot.slane %v4013, %v4026
        %v4028 = vcombine.low %v4020, %v4027
        %v4029 = vcombine.high %v4020, %v4027
        %v4030 = vcombine.low %v2978, %v2977
        %v4031 = vcombine.low %v2979, %v2988
        %v4033 = vunpack.c.l.s4 1983009808
        %v4034 = vunpack.c.0.s8 %v4033
        %v4035 = vlaneseq
        %v4036 = vshrl.u32 %v4035, 7
        %v4037 = vsub.s32 %v4034, %v4036
        %v4038 = vrot.slane %v4030, %v4037
        %v4040 = vunpack.c.l.s4 1983009808
        %v4041 = vunpack.c.0.s8 %v4040
        %v4042 = vlaneseq
        %v4043 = vshrl.u32 %v4042, 7
        %v4044 = vsub.s32 %v4041, %v4043
        %v4045 = vrot.slane %v4031, %v4044
        %v4046 = vcombine.low %v4038, %v4045
        %v4047 = vcombine.high %v4038, %v4045
        %v4048 = vcombine.low %v2996, %v2995
        %v4049 = vcombine.low %v3005, %v3013
        %v4051 = vunpack.c.l.s4 1983009808
        %v4052 = vunpack.c.0.s8 %v4051
        %v4053 = vlaneseq
        %v4054 = vshrl.u32 %v4053, 7
        %v4055 = vsub.s32 %v4052, %v4054
        %v4056 = vrot.slane %v4048, %v4055
        %v4058 = vunpack.c.l.s4 1983009808
        %v4059 = vunpack.c.0.s8 %v4058
        %v4060 = vlaneseq
        %v4061 = vshrl.u32 %v4060, 7
        %v4062 = vsub.s32 %v4059, %v4061
        %v4063 = vrot.slane %v4049, %v4062
        %v4064 = vcombine.low %v4056, %v4063
        %v4065 = vcombine.high %v4056, %v4063
        %v4066 = vcombine.low %v3012, %v3014
        %v4067 = vcombine.low %v3023, %v3031
        %v4069 = vunpack.c.l.s4 1983009808
        %v4070 = vunpack.c.0.s8 %v4069
        %v4071 = vlaneseq
        %v4072 = vshrl.u32 %v4071, 7
        %v4073 = vsub.s32 %v4070, %v4072
        %v4074 = vrot.slane %v4066, %v4073
        %v4076 = vunpack.c.l.s4 1983009808
        %v4077 = vunpack.c.0.s8 %v4076
        %v4078 = vlaneseq
        %v4079 = vshrl.u32 %v4078, 7
        %v4080 = vsub.s32 %v4077, %v4079
        %v4081 = vrot.slane %v4067, %v4080
        %v4082 = vcombine.low %v4074, %v4081
        %v4083 = vcombine.high %v4074, %v4081
        %v4084 = vcombine.low %v3030, %v3040
        %v4085 = vcombine.low %v3048, %v3047
        %v4087 = vunpack.c.l.s4 1983009808
        %v4088 = vunpack.c.0.s8 %v4087
        %v4089 = vlaneseq
        %v4090 = vshrl.u32 %v4089, 7
        %v4091 = vsub.s32 %v4088, %v4090
        %v4092 = vrot.slane %v4084, %v4091
        %v4094 = vunpack.c.l.s4 1983009808
        %v4095 = vunpack.c.0.s8 %v4094
        %v4096 = vlaneseq
        %v4097 = vshrl.u32 %v4096, 7
        %v4098 = vsub.s32 %v4095, %v4097
        %v4099 = vrot.slane %v4085, %v4098
        %v4100 = vcombine.low %v4092, %v4099
        %v4101 = vcombine.high %v4092, %v4099
        %v4102 = vcombine.low %v3049, %v3058
        %v4103 = vcombine.low %v3066, %v3065
        %v4105 = vunpack.c.l.s4 1983009808
        %v4106 = vunpack.c.0.s8 %v4105
        %v4107 = vlaneseq
        %v4108 = vshrl.u32 %v4107, 7
        %v4109 = vsub.s32 %v4106, %v4108
        %v4110 = vrot.slane %v4102, %v4109
        %v4112 = vunpack.c.l.s4 1983009808
        %v4113 = vunpack.c.0.s8 %v4112
        %v4114 = vlaneseq
        %v4115 = vshrl.u32 %v4114, 7
        %v4116 = vsub.s32 %v4113, %v4115
        %v4117 = vrot.slane %v4103, %v4116
        %v4118 = vcombine.low %v4110, %v4117
        %v4119 = vcombine.high %v4110, %v4117
        %v4120 = vcombine.low %v3075, %v3083
        %v4121 = vcombine.low %v3082, %v3084
        %v4123 = vunpack.c.l.s4 1983009808
        %v4124 = vunpack.c.0.s8 %v4123
        %v4125 = vlaneseq
        %v4126 = vshrl.u32 %v4125, 7
        %v4127 = vsub.s32 %v4124, %v4126
        %v4128 = vrot.slane %v4120, %v4127
        %v4130 = vunpack.c.l.s4 1983009808
        %v4131 = vunpack.c.0.s8 %v4130
        %v4132 = vlaneseq
        %v4133 = vshrl.u32 %v4132, 7
        %v4134 = vsub.s32 %v4131, %v4133
        %v4135 = vrot.slane %v4121, %v4134
        %v4136 = vcombine.low %v4128, %v4135
        %v4137 = vcombine.high %v4128, %v4135
        %v4138 = vcombine.low %v3093, %v3101
        %v4139 = vcombine.low %v3100, %v3110
        %v4141 = vunpack.c.l.s4 1983009808
        %v4142 = vunpack.c.0.s8 %v4141
        %v4143 = vlaneseq
        %v4144 = vshrl.u32 %v4143, 7
        %v4145 = vsub.s32 %v4142, %v4144
        %v4146 = vrot.slane %v4138, %v4145
        %v4148 = vunpack.c.l.s4 1983009808
        %v4149 = vunpack.c.0.s8 %v4148
        %v4150 = vlaneseq
        %v4151 = vshrl.u32 %v4150, 7
        %v4152 = vsub.s32 %v4149, %v4151
        %v4153 = vrot.slane %v4139, %v4152
        %v4154 = vcombine.low %v4146, %v4153
        %v4155 = vcombine.high %v4146, %v4153
        %v4156 = vcombine.low %v3118, %v3117
        %v4157 = vcombine.low %v3119, %v3128
        %v4159 = vunpack.c.l.s4 1983009808
        %v4160 = vunpack.c.0.s8 %v4159
        %v4161 = vlaneseq
        %v4162 = vshrl.u32 %v4161, 7
        %v4163 = vsub.s32 %v4160, %v4162
        %v4164 = vrot.slane %v4156, %v4163
        %v4166 = vunpack.c.l.s4 1983009808
        %v4167 = vunpack.c.0.s8 %v4166
        %v4168 = vlaneseq
        %v4169 = vshrl.u32 %v4168, 7
        %v4170 = vsub.s32 %v4167, %v4169
        %v4171 = vrot.slane %v4157, %v4170
        %v4172 = vcombine.low %v4164, %v4171
        %v4173 = vcombine.high %v4164, %v4171
        %v4174 = vcombine.low %v3136, %v3135
        %v4175 = vcombine.low %v3145, %v3153
        %v4177 = vunpack.c.l.s4 1983009808
        %v4178 = vunpack.c.0.s8 %v4177
        %v4179 = vlaneseq
        %v4180 = vshrl.u32 %v4179, 7
        %v4181 = vsub.s32 %v4178, %v4180
        %v4182 = vrot.slane %v4174, %v4181
        %v4184 = vunpack.c.l.s4 1983009808
        %v4185 = vunpack.c.0.s8 %v4184
        %v4186 = vlaneseq
        %v4187 = vshrl.u32 %v4186, 7
        %v4188 = vsub.s32 %v4185, %v4187
        %v4189 = vrot.slane %v4175, %v4188
        %v4190 = vcombine.low %v4182, %v4189
        %v4191 = vcombine.high %v4182, %v4189
        %v4192 = vcombine.low %v3152, %v3154
        %v4193 = vcombine.low %v3163, %v3171
        %v4195 = vunpack.c.l.s4 1983009808
        %v4196 = vunpack.c.0.s8 %v4195
        %v4197 = vlaneseq
        %v4198 = vshrl.u32 %v4197, 7
        %v4199 = vsub.s32 %v4196, %v4198
        %v4200 = vrot.slane %v4192, %v4199
        %v4202 = vunpack.c.l.s4 1983009808
        %v4203 = vunpack.c.0.s8 %v4202
        %v4204 = vlaneseq
        %v4205 = vshrl.u32 %v4204, 7
        %v4206 = vsub.s32 %v4203, %v4205
        %v4207 = vrot.slane %v4193, %v4206
        %v4208 = vcombine.low %v4200, %v4207
        %v4209 = vcombine.high %v4200, %v4207
        %v4210 = vcombine.low %v3170, %v3180
        %v4211 = vcombine.low %v3188, %v3187
        %v4213 = vunpack.c.l.s4 1983009808
        %v4214 = vunpack.c.0.s8 %v4213
        %v4215 = vlaneseq
        %v4216 = vshrl.u32 %v4215, 7
        %v4217 = vsub.s32 %v4214, %v4216
        %v4218 = vrot.slane %v4210, %v4217
        %v4220 = vunpack.c.l.s4 1983009808
        %v4221 = vunpack.c.0.s8 %v4220
        %v4222 = vlaneseq
        %v4223 = vshrl.u32 %v4222, 7
        %v4224 = vsub.s32 %v4221, %v4223
        %v4225 = vrot.slane %v4211, %v4224
        %v4226 = vcombine.low %v4218, %v4225
        %v4227 = vcombine.high %v4218, %v4225
        %v4228 = vcombine.low %v3189, %v3198
        %v4229 = vcombine.low %v3206, %v3205
        %v4231 = vunpack.c.l.s4 1983009808
        %v4232 = vunpack.c.0.s8 %v4231
        %v4233 = vlaneseq
        %v4234 = vshrl.u32 %v4233, 7
        %v4235 = vsub.s32 %v4232, %v4234
        %v4236 = vrot.slane %v4228, %v4235
        %v4238 = vunpack.c.l.s4 1983009808
        %v4239 = vunpack.c.0.s8 %v4238
        %v4240 = vlaneseq
        %v4241 = vshrl.u32 %v4240, 7
        %v4242 = vsub.s32 %v4239, %v4241
        %v4243 = vrot.slane %v4229, %v4242
        %v4244 = vcombine.low %v4236, %v4243
        %v4245 = vcombine.high %v4236, %v4243
        %v4246 = vcombine.low %v3215, %v3223
        %v4247 = vcombine.low %v3222, %v3224
        %v4249 = vunpack.c.l.s4 1983009808
        %v4250 = vunpack.c.0.s8 %v4249
        %v4251 = vlaneseq
        %v4252 = vshrl.u32 %v4251, 7
        %v4253 = vsub.s32 %v4250, %v4252
        %v4254 = vrot.slane %v4246, %v4253
        %v4256 = vunpack.c.l.s4 1983009808
        %v4257 = vunpack.c.0.s8 %v4256
        %v4258 = vlaneseq
        %v4259 = vshrl.u32 %v4258, 7
        %v4260 = vsub.s32 %v4257, %v4259
        %v4261 = vrot.slane %v4247, %v4260
        %v4262 = vcombine.low %v4254, %v4261
        %v4263 = vcombine.high %v4254, %v4261
        %v4264 = vcombine.low %v3233, %v3241
        %v4265 = vcombine.low %v3240, %v3250
        %v4267 = vunpack.c.l.s4 1983009808
        %v4268 = vunpack.c.0.s8 %v4267
        %v4269 = vlaneseq
        %v4270 = vshrl.u32 %v4269, 7
        %v4271 = vsub.s32 %v4268, %v4270
        %v4272 = vrot.slane %v4264, %v4271
        %v4274 = vunpack.c.l.s4 1983009808
        %v4275 = vunpack.c.0.s8 %v4274
        %v4276 = vlaneseq
        %v4277 = vshrl.u32 %v4276, 7
        %v4278 = vsub.s32 %v4275, %v4277
        %v4279 = vrot.slane %v4265, %v4278
        %v4280 = vcombine.low %v4272, %v4279
        %v4281 = vcombine.high %v4272, %v4279
        %v4282 = vcombine.low %v3258, %v3257
        %v4283 = vcombine.low %v3259, %v3268
        %v4285 = vunpack.c.l.s4 1983009808
        %v4286 = vunpack.c.0.s8 %v4285
        %v4287 = vlaneseq
        %v4288 = vshrl.u32 %v4287, 7
        %v4289 = vsub.s32 %v4286, %v4288
        %v4290 = vrot.slane %v4282, %v4289
        %v4292 = vunpack.c.l.s4 1983009808
        %v4293 = vunpack.c.0.s8 %v4292
        %v4294 = vlaneseq
        %v4295 = vshrl.u32 %v4294, 7
        %v4296 = vsub.s32 %v4293, %v4295
        %v4297 = vrot.slane %v4283, %v4296
        %v4298 = vcombine.low %v4290, %v4297
        %v4299 = vcombine.high %v4290, %v4297
        %v4300 = vcombine.low %v3276, %v3275
        %v4301 = vcombine.low %v3285, %v3293
        %v4303 = vunpack.c.l.s4 1983009808
        %v4304 = vunpack.c.0.s8 %v4303
        %v4305 = vlaneseq
        %v4306 = vshrl.u32 %v4305, 7
        %v4307 = vsub.s32 %v4304, %v4306
        %v4308 = vrot.slane %v4300, %v4307
        %v4310 = vunpack.c.l.s4 1983009808
        %v4311 = vunpack.c.0.s8 %v4310
        %v4312 = vlaneseq
        %v4313 = vshrl.u32 %v4312, 7
        %v4314 = vsub.s32 %v4311, %v4313
        %v4315 = vrot.slane %v4301, %v4314
        %v4316 = vcombine.low %v4308, %v4315
        %v4317 = vcombine.high %v4308, %v4315
        %v4318 = vcombine.low %v3292, %v3294
        %v4319 = vcombine.low %v3303, %v3311
        %v4321 = vunpack.c.l.s4 1983009808
        %v4322 = vunpack.c.0.s8 %v4321
        %v4323 = vlaneseq
        %v4324 = vshrl.u32 %v4323, 7
        %v4325 = vsub.s32 %v4322, %v4324
        %v4326 = vrot.slane %v4318, %v4325
        %v4328 = vunpack.c.l.s4 1983009808
        %v4329 = vunpack.c.0.s8 %v4328
        %v4330 = vlaneseq
        %v4331 = vshrl.u32 %v4330, 7
        %v4332 = vsub.s32 %v4329, %v4331
        %v4333 = vrot.slane %v4319, %v4332
        %v4334 = vcombine.low %v4326, %v4333
        %v4335 = vcombine.high %v4326, %v4333
        %v4336 = vcombine.low %v3310, %v3320
        %v4337 = vcombine.low %v3328, %v3327
        %v4339 = vunpack.c.l.s4 1983009808
        %v4340 = vunpack.c.0.s8 %v4339
        %v4341 = vlaneseq
        %v4342 = vshrl.u32 %v4341, 7
        %v4343 = vsub.s32 %v4340, %v4342
        %v4344 = vrot.slane %v4336, %v4343
        %v4346 = vunpack.c.l.s4 1983009808
        %v4347 = vunpack.c.0.s8 %v4346
        %v4348 = vlaneseq
        %v4349 = vshrl.u32 %v4348, 7
        %v4350 = vsub.s32 %v4347, %v4349
        %v4351 = vrot.slane %v4337, %v4350
        %v4352 = vcombine.low %v4344, %v4351
        %v4353 = vcombine.high %v4344, %v4351
        %v4354 = vcombine.low %v3329, %v3338
        %v4355 = vcombine.low %v3346, %v3345
        %v4357 = vunpack.c.l.s4 1983009808
        %v4358 = vunpack.c.0.s8 %v4357
        %v4359 = vlaneseq
        %v4360 = vshrl.u32 %v4359, 7
        %v4361 = vsub.s32 %v4358, %v4360
        %v4362 = vrot.slane %v4354, %v4361
        %v4364 = vunpack.c.l.s4 1983009808
        %v4365 = vunpack.c.0.s8 %v4364
        %v4366 = vlaneseq
        %v4367 = vshrl.u32 %v4366, 7
        %v4368 = vsub.s32 %v4365, %v4367
        %v4369 = vrot.slane %v4355, %v4368
        %v4370 = vcombine.low %v4362, %v4369
        %v4371 = vcombine.high %v4362, %v4369
        %v4428 = vcombine.low %v3354, %v3362
        %v4429 = vcombine.low %v3361, %v3363
        %v4431 = vunpack.c.l.s4 1983009808
        %v4432 = vunpack.c.0.s8 %v4431
        %v4433 = vlaneseq
        %v4434 = vshrl.u32 %v4433, 7
        %v4435 = vsub.s32 %v4432, %v4434
        %v4436 = vrot.slane %v4428, %v4435
        %v4438 = vunpack.c.l.s4 1983009808
        %v4439 = vunpack.c.0.s8 %v4438
        %v4440 = vlaneseq
        %v4441 = vshrl.u32 %v4440, 7
        %v4442 = vsub.s32 %v4439, %v4441
        %v4443 = vrot.slane %v4429, %v4442
        %v4444 = vcombine.low %v4436, %v4443
        %v4445 = vcombine.low %v3361, %v3354
        %v4447 = vunpack.c.l.s4 1983009808
        %v4448 = vunpack.c.0.s8 %v4447
        %v4449 = vlaneseq
        %v4450 = vshrl.u32 %v4449, 7
        %v4451 = vsub.s32 %v4448, %v4450
        %v4452 = vrot.slane %v4445, %v4451
        %v4453 = vcombine.low %v4436, %v4452
        %v4454 = vcombine.low %v3362, %v3361
        %v4455 = vcombine.low %v3363, %v3354
        %v4457 = vunpack.c.l.s4 1983009808
        %v4458 = vunpack.c.0.s8 %v4457
        %v4459 = vlaneseq
        %v4460 = vshrl.u32 %v4459, 7
        %v4461 = vsub.s32 %v4458, %v4460
        %v4462 = vrot.slane %v4454, %v4461
        %v4464 = vunpack.c.l.s4 1983009808
        %v4465 = vunpack.c.0.s8 %v4464
        %v4466 = vlaneseq
        %v4467 = vshrl.u32 %v4466, 7
        %v4468 = vsub.s32 %v4465, %v4467
        %v4469 = vrot.slane %v4455, %v4468
        %v4470 = vcombine.low %v4462, %v4469
        %v4471 = vcombine.low %v4462, %v4436
        %v4472 = vcombine.low %v4443, %v4436
        %v4473 = vcombine.low %v4452, %v4462
        %v4474 = vcombine.low %v4469, %v4462
        %vm4482 = vcmask 998400
        %v4483 = vsel %vm4482, %v3381, 0
        %v4485 = vsel %vm4482, %v3399, 0
        %v4487 = vsel %vm4482, %v3417, 0
        %v4489 = vsel %vm4482, %v3435, 0
        %v4491 = vsel %vm4482, %v3453, 0
        %v4493 = vsel %vm4482, %v3471, 0
        %v4495 = vsel %vm4482, %v3489, 0
        %v4497 = vsel %vm4482, %v3507, 0
        %v4499 = vsel %vm4482, %v3525, 0
        %v4501 = vsel %vm4482, %v3543, 0
        %v4503 = vsel %vm4482, %v3561, 0
        %v4505 = vsel %vm4482, %v3579, 0
        %v4507 = vsel %vm4482, %v3597, 0
        %v4509 = vsel %vm4482, %v3615, 0
        %v4511 = vsel %vm4482, %v3633, 0
        %v4513 = vsel %vm4482, %v3651, 0
        %v4515 = vsel %vm4482, %v3669, 0
        %v4517 = vsel %vm4482, %v3687, 0
        %v4519 = vsel %vm4482, %v3705, 0
        %v4521 = vsel %vm4482, %v3723, 0
        %v4523 = vsel %vm4482, %v3741, 0
        %v4525 = vsel %vm4482, %v3759, 0
        %v4527 = vsel %vm4482, %v3777, 0
        %v4529 = vsel %vm4482, %v3795, 0
        %v4531 = vsel %vm4482, %v3813, 0
        %v4533 = vsel %vm4482, %v3831, 0
        %v4535 = vsel %vm4482, %v3849, 0
        %v4537 = vsel %vm4482, %v3867, 0
        %v4539 = vsel %vm4482, %v3885, 0
        %v4541 = vsel %vm4482, %v3903, 0
        %v4543 = vsel %vm4482, %v3921, 0
        %v4545 = vsel %vm4482, %v3939, 0
        %v4547 = vsel %vm4482, %v3957, 0
        %v4549 = vsel %vm4482, %v3975, 0
        %v4551 = vsel %vm4482, %v3993, 0
        %v4553 = vsel %vm4482, %v4011, 0
        %v4555 = vsel %vm4482, %v4029, 0
        %v4557 = vsel %vm4482, %v4047, 0
        %v4559 = vsel %vm4482, %v4065, 0
        %v4561 = vsel %vm4482, %v4083, 0
        %v4563 = vsel %vm4482, %v4101, 0
        %v4565 = vsel %vm4482, %v4119, 0
        %v4567 = vsel %vm4482, %v4137, 0
        %v4569 = vsel %vm4482, %v4155, 0
        %v4571 = vsel %vm4482, %v4173, 0
        %v4573 = vsel %vm4482, %v4191, 0
        %v4575 = vsel %vm4482, %v4209, 0
        %v4577 = vsel %vm4482, %v4227, 0
        %v4579 = vsel %vm4482, %v4245, 0
        %v4581 = vsel %vm4482, %v4263, 0
        %v4583 = vsel %vm4482, %v4281, 0
        %v4585 = vsel %vm4482, %v4299, 0
        %v4587 = vsel %vm4482, %v4317, 0
        %v4589 = vsel %vm4482, %v4335, 0
        %v4591 = vsel %vm4482, %v4353, 0
        %v4593 = vsel %vm4482, %v4371, 0
        %vm4595 = vcmask 1041408
        %v4597 = vsel %vm4595, %v2092, 0
        %4599 = vmatprep.subr.mxu0 0.0
        %4600 = vmatpush1.msra.mxu0 %v2076
        %4601 = vmatprep.subr.mxu0 0.0
        %4602 = vmatpush1.msra.mxu0 %v2075
        %4603 = vmatprep.subr.mxu0 0.0
        %4604 = vmatpush1.msra.mxu0 %v2074
        %4605 = vmatprep.subr.mxu0 0.0
        %4606 = vmatpush1.msra.mxu0 %v2073
        %4607 = vmatprep.subr.mxu0 0.0
        %4608 = vmatpush1.msra.mxu0 %v2072
        %4609 = vmatprep.subr.mxu0 0.0
        %4610 = vmatpush1.msra.mxu0 %v2071
        %4611 = vmatprep.subr.mxu0 0.0
        %4612 = vmatpush1.msra.mxu0 %v2070
        %4613 = vmatprep.subr.mxu0 0.0
        %4614 = vmatpush1.msra.mxu0 %v2069
        %4615 = vmatprep.subr.mxu0 0.0
        %4616 = vmatpush1.msra.mxu0 %v2068
        %4617 = vmatprep.subr.mxu0 0.0
        %4618 = vmatpush1.msra.mxu0 %v2067
        %4619 = vmatprep.subr.mxu0 0.0
        %4620 = vmatpush1.msra.mxu0 %v2066
        %4621 = vmatprep.subr.mxu0 0.0
        %4622 = vmatpush1.msra.mxu0 %v2065
        %4623 = vmatprep.subr.mxu0 0.0
        %4624 = vmatpush1.msra.mxu0 %v2064
        %4625 = vmatprep.subr.mxu0 0.0
        %4626 = vmatpush1.msra.mxu0 %v2063
        %4627 = vmatprep.subr.mxu0 0.0
        %4628 = vmatpush1.msra.mxu0 %v2062
        %4629 = vmatprep.subr.mxu0 0.0
        %4630 = vmatpush1.msra.mxu0 %v2061
        %4631 = vmatprep.subr.mxu0 0.0
        %4632 = vmatpush2.msra.mxu0 %v4597
        %4633 = vmatprep.subr.mxu0 0.0
        %4634 = vmatpush2.msra.mxu0 %v2091
        %4635 = vmatprep.subr.mxu0 0.0
        %4636 = vmatpush2.msra.mxu0 %v2090
        %4637 = vmatprep.subr.mxu0 0.0
        %4638 = vmatpush2.msra.mxu0 %v2089
        %4639 = vmatprep.subr.mxu0 0.0
        %4640 = vmatpush2.msra.mxu0 %v2088
        %4641 = vmatprep.subr.mxu0 0.0
        %4642 = vmatpush2.msra.mxu0 %v2087
        %4643 = vmatprep.subr.mxu0 0.0
        %4644 = vmatpush2.msra.mxu0 %v2086
        %4645 = vmatprep.subr.mxu0 0.0
        %4646 = vmatpush2.msra.mxu0 %v2085
        %4647 = vmatprep.subr.mxu0 0.0
        %4648 = vmatpush2.msra.mxu0 %v2084
        %4649 = vmatprep.subr.mxu0 0.0
        %4650 = vmatpush2.msra.mxu0 %v2083
        %4651 = vmatprep.subr.mxu0 0.0
        %4652 = vmatpush2.msra.mxu0 %v2082
        %4653 = vmatprep.subr.mxu0 0.0
        %4654 = vmatpush2.msra.mxu0 %v2081
        %4655 = vmatprep.subr.mxu0 0.0
        %4656 = vmatpush2.msra.mxu0 %v2080
        %4657 = vmatprep.subr.mxu0 0.0
        %4658 = vmatpush2.msra.mxu0 %v2079
        %4659 = vmatprep.subr.mxu0 0.0
        %4660 = vmatpush2.msra.mxu0 %v2078
        %4661 = vmatprep.subr.mxu0 0.0
        %4662 = vmatpush2.msra.mxu0 %v2077
        %4663 = vmatprep.mubr.f32.mxu0 %v4483
        %4664 = vmatmul.mubr.f32.gmra.mxu0 %v3380
        %v4665 = vpop.f32.mrf.mxu0
        %v4666 = vadd.f32 %v4444, %v4665
        %v4667 = vpop.f32.mrf.mxu0
        %4668 = vmatprep.mubr.f32.mxu0 %v4485
        %4669 = vmatmul.mubr.f32.gmra.mxu0 %v3398
        %v4670 = vpop.f32.mrf.mxu0
        %v4671 = vadd.f32 %v4453, %v4670
        %v4672 = vpop.f32.mrf.mxu0
        %4673 = vmatprep.mubr.f32.mxu0 %v4487
        %4674 = vmatmul.mubr.f32.gmra.mxu0 %v3416
        %v4675 = vpop.f32.mrf.mxu0
        %v4676 = vadd.f32 %v4470, %v4675
        %v4677 = vpop.f32.mrf.mxu0
        %4678 = vmatprep.mubr.f32.mxu0 %v4489
        %4679 = vmatmul.mubr.f32.gmra.mxu0 %v3434
        %v4680 = vpop.f32.mrf.mxu0
        %v4681 = vadd.f32 %v4471, %v4680
        %v4682 = vpop.f32.mrf.mxu0
        %4683 = vmatprep.mubr.f32.mxu0 %v4491
        %4684 = vmatmul.mubr.f32.gmra.mxu0 %v3452
        %v4685 = vpop.f32.mrf.mxu0
        %v4686 = vadd.f32 %v4472, %v4685
        %v4687 = vpop.f32.mrf.mxu0
        %4688 = vmatprep.mubr.f32.mxu0 %v4493
        %4689 = vmatmul.mubr.f32.gmra.mxu0 %v3470
        %v4690 = vpop.f32.mrf.mxu0
        %v4691 = vadd.f32 %v4473, %v4690
        %v4692 = vpop.f32.mrf.mxu0
        %4693 = vmatprep.mubr.f32.mxu0 %v4495
        %4694 = vmatmul.mubr.f32.gmra.mxu0 %v3488
        %v4695 = vpop.f32.mrf.mxu0
        %v4696 = vadd.f32 %v4474, %v4695
        %v4697 = vpop.f32.mrf.mxu0
        %4698 = vmatprep.mubr.f32.mxu0 %v4497
        %4699 = vmatmul.mubr.f32.gmra.mxu0 %v3506
        %v4700 = vpop.f32.mrf.mxu0
        %v4701 = vadd.f32 %v4444, %v4700
        %v4702 = vpop.f32.mrf.mxu0
        %4703 = vmatprep.mubr.f32.mxu0 %v4499
        %4704 = vmatmul.mubr.f32.gmra.mxu0 %v3524
        %v4705 = vpop.f32.mrf.mxu0
        %v4706 = vadd.f32 %v4453, %v4705
        %v4707 = vpop.f32.mrf.mxu0
        %4708 = vmatprep.mubr.f32.mxu0 %v4501
        %4709 = vmatmul.mubr.f32.gmra.mxu0 %v3542
        %v4710 = vpop.f32.mrf.mxu0
        %v4711 = vadd.f32 %v4470, %v4710
        %v4712 = vpop.f32.mrf.mxu0
        %4713 = vmatprep.mubr.f32.mxu0 %v4503
        %4714 = vmatmul.mubr.f32.gmra.mxu0 %v3560
        %v4715 = vpop.f32.mrf.mxu0
        %v4716 = vadd.f32 %v4471, %v4715
        %v4717 = vpop.f32.mrf.mxu0
        %4718 = vmatprep.mubr.f32.mxu0 %v4505
        %4719 = vmatmul.mubr.f32.gmra.mxu0 %v3578
        %v4720 = vpop.f32.mrf.mxu0
        %v4721 = vadd.f32 %v4472, %v4720
        %v4722 = vpop.f32.mrf.mxu0
        %4723 = vmatprep.mubr.f32.mxu0 %v4507
        %4724 = vmatmul.mubr.f32.gmra.mxu0 %v3596
        %v4725 = vpop.f32.mrf.mxu0
        %v4726 = vadd.f32 %v4473, %v4725
        %v4727 = vpop.f32.mrf.mxu0
        %4728 = vmatprep.mubr.f32.mxu0 %v4509
        %4729 = vmatmul.mubr.f32.gmra.mxu0 %v3614
        %v4730 = vpop.f32.mrf.mxu0
        %v4731 = vadd.f32 %v4474, %v4730
        %v4732 = vpop.f32.mrf.mxu0
        %4733 = vmatprep.mubr.f32.mxu0 %v4511
        %4734 = vmatmul.mubr.f32.gmra.mxu0 %v3632
        %v4735 = vpop.f32.mrf.mxu0
        %v4736 = vadd.f32 %v4444, %v4735
        %v4737 = vpop.f32.mrf.mxu0
        %4738 = vmatprep.mubr.f32.mxu0 %v4513
        %4739 = vmatmul.mubr.f32.gmra.mxu0 %v3650
        %v4740 = vpop.f32.mrf.mxu0
        %v4741 = vadd.f32 %v4453, %v4740
        %v4742 = vpop.f32.mrf.mxu0
        %4743 = vmatprep.mubr.f32.mxu0 %v4515
        %4744 = vmatmul.mubr.f32.gmra.mxu0 %v3668
        %v4745 = vpop.f32.mrf.mxu0
        %v4746 = vadd.f32 %v4470, %v4745
        %v4747 = vpop.f32.mrf.mxu0
        %4748 = vmatprep.mubr.f32.mxu0 %v4517
        %4749 = vmatmul.mubr.f32.gmra.mxu0 %v3686
        %v4750 = vpop.f32.mrf.mxu0
        %v4751 = vadd.f32 %v4471, %v4750
        %v4752 = vpop.f32.mrf.mxu0
        %4753 = vmatprep.mubr.f32.mxu0 %v4519
        %4754 = vmatmul.mubr.f32.gmra.mxu0 %v3704
        %v4755 = vpop.f32.mrf.mxu0
        %v4756 = vadd.f32 %v4472, %v4755
        %v4757 = vpop.f32.mrf.mxu0
        %4758 = vmatprep.mubr.f32.mxu0 %v4521
        %4759 = vmatmul.mubr.f32.gmra.mxu0 %v3722
        %v4760 = vpop.f32.mrf.mxu0
        %v4761 = vadd.f32 %v4473, %v4760
        %v4762 = vpop.f32.mrf.mxu0
        %4763 = vmatprep.mubr.f32.mxu0 %v4523
        %4764 = vmatmul.mubr.f32.gmra.mxu0 %v3740
        %v4765 = vpop.f32.mrf.mxu0
        %v4766 = vadd.f32 %v4474, %v4765
        %v4767 = vpop.f32.mrf.mxu0
        %4768 = vmatprep.mubr.f32.mxu0 %v4525
        %4769 = vmatmul.mubr.f32.gmra.mxu0 %v3758
        %v4770 = vpop.f32.mrf.mxu0
        %v4771 = vadd.f32 %v4444, %v4770
        %v4772 = vpop.f32.mrf.mxu0
        %4773 = vmatprep.mubr.f32.mxu0 %v4527
        %4774 = vmatmul.mubr.f32.gmra.mxu0 %v3776
        %v4775 = vpop.f32.mrf.mxu0
        %v4776 = vadd.f32 %v4453, %v4775
        %v4777 = vpop.f32.mrf.mxu0
        %4778 = vmatprep.mubr.f32.mxu0 %v4529
        %4779 = vmatmul.mubr.f32.gmra.mxu0 %v3794
        %v4780 = vpop.f32.mrf.mxu0
        %v4781 = vadd.f32 %v4470, %v4780
        %v4782 = vpop.f32.mrf.mxu0
        %4783 = vmatprep.mubr.f32.mxu0 %v4531
        %4784 = vmatmul.mubr.f32.gmra.mxu0 %v3812
        %v4785 = vpop.f32.mrf.mxu0
        %v4786 = vadd.f32 %v4471, %v4785
        %v4787 = vpop.f32.mrf.mxu0
        %4788 = vmatprep.mubr.f32.mxu0 %v4533
        %4789 = vmatmul.mubr.f32.gmra.mxu0 %v3830
        %v4790 = vpop.f32.mrf.mxu0
        %v4791 = vadd.f32 %v4472, %v4790
        %v4792 = vpop.f32.mrf.mxu0
        %4793 = vmatprep.mubr.f32.mxu0 %v4535
        %4794 = vmatmul.mubr.f32.gmra.mxu0 %v3848
        %v4795 = vpop.f32.mrf.mxu0
        %v4796 = vadd.f32 %v4473, %v4795
        %v4797 = vpop.f32.mrf.mxu0
        %4798 = vmatprep.mubr.f32.mxu0 %v4537
        %4799 = vmatmul.mubr.f32.gmra.mxu0 %v3866
        %v4800 = vpop.f32.mrf.mxu0
        %v4801 = vadd.f32 %v4474, %v4800
        %v4802 = vpop.f32.mrf.mxu0
        %4803 = vmatprep.mubr.f32.mxu0 %v4539
        %4804 = vmatmul.mubr.f32.gmra.mxu0 %v3884
        %v4805 = vpop.f32.mrf.mxu0
        %v4806 = vadd.f32 %v4444, %v4805
        %v4807 = vpop.f32.mrf.mxu0
        %4808 = vmatprep.mubr.f32.mxu0 %v4541
        %4809 = vmatmul.mubr.f32.gmra.mxu0 %v3902
        %v4810 = vpop.f32.mrf.mxu0
        %v4811 = vadd.f32 %v4453, %v4810
        %v4812 = vpop.f32.mrf.mxu0
        %4813 = vmatprep.mubr.f32.mxu0 %v4543
        %4814 = vmatmul.mubr.f32.gmra.mxu0 %v3920
        %v4815 = vpop.f32.mrf.mxu0
        %v4816 = vadd.f32 %v4470, %v4815
        %v4817 = vpop.f32.mrf.mxu0
        %4818 = vmatprep.mubr.f32.mxu0 %v4545
        %4819 = vmatmul.mubr.f32.gmra.mxu0 %v3938
        %v4820 = vpop.f32.mrf.mxu0
        %v4821 = vadd.f32 %v4471, %v4820
        %v4822 = vpop.f32.mrf.mxu0
        %4823 = vmatprep.mubr.f32.mxu0 %v4547
        %4824 = vmatmul.mubr.f32.gmra.mxu0 %v3956
        %v4825 = vpop.f32.mrf.mxu0
        %v4826 = vadd.f32 %v4472, %v4825
        %v4827 = vpop.f32.mrf.mxu0
        %4828 = vmatprep.mubr.f32.mxu0 %v4549
        %4829 = vmatmul.mubr.f32.gmra.mxu0 %v3974
        %v4830 = vpop.f32.mrf.mxu0
        %v4831 = vadd.f32 %v4473, %v4830
        %v4832 = vpop.f32.mrf.mxu0
        %4833 = vmatprep.mubr.f32.mxu0 %v4551
        %4834 = vmatmul.mubr.f32.gmra.mxu0 %v3992
        %v4835 = vpop.f32.mrf.mxu0
        %v4836 = vadd.f32 %v4474, %v4835
        %v4837 = vpop.f32.mrf.mxu0
        %4838 = vmatprep.mubr.f32.mxu0 %v4553
        %4839 = vmatmul.mubr.f32.gmra.mxu0 %v4010
        %v4840 = vpop.f32.mrf.mxu0
        %v4841 = vadd.f32 %v4444, %v4840
        %v4842 = vpop.f32.mrf.mxu0
        %4843 = vmatprep.mubr.f32.mxu0 %v4555
        %4844 = vmatmul.mubr.f32.gmra.mxu0 %v4028
        %v4845 = vpop.f32.mrf.mxu0
        %v4846 = vadd.f32 %v4453, %v4845
        %v4847 = vpop.f32.mrf.mxu0
        %4848 = vmatprep.mubr.f32.mxu0 %v4557
        %4849 = vmatmul.mubr.f32.gmra.mxu0 %v4046
        %v4850 = vpop.f32.mrf.mxu0
        %v4851 = vadd.f32 %v4470, %v4850
        %v4852 = vpop.f32.mrf.mxu0
        %4853 = vmatprep.mubr.f32.mxu0 %v4559
        %4854 = vmatmul.mubr.f32.gmra.mxu0 %v4064
        %v4855 = vpop.f32.mrf.mxu0
        %v4856 = vadd.f32 %v4471, %v4855
        %v4857 = vpop.f32.mrf.mxu0
        %4858 = vmatprep.mubr.f32.mxu0 %v4561
        %4859 = vmatmul.mubr.f32.gmra.mxu0 %v4082
        %v4860 = vpop.f32.mrf.mxu0
        %v4861 = vadd.f32 %v4472, %v4860
        %v4862 = vpop.f32.mrf.mxu0
        %4863 = vmatprep.mubr.f32.mxu0 %v4563
        %4864 = vmatmul.mubr.f32.gmra.mxu0 %v4100
        %v4865 = vpop.f32.mrf.mxu0
        %v4866 = vadd.f32 %v4473, %v4865
        %v4867 = vpop.f32.mrf.mxu0
        %4868 = vmatprep.mubr.f32.mxu0 %v4565
        %4869 = vmatmul.mubr.f32.gmra.mxu0 %v4118
        %v4870 = vpop.f32.mrf.mxu0
        %v4871 = vadd.f32 %v4474, %v4870
        %v4872 = vpop.f32.mrf.mxu0
        %4873 = vmatprep.mubr.f32.mxu0 %v4567
        %4874 = vmatmul.mubr.f32.gmra.mxu0 %v4136
        %v4875 = vpop.f32.mrf.mxu0
        %v4876 = vadd.f32 %v4444, %v4875
        %v4877 = vpop.f32.mrf.mxu0
        %4878 = vmatprep.mubr.f32.mxu0 %v4569
        %4879 = vmatmul.mubr.f32.gmra.mxu0 %v4154
        %v4880 = vpop.f32.mrf.mxu0
        %v4881 = vadd.f32 %v4453, %v4880
        %v4882 = vpop.f32.mrf.mxu0
        %4883 = vmatprep.mubr.f32.mxu0 %v4571
        %4884 = vmatmul.mubr.f32.gmra.mxu0 %v4172
        %v4885 = vpop.f32.mrf.mxu0
        %v4886 = vadd.f32 %v4470, %v4885
        %v4887 = vpop.f32.mrf.mxu0
        %4888 = vmatprep.mubr.f32.mxu0 %v4573
        %4889 = vmatmul.mubr.f32.gmra.mxu0 %v4190
        %v4890 = vpop.f32.mrf.mxu0
        %v4891 = vadd.f32 %v4471, %v4890
        %v4892 = vpop.f32.mrf.mxu0
        %4893 = vmatprep.mubr.f32.mxu0 %v4575
        %4894 = vmatmul.mubr.f32.gmra.mxu0 %v4208
        %v4895 = vpop.f32.mrf.mxu0
        %v4896 = vadd.f32 %v4472, %v4895
        %v4897 = vpop.f32.mrf.mxu0
        %4898 = vmatprep.mubr.f32.mxu0 %v4577
        %4899 = vmatmul.mubr.f32.gmra.mxu0 %v4226
        %v4900 = vpop.f32.mrf.mxu0
        %v4901 = vadd.f32 %v4473, %v4900
        %v4902 = vpop.f32.mrf.mxu0
        %4903 = vmatprep.mubr.f32.mxu0 %v4579
        %4904 = vmatmul.mubr.f32.gmra.mxu0 %v4244
        %v4905 = vpop.f32.mrf.mxu0
        %v4906 = vadd.f32 %v4474, %v4905
        %v4907 = vpop.f32.mrf.mxu0
        %4908 = vmatprep.mubr.f32.mxu0 %v4581
        %4909 = vmatmul.mubr.f32.gmra.mxu0 %v4262
        %v4910 = vpop.f32.mrf.mxu0
        %v4911 = vadd.f32 %v4444, %v4910
        %v4912 = vpop.f32.mrf.mxu0
        %4913 = vmatprep.mubr.f32.mxu0 %v4583
        %4914 = vmatmul.mubr.f32.gmra.mxu0 %v4280
        %v4915 = vpop.f32.mrf.mxu0
        %v4916 = vadd.f32 %v4453, %v4915
        %v4917 = vpop.f32.mrf.mxu0
        %4918 = vmatprep.mubr.f32.mxu0 %v4585
        %4919 = vmatmul.mubr.f32.gmra.mxu0 %v4298
        %v4920 = vpop.f32.mrf.mxu0
        %v4921 = vadd.f32 %v4470, %v4920
        %v4922 = vpop.f32.mrf.mxu0
        %4923 = vmatprep.mubr.f32.mxu0 %v4587
        %4924 = vmatmul.mubr.f32.gmra.mxu0 %v4316
        %v4925 = vpop.f32.mrf.mxu0
        %v4926 = vadd.f32 %v4471, %v4925
        %v4927 = vpop.f32.mrf.mxu0
        %4928 = vmatprep.mubr.f32.mxu0 %v4589
        %4929 = vmatmul.mubr.f32.gmra.mxu0 %v4334
        %v4930 = vpop.f32.mrf.mxu0
        %v4931 = vadd.f32 %v4472, %v4930
        %v4932 = vpop.f32.mrf.mxu0
        %4933 = vmatprep.mubr.f32.mxu0 %v4591
        %4934 = vmatmul.mubr.f32.gmra.mxu0 %v4352
        %v4935 = vpop.f32.mrf.mxu0
        %v4936 = vadd.f32 %v4473, %v4935
        %v4937 = vpop.f32.mrf.mxu0
        %4938 = vmatprep.mubr.f32.mxu0 %v4593
        %4939 = vmatmul.mubr.f32.gmra.mxu0 %v4370
        %v4940 = vpop.f32.mrf.mxu0
        %v4941 = vadd.f32 %v4474, %v4940
        %v4942 = vpop.f32.mrf.mxu0
        %4943 = vdwg.mxu0
        %v5000 = vcombine.high %v4666, %v4666
        %v5002 = vunpack.c.l.s4 1983009808
        %v5003 = vunpack.c.0.s8 %v5002
        %v5004 = vlaneseq
        %v5005 = vshrl.u32 %v5004, 7
        %v5006 = vsub.s32 %v5003, %v5005
        %v5007 = vrot.slane %v4666, %v5006
        %v5009 = vunpack.c.l.s4 1983009808
        %v5010 = vunpack.c.0.s8 %v5009
        %v5011 = vlaneseq
        %v5012 = vshrl.u32 %v5011, 7
        %v5013 = vsub.s32 %v5010, %v5012
        %v5014 = vrot.slane %v5000, %v5013
        %v5015 = vcombine.high %v5007, %v5007
        %v5016 = vcombine.high %v5014, %v5014
        %v5017 = vcombine.high %v4671, %v4671
        %v5019 = vunpack.c.l.s4 1983009808
        %v5020 = vunpack.c.0.s8 %v5019
        %v5021 = vlaneseq
        %v5022 = vshrl.u32 %v5021, 7
        %v5023 = vsub.s32 %v5020, %v5022
        %v5024 = vrot.slane %v4671, %v5023
        %v5026 = vunpack.c.l.s4 1983009808
        %v5027 = vunpack.c.0.s8 %v5026
        %v5028 = vlaneseq
        %v5029 = vshrl.u32 %v5028, 7
        %v5030 = vsub.s32 %v5027, %v5029
        %v5031 = vrot.slane %v5017, %v5030
        %v5032 = vcombine.high %v5024, %v5024
        %v5033 = vcombine.high %v5031, %v5031
        %v5034 = vcombine.high %v4676, %v4676
        %v5036 = vunpack.c.l.s4 1983009808
        %v5037 = vunpack.c.0.s8 %v5036
        %v5038 = vlaneseq
        %v5039 = vshrl.u32 %v5038, 7
        %v5040 = vsub.s32 %v5037, %v5039
        %v5041 = vrot.slane %v4676, %v5040
        %v5043 = vunpack.c.l.s4 1983009808
        %v5044 = vunpack.c.0.s8 %v5043
        %v5045 = vlaneseq
        %v5046 = vshrl.u32 %v5045, 7
        %v5047 = vsub.s32 %v5044, %v5046
        %v5048 = vrot.slane %v5034, %v5047
        %v5049 = vcombine.high %v5041, %v5041
        %v5050 = vcombine.high %v5048, %v5048
        %v5051 = vcombine.high %v4681, %v4681
        %v5053 = vunpack.c.l.s4 1983009808
        %v5054 = vunpack.c.0.s8 %v5053
        %v5055 = vlaneseq
        %v5056 = vshrl.u32 %v5055, 7
        %v5057 = vsub.s32 %v5054, %v5056
        %v5058 = vrot.slane %v4681, %v5057
        %v5060 = vunpack.c.l.s4 1983009808
        %v5061 = vunpack.c.0.s8 %v5060
        %v5062 = vlaneseq
        %v5063 = vshrl.u32 %v5062, 7
        %v5064 = vsub.s32 %v5061, %v5063
        %v5065 = vrot.slane %v5051, %v5064
        %v5066 = vcombine.high %v5058, %v5058
        %v5067 = vcombine.high %v5065, %v5065
        %v5068 = vcombine.high %v4686, %v4686
        %v5070 = vunpack.c.l.s4 1983009808
        %v5071 = vunpack.c.0.s8 %v5070
        %v5072 = vlaneseq
        %v5073 = vshrl.u32 %v5072, 7
        %v5074 = vsub.s32 %v5071, %v5073
        %v5075 = vrot.slane %v4686, %v5074
        %v5077 = vunpack.c.l.s4 1983009808
        %v5078 = vunpack.c.0.s8 %v5077
        %v5079 = vlaneseq
        %v5080 = vshrl.u32 %v5079, 7
        %v5081 = vsub.s32 %v5078, %v5080
        %v5082 = vrot.slane %v5068, %v5081
        %v5083 = vcombine.high %v5075, %v5075
        %v5084 = vcombine.high %v5082, %v5082
        %v5085 = vcombine.high %v4691, %v4691
        %v5087 = vunpack.c.l.s4 1983009808
        %v5088 = vunpack.c.0.s8 %v5087
        %v5089 = vlaneseq
        %v5090 = vshrl.u32 %v5089, 7
        %v5091 = vsub.s32 %v5088, %v5090
        %v5092 = vrot.slane %v4691, %v5091
        %v5094 = vunpack.c.l.s4 1983009808
        %v5095 = vunpack.c.0.s8 %v5094
        %v5096 = vlaneseq
        %v5097 = vshrl.u32 %v5096, 7
        %v5098 = vsub.s32 %v5095, %v5097
        %v5099 = vrot.slane %v5085, %v5098
        %v5100 = vcombine.high %v5092, %v5092
        %v5101 = vcombine.high %v5099, %v5099
        %v5102 = vcombine.high %v4696, %v4696
        %v5104 = vunpack.c.l.s4 1983009808
        %v5105 = vunpack.c.0.s8 %v5104
        %v5106 = vlaneseq
        %v5107 = vshrl.u32 %v5106, 7
        %v5108 = vsub.s32 %v5105, %v5107
        %v5109 = vrot.slane %v4696, %v5108
        %v5111 = vunpack.c.l.s4 1983009808
        %v5112 = vunpack.c.0.s8 %v5111
        %v5113 = vlaneseq
        %v5114 = vshrl.u32 %v5113, 7
        %v5115 = vsub.s32 %v5112, %v5114
        %v5116 = vrot.slane %v5102, %v5115
        %v5117 = vcombine.high %v5109, %v5109
        %v5118 = vcombine.high %v5116, %v5116
        %v5119 = vcombine.high %v4701, %v4701
        %v5121 = vunpack.c.l.s4 1983009808
        %v5122 = vunpack.c.0.s8 %v5121
        %v5123 = vlaneseq
        %v5124 = vshrl.u32 %v5123, 7
        %v5125 = vsub.s32 %v5122, %v5124
        %v5126 = vrot.slane %v4701, %v5125
        %v5128 = vunpack.c.l.s4 1983009808
        %v5129 = vunpack.c.0.s8 %v5128
        %v5130 = vlaneseq
        %v5131 = vshrl.u32 %v5130, 7
        %v5132 = vsub.s32 %v5129, %v5131
        %v5133 = vrot.slane %v5119, %v5132
        %v5134 = vcombine.high %v5126, %v5126
        %v5135 = vcombine.high %v5133, %v5133
        %v5136 = vcombine.high %v4706, %v4706
        %v5138 = vunpack.c.l.s4 1983009808
        %v5139 = vunpack.c.0.s8 %v5138
        %v5140 = vlaneseq
        %v5141 = vshrl.u32 %v5140, 7
        %v5142 = vsub.s32 %v5139, %v5141
        %v5143 = vrot.slane %v4706, %v5142
        %v5145 = vunpack.c.l.s4 1983009808
        %v5146 = vunpack.c.0.s8 %v5145
        %v5147 = vlaneseq
        %v5148 = vshrl.u32 %v5147, 7
        %v5149 = vsub.s32 %v5146, %v5148
        %v5150 = vrot.slane %v5136, %v5149
        %v5151 = vcombine.high %v5143, %v5143
        %v5152 = vcombine.high %v5150, %v5150
        %v5153 = vcombine.high %v4711, %v4711
        %v5155 = vunpack.c.l.s4 1983009808
        %v5156 = vunpack.c.0.s8 %v5155
        %v5157 = vlaneseq
        %v5158 = vshrl.u32 %v5157, 7
        %v5159 = vsub.s32 %v5156, %v5158
        %v5160 = vrot.slane %v4711, %v5159
        %v5162 = vunpack.c.l.s4 1983009808
        %v5163 = vunpack.c.0.s8 %v5162
        %v5164 = vlaneseq
        %v5165 = vshrl.u32 %v5164, 7
        %v5166 = vsub.s32 %v5163, %v5165
        %v5167 = vrot.slane %v5153, %v5166
        %v5168 = vcombine.high %v5160, %v5160
        %v5169 = vcombine.high %v5167, %v5167
        %v5170 = vcombine.high %v4716, %v4716
        %v5172 = vunpack.c.l.s4 1983009808
        %v5173 = vunpack.c.0.s8 %v5172
        %v5174 = vlaneseq
        %v5175 = vshrl.u32 %v5174, 7
        %v5176 = vsub.s32 %v5173, %v5175
        %v5177 = vrot.slane %v4716, %v5176
        %v5179 = vunpack.c.l.s4 1983009808
        %v5180 = vunpack.c.0.s8 %v5179
        %v5181 = vlaneseq
        %v5182 = vshrl.u32 %v5181, 7
        %v5183 = vsub.s32 %v5180, %v5182
        %v5184 = vrot.slane %v5170, %v5183
        %v5185 = vcombine.high %v5177, %v5177
        %v5186 = vcombine.high %v5184, %v5184
        %v5187 = vcombine.high %v4721, %v4721
        %v5189 = vunpack.c.l.s4 1983009808
        %v5190 = vunpack.c.0.s8 %v5189
        %v5191 = vlaneseq
        %v5192 = vshrl.u32 %v5191, 7
        %v5193 = vsub.s32 %v5190, %v5192
        %v5194 = vrot.slane %v4721, %v5193
        %v5196 = vunpack.c.l.s4 1983009808
        %v5197 = vunpack.c.0.s8 %v5196
        %v5198 = vlaneseq
        %v5199 = vshrl.u32 %v5198, 7
        %v5200 = vsub.s32 %v5197, %v5199
        %v5201 = vrot.slane %v5187, %v5200
        %v5202 = vcombine.high %v5194, %v5194
        %v5203 = vcombine.high %v5201, %v5201
        %v5204 = vcombine.high %v4726, %v4726
        %v5206 = vunpack.c.l.s4 1983009808
        %v5207 = vunpack.c.0.s8 %v5206
        %v5208 = vlaneseq
        %v5209 = vshrl.u32 %v5208, 7
        %v5210 = vsub.s32 %v5207, %v5209
        %v5211 = vrot.slane %v4726, %v5210
        %v5213 = vunpack.c.l.s4 1983009808
        %v5214 = vunpack.c.0.s8 %v5213
        %v5215 = vlaneseq
        %v5216 = vshrl.u32 %v5215, 7
        %v5217 = vsub.s32 %v5214, %v5216
        %v5218 = vrot.slane %v5204, %v5217
        %v5219 = vcombine.high %v5211, %v5211
        %v5220 = vcombine.high %v5218, %v5218
        %v5221 = vcombine.high %v4731, %v4731
        %v5223 = vunpack.c.l.s4 1983009808
        %v5224 = vunpack.c.0.s8 %v5223
        %v5225 = vlaneseq
        %v5226 = vshrl.u32 %v5225, 7
        %v5227 = vsub.s32 %v5224, %v5226
        %v5228 = vrot.slane %v4731, %v5227
        %v5230 = vunpack.c.l.s4 1983009808
        %v5231 = vunpack.c.0.s8 %v5230
        %v5232 = vlaneseq
        %v5233 = vshrl.u32 %v5232, 7
        %v5234 = vsub.s32 %v5231, %v5233
        %v5235 = vrot.slane %v5221, %v5234
        %v5236 = vcombine.high %v5228, %v5228
        %v5237 = vcombine.high %v5235, %v5235
        %v5238 = vcombine.high %v4736, %v4736
        %v5240 = vunpack.c.l.s4 1983009808
        %v5241 = vunpack.c.0.s8 %v5240
        %v5242 = vlaneseq
        %v5243 = vshrl.u32 %v5242, 7
        %v5244 = vsub.s32 %v5241, %v5243
        %v5245 = vrot.slane %v4736, %v5244
        %v5247 = vunpack.c.l.s4 1983009808
        %v5248 = vunpack.c.0.s8 %v5247
        %v5249 = vlaneseq
        %v5250 = vshrl.u32 %v5249, 7
        %v5251 = vsub.s32 %v5248, %v5250
        %v5252 = vrot.slane %v5238, %v5251
        %v5253 = vcombine.high %v5245, %v5245
        %v5254 = vcombine.high %v5252, %v5252
        %v5255 = vcombine.high %v4741, %v4741
        %v5257 = vunpack.c.l.s4 1983009808
        %v5258 = vunpack.c.0.s8 %v5257
        %v5259 = vlaneseq
        %v5260 = vshrl.u32 %v5259, 7
        %v5261 = vsub.s32 %v5258, %v5260
        %v5262 = vrot.slane %v4741, %v5261
        %v5264 = vunpack.c.l.s4 1983009808
        %v5265 = vunpack.c.0.s8 %v5264
        %v5266 = vlaneseq
        %v5267 = vshrl.u32 %v5266, 7
        %v5268 = vsub.s32 %v5265, %v5267
        %v5269 = vrot.slane %v5255, %v5268
        %v5270 = vcombine.high %v5262, %v5262
        %v5271 = vcombine.high %v5269, %v5269
        %v5272 = vcombine.high %v4746, %v4746
        %v5274 = vunpack.c.l.s4 1983009808
        %v5275 = vunpack.c.0.s8 %v5274
        %v5276 = vlaneseq
        %v5277 = vshrl.u32 %v5276, 7
        %v5278 = vsub.s32 %v5275, %v5277
        %v5279 = vrot.slane %v4746, %v5278
        %v5281 = vunpack.c.l.s4 1983009808
        %v5282 = vunpack.c.0.s8 %v5281
        %v5283 = vlaneseq
        %v5284 = vshrl.u32 %v5283, 7
        %v5285 = vsub.s32 %v5282, %v5284
        %v5286 = vrot.slane %v5272, %v5285
        %v5287 = vcombine.high %v5279, %v5279
        %v5288 = vcombine.high %v5286, %v5286
        %v5289 = vcombine.high %v4751, %v4751
        %v5291 = vunpack.c.l.s4 1983009808
        %v5292 = vunpack.c.0.s8 %v5291
        %v5293 = vlaneseq
        %v5294 = vshrl.u32 %v5293, 7
        %v5295 = vsub.s32 %v5292, %v5294
        %v5296 = vrot.slane %v4751, %v5295
        %v5298 = vunpack.c.l.s4 1983009808
        %v5299 = vunpack.c.0.s8 %v5298
        %v5300 = vlaneseq
        %v5301 = vshrl.u32 %v5300, 7
        %v5302 = vsub.s32 %v5299, %v5301
        %v5303 = vrot.slane %v5289, %v5302
        %v5304 = vcombine.high %v5296, %v5296
        %v5305 = vcombine.high %v5303, %v5303
        %v5306 = vcombine.high %v4756, %v4756
        %v5308 = vunpack.c.l.s4 1983009808
        %v5309 = vunpack.c.0.s8 %v5308
        %v5310 = vlaneseq
        %v5311 = vshrl.u32 %v5310, 7
        %v5312 = vsub.s32 %v5309, %v5311
        %v5313 = vrot.slane %v4756, %v5312
        %v5315 = vunpack.c.l.s4 1983009808
        %v5316 = vunpack.c.0.s8 %v5315
        %v5317 = vlaneseq
        %v5318 = vshrl.u32 %v5317, 7
        %v5319 = vsub.s32 %v5316, %v5318
        %v5320 = vrot.slane %v5306, %v5319
        %v5321 = vcombine.high %v5313, %v5313
        %v5322 = vcombine.high %v5320, %v5320
        %v5323 = vcombine.high %v4761, %v4761
        %v5325 = vunpack.c.l.s4 1983009808
        %v5326 = vunpack.c.0.s8 %v5325
        %v5327 = vlaneseq
        %v5328 = vshrl.u32 %v5327, 7
        %v5329 = vsub.s32 %v5326, %v5328
        %v5330 = vrot.slane %v4761, %v5329
        %v5332 = vunpack.c.l.s4 1983009808
        %v5333 = vunpack.c.0.s8 %v5332
        %v5334 = vlaneseq
        %v5335 = vshrl.u32 %v5334, 7
        %v5336 = vsub.s32 %v5333, %v5335
        %v5337 = vrot.slane %v5323, %v5336
        %v5338 = vcombine.high %v5330, %v5330
        %v5339 = vcombine.high %v5337, %v5337
        %v5340 = vcombine.high %v4766, %v4766
        %v5342 = vunpack.c.l.s4 1983009808
        %v5343 = vunpack.c.0.s8 %v5342
        %v5344 = vlaneseq
        %v5345 = vshrl.u32 %v5344, 7
        %v5346 = vsub.s32 %v5343, %v5345
        %v5347 = vrot.slane %v4766, %v5346
        %v5349 = vunpack.c.l.s4 1983009808
        %v5350 = vunpack.c.0.s8 %v5349
        %v5351 = vlaneseq
        %v5352 = vshrl.u32 %v5351, 7
        %v5353 = vsub.s32 %v5350, %v5352
        %v5354 = vrot.slane %v5340, %v5353
        %v5355 = vcombine.high %v5347, %v5347
        %v5356 = vcombine.high %v5354, %v5354
        %v5357 = vcombine.high %v4771, %v4771
        %v5359 = vunpack.c.l.s4 1983009808
        %v5360 = vunpack.c.0.s8 %v5359
        %v5361 = vlaneseq
        %v5362 = vshrl.u32 %v5361, 7
        %v5363 = vsub.s32 %v5360, %v5362
        %v5364 = vrot.slane %v4771, %v5363
        %v5366 = vunpack.c.l.s4 1983009808
        %v5367 = vunpack.c.0.s8 %v5366
        %v5368 = vlaneseq
        %v5369 = vshrl.u32 %v5368, 7
        %v5370 = vsub.s32 %v5367, %v5369
        %v5371 = vrot.slane %v5357, %v5370
        %v5372 = vcombine.high %v5364, %v5364
        %v5373 = vcombine.high %v5371, %v5371
        %v5374 = vcombine.high %v4776, %v4776
        %v5376 = vunpack.c.l.s4 1983009808
        %v5377 = vunpack.c.0.s8 %v5376
        %v5378 = vlaneseq
        %v5379 = vshrl.u32 %v5378, 7
        %v5380 = vsub.s32 %v5377, %v5379
        %v5381 = vrot.slane %v4776, %v5380
        %v5383 = vunpack.c.l.s4 1983009808
        %v5384 = vunpack.c.0.s8 %v5383
        %v5385 = vlaneseq
        %v5386 = vshrl.u32 %v5385, 7
        %v5387 = vsub.s32 %v5384, %v5386
        %v5388 = vrot.slane %v5374, %v5387
        %v5389 = vcombine.high %v5381, %v5381
        %v5390 = vcombine.high %v5388, %v5388
        %v5391 = vcombine.high %v4781, %v4781
        %v5393 = vunpack.c.l.s4 1983009808
        %v5394 = vunpack.c.0.s8 %v5393
        %v5395 = vlaneseq
        %v5396 = vshrl.u32 %v5395, 7
        %v5397 = vsub.s32 %v5394, %v5396
        %v5398 = vrot.slane %v4781, %v5397
        %v5400 = vunpack.c.l.s4 1983009808
        %v5401 = vunpack.c.0.s8 %v5400
        %v5402 = vlaneseq
        %v5403 = vshrl.u32 %v5402, 7
        %v5404 = vsub.s32 %v5401, %v5403
        %v5405 = vrot.slane %v5391, %v5404
        %v5406 = vcombine.high %v5398, %v5398
        %v5407 = vcombine.high %v5405, %v5405
        %v5408 = vcombine.high %v4786, %v4786
        %v5410 = vunpack.c.l.s4 1983009808
        %v5411 = vunpack.c.0.s8 %v5410
        %v5412 = vlaneseq
        %v5413 = vshrl.u32 %v5412, 7
        %v5414 = vsub.s32 %v5411, %v5413
        %v5415 = vrot.slane %v4786, %v5414
        %v5417 = vunpack.c.l.s4 1983009808
        %v5418 = vunpack.c.0.s8 %v5417
        %v5419 = vlaneseq
        %v5420 = vshrl.u32 %v5419, 7
        %v5421 = vsub.s32 %v5418, %v5420
        %v5422 = vrot.slane %v5408, %v5421
        %v5423 = vcombine.high %v5415, %v5415
        %v5424 = vcombine.high %v5422, %v5422
        %v5425 = vcombine.high %v4791, %v4791
        %v5427 = vunpack.c.l.s4 1983009808
        %v5428 = vunpack.c.0.s8 %v5427
        %v5429 = vlaneseq
        %v5430 = vshrl.u32 %v5429, 7
        %v5431 = vsub.s32 %v5428, %v5430
        %v5432 = vrot.slane %v4791, %v5431
        %v5434 = vunpack.c.l.s4 1983009808
        %v5435 = vunpack.c.0.s8 %v5434
        %v5436 = vlaneseq
        %v5437 = vshrl.u32 %v5436, 7
        %v5438 = vsub.s32 %v5435, %v5437
        %v5439 = vrot.slane %v5425, %v5438
        %v5440 = vcombine.high %v5432, %v5432
        %v5441 = vcombine.high %v5439, %v5439
        %v5442 = vcombine.high %v4796, %v4796
        %v5444 = vunpack.c.l.s4 1983009808
        %v5445 = vunpack.c.0.s8 %v5444
        %v5446 = vlaneseq
        %v5447 = vshrl.u32 %v5446, 7
        %v5448 = vsub.s32 %v5445, %v5447
        %v5449 = vrot.slane %v4796, %v5448
        %v5451 = vunpack.c.l.s4 1983009808
        %v5452 = vunpack.c.0.s8 %v5451
        %v5453 = vlaneseq
        %v5454 = vshrl.u32 %v5453, 7
        %v5455 = vsub.s32 %v5452, %v5454
        %v5456 = vrot.slane %v5442, %v5455
        %v5457 = vcombine.high %v5449, %v5449
        %v5458 = vcombine.high %v5456, %v5456
        %v5459 = vcombine.high %v4801, %v4801
        %v5461 = vunpack.c.l.s4 1983009808
        %v5462 = vunpack.c.0.s8 %v5461
        %v5463 = vlaneseq
        %v5464 = vshrl.u32 %v5463, 7
        %v5465 = vsub.s32 %v5462, %v5464
        %v5466 = vrot.slane %v4801, %v5465
        %v5468 = vunpack.c.l.s4 1983009808
        %v5469 = vunpack.c.0.s8 %v5468
        %v5470 = vlaneseq
        %v5471 = vshrl.u32 %v5470, 7
        %v5472 = vsub.s32 %v5469, %v5471
        %v5473 = vrot.slane %v5459, %v5472
        %v5474 = vcombine.high %v5466, %v5466
        %v5475 = vcombine.high %v5473, %v5473
        %v5476 = vcombine.high %v4806, %v4806
        %v5478 = vunpack.c.l.s4 1983009808
        %v5479 = vunpack.c.0.s8 %v5478
        %v5480 = vlaneseq
        %v5481 = vshrl.u32 %v5480, 7
        %v5482 = vsub.s32 %v5479, %v5481
        %v5483 = vrot.slane %v4806, %v5482
        %v5485 = vunpack.c.l.s4 1983009808
        %v5486 = vunpack.c.0.s8 %v5485
        %v5487 = vlaneseq
        %v5488 = vshrl.u32 %v5487, 7
        %v5489 = vsub.s32 %v5486, %v5488
        %v5490 = vrot.slane %v5476, %v5489
        %v5491 = vcombine.high %v5483, %v5483
        %v5492 = vcombine.high %v5490, %v5490
        %v5493 = vcombine.high %v4811, %v4811
        %v5495 = vunpack.c.l.s4 1983009808
        %v5496 = vunpack.c.0.s8 %v5495
        %v5497 = vlaneseq
        %v5498 = vshrl.u32 %v5497, 7
        %v5499 = vsub.s32 %v5496, %v5498
        %v5500 = vrot.slane %v4811, %v5499
        %v5502 = vunpack.c.l.s4 1983009808
        %v5503 = vunpack.c.0.s8 %v5502
        %v5504 = vlaneseq
        %v5505 = vshrl.u32 %v5504, 7
        %v5506 = vsub.s32 %v5503, %v5505
        %v5507 = vrot.slane %v5493, %v5506
        %v5508 = vcombine.high %v5500, %v5500
        %v5509 = vcombine.high %v5507, %v5507
        %v5510 = vcombine.high %v4816, %v4816
        %v5512 = vunpack.c.l.s4 1983009808
        %v5513 = vunpack.c.0.s8 %v5512
        %v5514 = vlaneseq
        %v5515 = vshrl.u32 %v5514, 7
        %v5516 = vsub.s32 %v5513, %v5515
        %v5517 = vrot.slane %v4816, %v5516
        %v5519 = vunpack.c.l.s4 1983009808
        %v5520 = vunpack.c.0.s8 %v5519
        %v5521 = vlaneseq
        %v5522 = vshrl.u32 %v5521, 7
        %v5523 = vsub.s32 %v5520, %v5522
        %v5524 = vrot.slane %v5510, %v5523
        %v5525 = vcombine.high %v5517, %v5517
        %v5526 = vcombine.high %v5524, %v5524
        %v5527 = vcombine.high %v4821, %v4821
        %v5529 = vunpack.c.l.s4 1983009808
        %v5530 = vunpack.c.0.s8 %v5529
        %v5531 = vlaneseq
        %v5532 = vshrl.u32 %v5531, 7
        %v5533 = vsub.s32 %v5530, %v5532
        %v5534 = vrot.slane %v4821, %v5533
        %v5536 = vunpack.c.l.s4 1983009808
        %v5537 = vunpack.c.0.s8 %v5536
        %v5538 = vlaneseq
        %v5539 = vshrl.u32 %v5538, 7
        %v5540 = vsub.s32 %v5537, %v5539
        %v5541 = vrot.slane %v5527, %v5540
        %v5542 = vcombine.high %v5534, %v5534
        %v5543 = vcombine.high %v5541, %v5541
        %v5544 = vcombine.high %v4826, %v4826
        %v5546 = vunpack.c.l.s4 1983009808
        %v5547 = vunpack.c.0.s8 %v5546
        %v5548 = vlaneseq
        %v5549 = vshrl.u32 %v5548, 7
        %v5550 = vsub.s32 %v5547, %v5549
        %v5551 = vrot.slane %v4826, %v5550
        %v5553 = vunpack.c.l.s4 1983009808
        %v5554 = vunpack.c.0.s8 %v5553
        %v5555 = vlaneseq
        %v5556 = vshrl.u32 %v5555, 7
        %v5557 = vsub.s32 %v5554, %v5556
        %v5558 = vrot.slane %v5544, %v5557
        %v5559 = vcombine.high %v5551, %v5551
        %v5560 = vcombine.high %v5558, %v5558
        %v5561 = vcombine.high %v4831, %v4831
        %v5563 = vunpack.c.l.s4 1983009808
        %v5564 = vunpack.c.0.s8 %v5563
        %v5565 = vlaneseq
        %v5566 = vshrl.u32 %v5565, 7
        %v5567 = vsub.s32 %v5564, %v5566
        %v5568 = vrot.slane %v4831, %v5567
        %v5570 = vunpack.c.l.s4 1983009808
        %v5571 = vunpack.c.0.s8 %v5570
        %v5572 = vlaneseq
        %v5573 = vshrl.u32 %v5572, 7
        %v5574 = vsub.s32 %v5571, %v5573
        %v5575 = vrot.slane %v5561, %v5574
        %v5576 = vcombine.high %v5568, %v5568
        %v5577 = vcombine.high %v5575, %v5575
        %v5578 = vcombine.high %v4836, %v4836
        %v5580 = vunpack.c.l.s4 1983009808
        %v5581 = vunpack.c.0.s8 %v5580
        %v5582 = vlaneseq
        %v5583 = vshrl.u32 %v5582, 7
        %v5584 = vsub.s32 %v5581, %v5583
        %v5585 = vrot.slane %v4836, %v5584
        %v5587 = vunpack.c.l.s4 1983009808
        %v5588 = vunpack.c.0.s8 %v5587
        %v5589 = vlaneseq
        %v5590 = vshrl.u32 %v5589, 7
        %v5591 = vsub.s32 %v5588, %v5590
        %v5592 = vrot.slane %v5578, %v5591
        %v5593 = vcombine.high %v5585, %v5585
        %v5594 = vcombine.high %v5592, %v5592
        %v5595 = vcombine.high %v4841, %v4841
        %v5597 = vunpack.c.l.s4 1983009808
        %v5598 = vunpack.c.0.s8 %v5597
        %v5599 = vlaneseq
        %v5600 = vshrl.u32 %v5599, 7
        %v5601 = vsub.s32 %v5598, %v5600
        %v5602 = vrot.slane %v4841, %v5601
        %v5604 = vunpack.c.l.s4 1983009808
        %v5605 = vunpack.c.0.s8 %v5604
        %v5606 = vlaneseq
        %v5607 = vshrl.u32 %v5606, 7
        %v5608 = vsub.s32 %v5605, %v5607
        %v5609 = vrot.slane %v5595, %v5608
        %v5610 = vcombine.high %v5602, %v5602
        %v5611 = vcombine.high %v5609, %v5609
        %v5612 = vcombine.high %v4846, %v4846
        %v5614 = vunpack.c.l.s4 1983009808
        %v5615 = vunpack.c.0.s8 %v5614
        %v5616 = vlaneseq
        %v5617 = vshrl.u32 %v5616, 7
        %v5618 = vsub.s32 %v5615, %v5617
        %v5619 = vrot.slane %v4846, %v5618
        %v5621 = vunpack.c.l.s4 1983009808
        %v5622 = vunpack.c.0.s8 %v5621
        %v5623 = vlaneseq
        %v5624 = vshrl.u32 %v5623, 7
        %v5625 = vsub.s32 %v5622, %v5624
        %v5626 = vrot.slane %v5612, %v5625
        %v5627 = vcombine.high %v5619, %v5619
        %v5628 = vcombine.high %v5626, %v5626
        %v5629 = vcombine.high %v4851, %v4851
        %v5631 = vunpack.c.l.s4 1983009808
        %v5632 = vunpack.c.0.s8 %v5631
        %v5633 = vlaneseq
        %v5634 = vshrl.u32 %v5633, 7
        %v5635 = vsub.s32 %v5632, %v5634
        %v5636 = vrot.slane %v4851, %v5635
        %v5638 = vunpack.c.l.s4 1983009808
        %v5639 = vunpack.c.0.s8 %v5638
        %v5640 = vlaneseq
        %v5641 = vshrl.u32 %v5640, 7
        %v5642 = vsub.s32 %v5639, %v5641
        %v5643 = vrot.slane %v5629, %v5642
        %v5644 = vcombine.high %v5636, %v5636
        %v5645 = vcombine.high %v5643, %v5643
        %v5646 = vcombine.high %v4856, %v4856
        %v5648 = vunpack.c.l.s4 1983009808
        %v5649 = vunpack.c.0.s8 %v5648
        %v5650 = vlaneseq
        %v5651 = vshrl.u32 %v5650, 7
        %v5652 = vsub.s32 %v5649, %v5651
        %v5653 = vrot.slane %v4856, %v5652
        %v5655 = vunpack.c.l.s4 1983009808
        %v5656 = vunpack.c.0.s8 %v5655
        %v5657 = vlaneseq
        %v5658 = vshrl.u32 %v5657, 7
        %v5659 = vsub.s32 %v5656, %v5658
        %v5660 = vrot.slane %v5646, %v5659
        %v5661 = vcombine.high %v5653, %v5653
        %v5662 = vcombine.high %v5660, %v5660
        %v5663 = vcombine.high %v4861, %v4861
        %v5665 = vunpack.c.l.s4 1983009808
        %v5666 = vunpack.c.0.s8 %v5665
        %v5667 = vlaneseq
        %v5668 = vshrl.u32 %v5667, 7
        %v5669 = vsub.s32 %v5666, %v5668
        %v5670 = vrot.slane %v4861, %v5669
        %v5672 = vunpack.c.l.s4 1983009808
        %v5673 = vunpack.c.0.s8 %v5672
        %v5674 = vlaneseq
        %v5675 = vshrl.u32 %v5674, 7
        %v5676 = vsub.s32 %v5673, %v5675
        %v5677 = vrot.slane %v5663, %v5676
        %v5678 = vcombine.high %v5670, %v5670
        %v5679 = vcombine.high %v5677, %v5677
        %v5680 = vcombine.high %v4866, %v4866
        %v5682 = vunpack.c.l.s4 1983009808
        %v5683 = vunpack.c.0.s8 %v5682
        %v5684 = vlaneseq
        %v5685 = vshrl.u32 %v5684, 7
        %v5686 = vsub.s32 %v5683, %v5685
        %v5687 = vrot.slane %v4866, %v5686
        %v5689 = vunpack.c.l.s4 1983009808
        %v5690 = vunpack.c.0.s8 %v5689
        %v5691 = vlaneseq
        %v5692 = vshrl.u32 %v5691, 7
        %v5693 = vsub.s32 %v5690, %v5692
        %v5694 = vrot.slane %v5680, %v5693
        %v5695 = vcombine.high %v5687, %v5687
        %v5696 = vcombine.high %v5694, %v5694
        %v5697 = vcombine.high %v4871, %v4871
        %v5699 = vunpack.c.l.s4 1983009808
        %v5700 = vunpack.c.0.s8 %v5699
        %v5701 = vlaneseq
        %v5702 = vshrl.u32 %v5701, 7
        %v5703 = vsub.s32 %v5700, %v5702
        %v5704 = vrot.slane %v4871, %v5703
        %v5706 = vunpack.c.l.s4 1983009808
        %v5707 = vunpack.c.0.s8 %v5706
        %v5708 = vlaneseq
        %v5709 = vshrl.u32 %v5708, 7
        %v5710 = vsub.s32 %v5707, %v5709
        %v5711 = vrot.slane %v5697, %v5710
        %v5712 = vcombine.high %v5704, %v5704
        %v5713 = vcombine.high %v5711, %v5711
        %v5714 = vcombine.high %v4876, %v4876
        %v5716 = vunpack.c.l.s4 1983009808
        %v5717 = vunpack.c.0.s8 %v5716
        %v5718 = vlaneseq
        %v5719 = vshrl.u32 %v5718, 7
        %v5720 = vsub.s32 %v5717, %v5719
        %v5721 = vrot.slane %v4876, %v5720
        %v5723 = vunpack.c.l.s4 1983009808
        %v5724 = vunpack.c.0.s8 %v5723
        %v5725 = vlaneseq
        %v5726 = vshrl.u32 %v5725, 7
        %v5727 = vsub.s32 %v5724, %v5726
        %v5728 = vrot.slane %v5714, %v5727
        %v5729 = vcombine.high %v5721, %v5721
        %v5730 = vcombine.high %v5728, %v5728
        %v5731 = vcombine.high %v4881, %v4881
        %v5733 = vunpack.c.l.s4 1983009808
        %v5734 = vunpack.c.0.s8 %v5733
        %v5735 = vlaneseq
        %v5736 = vshrl.u32 %v5735, 7
        %v5737 = vsub.s32 %v5734, %v5736
        %v5738 = vrot.slane %v4881, %v5737
        %v5740 = vunpack.c.l.s4 1983009808
        %v5741 = vunpack.c.0.s8 %v5740
        %v5742 = vlaneseq
        %v5743 = vshrl.u32 %v5742, 7
        %v5744 = vsub.s32 %v5741, %v5743
        %v5745 = vrot.slane %v5731, %v5744
        %v5746 = vcombine.high %v5738, %v5738
        %v5747 = vcombine.high %v5745, %v5745
        %v5748 = vcombine.high %v4886, %v4886
        %v5750 = vunpack.c.l.s4 1983009808
        %v5751 = vunpack.c.0.s8 %v5750
        %v5752 = vlaneseq
        %v5753 = vshrl.u32 %v5752, 7
        %v5754 = vsub.s32 %v5751, %v5753
        %v5755 = vrot.slane %v4886, %v5754
        %v5757 = vunpack.c.l.s4 1983009808
        %v5758 = vunpack.c.0.s8 %v5757
        %v5759 = vlaneseq
        %v5760 = vshrl.u32 %v5759, 7
        %v5761 = vsub.s32 %v5758, %v5760
        %v5762 = vrot.slane %v5748, %v5761
        %v5763 = vcombine.high %v5755, %v5755
        %v5764 = vcombine.high %v5762, %v5762
        %v5765 = vcombine.high %v4891, %v4891
        %v5767 = vunpack.c.l.s4 1983009808
        %v5768 = vunpack.c.0.s8 %v5767
        %v5769 = vlaneseq
        %v5770 = vshrl.u32 %v5769, 7
        %v5771 = vsub.s32 %v5768, %v5770
        %v5772 = vrot.slane %v4891, %v5771
        %v5774 = vunpack.c.l.s4 1983009808
        %v5775 = vunpack.c.0.s8 %v5774
        %v5776 = vlaneseq
        %v5777 = vshrl.u32 %v5776, 7
        %v5778 = vsub.s32 %v5775, %v5777
        %v5779 = vrot.slane %v5765, %v5778
        %v5780 = vcombine.high %v5772, %v5772
        %v5781 = vcombine.high %v5779, %v5779
        %v5782 = vcombine.high %v4896, %v4896
        %v5784 = vunpack.c.l.s4 1983009808
        %v5785 = vunpack.c.0.s8 %v5784
        %v5786 = vlaneseq
        %v5787 = vshrl.u32 %v5786, 7
        %v5788 = vsub.s32 %v5785, %v5787
        %v5789 = vrot.slane %v4896, %v5788
        %v5791 = vunpack.c.l.s4 1983009808
        %v5792 = vunpack.c.0.s8 %v5791
        %v5793 = vlaneseq
        %v5794 = vshrl.u32 %v5793, 7
        %v5795 = vsub.s32 %v5792, %v5794
        %v5796 = vrot.slane %v5782, %v5795
        %v5797 = vcombine.high %v5789, %v5789
        %v5798 = vcombine.high %v5796, %v5796
        %v5799 = vcombine.high %v4901, %v4901
        %v5801 = vunpack.c.l.s4 1983009808
        %v5802 = vunpack.c.0.s8 %v5801
        %v5803 = vlaneseq
        %v5804 = vshrl.u32 %v5803, 7
        %v5805 = vsub.s32 %v5802, %v5804
        %v5806 = vrot.slane %v4901, %v5805
        %v5808 = vunpack.c.l.s4 1983009808
        %v5809 = vunpack.c.0.s8 %v5808
        %v5810 = vlaneseq
        %v5811 = vshrl.u32 %v5810, 7
        %v5812 = vsub.s32 %v5809, %v5811
        %v5813 = vrot.slane %v5799, %v5812
        %v5814 = vcombine.high %v5806, %v5806
        %v5815 = vcombine.high %v5813, %v5813
        %v5816 = vcombine.high %v4906, %v4906
        %v5818 = vunpack.c.l.s4 1983009808
        %v5819 = vunpack.c.0.s8 %v5818
        %v5820 = vlaneseq
        %v5821 = vshrl.u32 %v5820, 7
        %v5822 = vsub.s32 %v5819, %v5821
        %v5823 = vrot.slane %v4906, %v5822
        %v5825 = vunpack.c.l.s4 1983009808
        %v5826 = vunpack.c.0.s8 %v5825
        %v5827 = vlaneseq
        %v5828 = vshrl.u32 %v5827, 7
        %v5829 = vsub.s32 %v5826, %v5828
        %v5830 = vrot.slane %v5816, %v5829
        %v5831 = vcombine.high %v5823, %v5823
        %v5832 = vcombine.high %v5830, %v5830
        %v5833 = vcombine.high %v4911, %v4911
        %v5835 = vunpack.c.l.s4 1983009808
        %v5836 = vunpack.c.0.s8 %v5835
        %v5837 = vlaneseq
        %v5838 = vshrl.u32 %v5837, 7
        %v5839 = vsub.s32 %v5836, %v5838
        %v5840 = vrot.slane %v4911, %v5839
        %v5842 = vunpack.c.l.s4 1983009808
        %v5843 = vunpack.c.0.s8 %v5842
        %v5844 = vlaneseq
        %v5845 = vshrl.u32 %v5844, 7
        %v5846 = vsub.s32 %v5843, %v5845
        %v5847 = vrot.slane %v5833, %v5846
        %v5848 = vcombine.high %v5840, %v5840
        %v5849 = vcombine.high %v5847, %v5847
        %v5850 = vcombine.high %v4916, %v4916
        %v5852 = vunpack.c.l.s4 1983009808
        %v5853 = vunpack.c.0.s8 %v5852
        %v5854 = vlaneseq
        %v5855 = vshrl.u32 %v5854, 7
        %v5856 = vsub.s32 %v5853, %v5855
        %v5857 = vrot.slane %v4916, %v5856
        %v5859 = vunpack.c.l.s4 1983009808
        %v5860 = vunpack.c.0.s8 %v5859
        %v5861 = vlaneseq
        %v5862 = vshrl.u32 %v5861, 7
        %v5863 = vsub.s32 %v5860, %v5862
        %v5864 = vrot.slane %v5850, %v5863
        %v5865 = vcombine.high %v5857, %v5857
        %v5866 = vcombine.high %v5864, %v5864
        %v5867 = vcombine.high %v4921, %v4921
        %v5869 = vunpack.c.l.s4 1983009808
        %v5870 = vunpack.c.0.s8 %v5869
        %v5871 = vlaneseq
        %v5872 = vshrl.u32 %v5871, 7
        %v5873 = vsub.s32 %v5870, %v5872
        %v5874 = vrot.slane %v4921, %v5873
        %v5876 = vunpack.c.l.s4 1983009808
        %v5877 = vunpack.c.0.s8 %v5876
        %v5878 = vlaneseq
        %v5879 = vshrl.u32 %v5878, 7
        %v5880 = vsub.s32 %v5877, %v5879
        %v5881 = vrot.slane %v5867, %v5880
        %v5882 = vcombine.high %v5874, %v5874
        %v5883 = vcombine.high %v5881, %v5881
        %v5884 = vcombine.high %v4926, %v4926
        %v5886 = vunpack.c.l.s4 1983009808
        %v5887 = vunpack.c.0.s8 %v5886
        %v5888 = vlaneseq
        %v5889 = vshrl.u32 %v5888, 7
        %v5890 = vsub.s32 %v5887, %v5889
        %v5891 = vrot.slane %v4926, %v5890
        %v5893 = vunpack.c.l.s4 1983009808
        %v5894 = vunpack.c.0.s8 %v5893
        %v5895 = vlaneseq
        %v5896 = vshrl.u32 %v5895, 7
        %v5897 = vsub.s32 %v5894, %v5896
        %v5898 = vrot.slane %v5884, %v5897
        %v5899 = vcombine.high %v5891, %v5891
        %v5900 = vcombine.high %v5898, %v5898
        %v5901 = vcombine.high %v4931, %v4931
        %v5903 = vunpack.c.l.s4 1983009808
        %v5904 = vunpack.c.0.s8 %v5903
        %v5905 = vlaneseq
        %v5906 = vshrl.u32 %v5905, 7
        %v5907 = vsub.s32 %v5904, %v5906
        %v5908 = vrot.slane %v4931, %v5907
        %v5910 = vunpack.c.l.s4 1983009808
        %v5911 = vunpack.c.0.s8 %v5910
        %v5912 = vlaneseq
        %v5913 = vshrl.u32 %v5912, 7
        %v5914 = vsub.s32 %v5911, %v5913
        %v5915 = vrot.slane %v5901, %v5914
        %v5916 = vcombine.high %v5908, %v5908
        %v5917 = vcombine.high %v5915, %v5915
        %v5918 = vcombine.high %v4936, %v4936
        %v5920 = vunpack.c.l.s4 1983009808
        %v5921 = vunpack.c.0.s8 %v5920
        %v5922 = vlaneseq
        %v5923 = vshrl.u32 %v5922, 7
        %v5924 = vsub.s32 %v5921, %v5923
        %v5925 = vrot.slane %v4936, %v5924
        %v5927 = vunpack.c.l.s4 1983009808
        %v5928 = vunpack.c.0.s8 %v5927
        %v5929 = vlaneseq
        %v5930 = vshrl.u32 %v5929, 7
        %v5931 = vsub.s32 %v5928, %v5930
        %v5932 = vrot.slane %v5918, %v5931
        %v5933 = vcombine.high %v5925, %v5925
        %v5934 = vcombine.high %v5932, %v5932
        %v5935 = vcombine.high %v4941, %v4941
        %v5937 = vunpack.c.l.s4 1983009808
        %v5938 = vunpack.c.0.s8 %v5937
        %v5939 = vlaneseq
        %v5940 = vshrl.u32 %v5939, 7
        %v5941 = vsub.s32 %v5938, %v5940
        %v5942 = vrot.slane %v4941, %v5941
        %v5944 = vunpack.c.l.s4 1983009808
        %v5945 = vunpack.c.0.s8 %v5944
        %v5946 = vlaneseq
        %v5947 = vshrl.u32 %v5946, 7
        %v5948 = vsub.s32 %v5945, %v5947
        %v5949 = vrot.slane %v5935, %v5948
        %v5950 = vcombine.high %v5942, %v5942
        %v5951 = vcombine.high %v5949, %v5949
        %v6176 = vmax.f32 %v5007, 0.0
        %v6177 = vmax.f32 %v5015, 0.0
        %v6178 = vmax.f32 %v5014, 0.0
        %v6179 = vmax.f32 %v5016, 0.0
        %v6180 = vmax.f32 %v5024, 0.0
        %v6181 = vmax.f32 %v5032, 0.0
        %v6182 = vmax.f32 %v5031, 0.0
        %v6183 = vmax.f32 %v5033, 0.0
        %v6184 = vmax.f32 %v5041, 0.0
        %v6185 = vmax.f32 %v5049, 0.0
        %v6186 = vmax.f32 %v5048, 0.0
        %v6187 = vmax.f32 %v5050, 0.0
        %v6188 = vmax.f32 %v5058, 0.0
        %v6189 = vmax.f32 %v5066, 0.0
        %v6190 = vmax.f32 %v5065, 0.0
        %v6191 = vmax.f32 %v5067, 0.0
        %v6192 = vmax.f32 %v5075, 0.0
        %v6193 = vmax.f32 %v5083, 0.0
        %v6194 = vmax.f32 %v5082, 0.0
        %v6195 = vmax.f32 %v5084, 0.0
        %v6196 = vmax.f32 %v5092, 0.0
        %v6197 = vmax.f32 %v5100, 0.0
        %v6198 = vmax.f32 %v5099, 0.0
        %v6199 = vmax.f32 %v5101, 0.0
        %v6200 = vmax.f32 %v5109, 0.0
        %v6201 = vmax.f32 %v5117, 0.0
        %v6202 = vmax.f32 %v5116, 0.0
        %v6203 = vmax.f32 %v5118, 0.0
        %v6204 = vmax.f32 %v5126, 0.0
        %v6205 = vmax.f32 %v5134, 0.0
        %v6206 = vmax.f32 %v5133, 0.0
        %v6207 = vmax.f32 %v5135, 0.0
        %v6208 = vmax.f32 %v5143, 0.0
        %v6209 = vmax.f32 %v5151, 0.0
        %v6210 = vmax.f32 %v5150, 0.0
        %v6211 = vmax.f32 %v5152, 0.0
        %v6212 = vmax.f32 %v5160, 0.0
        %v6213 = vmax.f32 %v5168, 0.0
        %v6214 = vmax.f32 %v5167, 0.0
        %v6215 = vmax.f32 %v5169, 0.0
        %v6216 = vmax.f32 %v5177, 0.0
        %v6217 = vmax.f32 %v5185, 0.0
        %v6218 = vmax.f32 %v5184, 0.0
        %v6219 = vmax.f32 %v5186, 0.0
        %v6220 = vmax.f32 %v5194, 0.0
        %v6221 = vmax.f32 %v5202, 0.0
        %v6222 = vmax.f32 %v5201, 0.0
        %v6223 = vmax.f32 %v5203, 0.0
        %v6224 = vmax.f32 %v5211, 0.0
        %v6225 = vmax.f32 %v5219, 0.0
        %v6226 = vmax.f32 %v5218, 0.0
        %v6227 = vmax.f32 %v5220, 0.0
        %v6228 = vmax.f32 %v5228, 0.0
        %v6229 = vmax.f32 %v5236, 0.0
        %v6230 = vmax.f32 %v5235, 0.0
        %v6231 = vmax.f32 %v5237, 0.0
        %v6232 = vmax.f32 %v5245, 0.0
        %v6233 = vmax.f32 %v5253, 0.0
        %v6234 = vmax.f32 %v5252, 0.0
        %v6235 = vmax.f32 %v5254, 0.0
        %v6236 = vmax.f32 %v5262, 0.0
        %v6237 = vmax.f32 %v5270, 0.0
        %v6238 = vmax.f32 %v5269, 0.0
        %v6239 = vmax.f32 %v5271, 0.0
        %v6240 = vmax.f32 %v5279, 0.0
        %v6241 = vmax.f32 %v5287, 0.0
        %v6242 = vmax.f32 %v5286, 0.0
        %v6243 = vmax.f32 %v5288, 0.0
        %v6244 = vmax.f32 %v5296, 0.0
        %v6245 = vmax.f32 %v5304, 0.0
        %v6246 = vmax.f32 %v5303, 0.0
        %v6247 = vmax.f32 %v5305, 0.0
        %v6248 = vmax.f32 %v5313, 0.0
        %v6249 = vmax.f32 %v5321, 0.0
        %v6250 = vmax.f32 %v5320, 0.0
        %v6251 = vmax.f32 %v5322, 0.0
        %v6252 = vmax.f32 %v5330, 0.0
        %v6253 = vmax.f32 %v5338, 0.0
        %v6254 = vmax.f32 %v5337, 0.0
        %v6255 = vmax.f32 %v5339, 0.0
        %v6256 = vmax.f32 %v5347, 0.0
        %v6257 = vmax.f32 %v5355, 0.0
        %v6258 = vmax.f32 %v5354, 0.0
        %v6259 = vmax.f32 %v5356, 0.0
        %v6260 = vmax.f32 %v5364, 0.0
        %v6261 = vmax.f32 %v5372, 0.0
        %v6262 = vmax.f32 %v5371, 0.0
        %v6263 = vmax.f32 %v5373, 0.0
        %v6264 = vmax.f32 %v5381, 0.0
        %v6265 = vmax.f32 %v5389, 0.0
        %v6266 = vmax.f32 %v5388, 0.0
        %v6267 = vmax.f32 %v5390, 0.0
        %v6268 = vmax.f32 %v5398, 0.0
        %v6269 = vmax.f32 %v5406, 0.0
        %v6270 = vmax.f32 %v5405, 0.0
        %v6271 = vmax.f32 %v5407, 0.0
        %v6272 = vmax.f32 %v5415, 0.0
        %v6273 = vmax.f32 %v5423, 0.0
        %v6274 = vmax.f32 %v5422, 0.0
        %v6275 = vmax.f32 %v5424, 0.0
        %v6276 = vmax.f32 %v5432, 0.0
        %v6277 = vmax.f32 %v5440, 0.0
        %v6278 = vmax.f32 %v5439, 0.0
        %v6279 = vmax.f32 %v5441, 0.0
        %v6280 = vmax.f32 %v5449, 0.0
        %v6281 = vmax.f32 %v5457, 0.0
        %v6282 = vmax.f32 %v5456, 0.0
        %v6283 = vmax.f32 %v5458, 0.0
        %v6284 = vmax.f32 %v5466, 0.0
        %v6285 = vmax.f32 %v5474, 0.0
        %v6286 = vmax.f32 %v5473, 0.0
        %v6287 = vmax.f32 %v5475, 0.0
        %v6288 = vmax.f32 %v5483, 0.0
        %v6289 = vmax.f32 %v5491, 0.0
        %v6290 = vmax.f32 %v5490, 0.0
        %v6291 = vmax.f32 %v5492, 0.0
        %v6292 = vmax.f32 %v5500, 0.0
        %v6293 = vmax.f32 %v5508, 0.0
        %v6294 = vmax.f32 %v5507, 0.0
        %v6295 = vmax.f32 %v5509, 0.0
        %v6296 = vmax.f32 %v5517, 0.0
        %v6297 = vmax.f32 %v5525, 0.0
        %v6298 = vmax.f32 %v5524, 0.0
        %v6299 = vmax.f32 %v5526, 0.0
        %v6300 = vmax.f32 %v5534, 0.0
        %v6301 = vmax.f32 %v5542, 0.0
        %v6302 = vmax.f32 %v5541, 0.0
        %v6303 = vmax.f32 %v5543, 0.0
        %v6304 = vmax.f32 %v5551, 0.0
        %v6305 = vmax.f32 %v5559, 0.0
        %v6306 = vmax.f32 %v5558, 0.0
        %v6307 = vmax.f32 %v5560, 0.0
        %v6308 = vmax.f32 %v5568, 0.0
        %v6309 = vmax.f32 %v5576, 0.0
        %v6310 = vmax.f32 %v5575, 0.0
        %v6311 = vmax.f32 %v5577, 0.0
        %v6312 = vmax.f32 %v5585, 0.0
        %v6313 = vmax.f32 %v5593, 0.0
        %v6314 = vmax.f32 %v5592, 0.0
        %v6315 = vmax.f32 %v5594, 0.0
        %v6316 = vmax.f32 %v5602, 0.0
        %v6317 = vmax.f32 %v5610, 0.0
        %v6318 = vmax.f32 %v5609, 0.0
        %v6319 = vmax.f32 %v5611, 0.0
        %v6320 = vmax.f32 %v5619, 0.0
        %v6321 = vmax.f32 %v5627, 0.0
        %v6322 = vmax.f32 %v5626, 0.0
        %v6323 = vmax.f32 %v5628, 0.0
        %v6324 = vmax.f32 %v5636, 0.0
        %v6325 = vmax.f32 %v5644, 0.0
        %v6326 = vmax.f32 %v5643, 0.0
        %v6327 = vmax.f32 %v5645, 0.0
        %v6328 = vmax.f32 %v5653, 0.0
        %v6329 = vmax.f32 %v5661, 0.0
        %v6330 = vmax.f32 %v5660, 0.0
        %v6331 = vmax.f32 %v5662, 0.0
        %v6332 = vmax.f32 %v5670, 0.0
        %v6333 = vmax.f32 %v5678, 0.0
        %v6334 = vmax.f32 %v5677, 0.0
        %v6335 = vmax.f32 %v5679, 0.0
        %v6336 = vmax.f32 %v5687, 0.0
        %v6337 = vmax.f32 %v5695, 0.0
        %v6338 = vmax.f32 %v5694, 0.0
        %v6339 = vmax.f32 %v5696, 0.0
        %v6340 = vmax.f32 %v5704, 0.0
        %v6341 = vmax.f32 %v5712, 0.0
        %v6342 = vmax.f32 %v5711, 0.0
        %v6343 = vmax.f32 %v5713, 0.0
        %v6344 = vmax.f32 %v5721, 0.0
        %v6345 = vmax.f32 %v5729, 0.0
        %v6346 = vmax.f32 %v5728, 0.0
        %v6347 = vmax.f32 %v5730, 0.0
        %v6348 = vmax.f32 %v5738, 0.0
        %v6349 = vmax.f32 %v5746, 0.0
        %v6350 = vmax.f32 %v5745, 0.0
        %v6351 = vmax.f32 %v5747, 0.0
        %v6352 = vmax.f32 %v5755, 0.0
        %v6353 = vmax.f32 %v5763, 0.0
        %v6354 = vmax.f32 %v5762, 0.0
        %v6355 = vmax.f32 %v5764, 0.0
        %v6356 = vmax.f32 %v5772, 0.0
        %v6357 = vmax.f32 %v5780, 0.0
        %v6358 = vmax.f32 %v5779, 0.0
        %v6359 = vmax.f32 %v5781, 0.0
        %v6360 = vmax.f32 %v5789, 0.0
        %v6361 = vmax.f32 %v5797, 0.0
        %v6362 = vmax.f32 %v5796, 0.0
        %v6363 = vmax.f32 %v5798, 0.0
        %v6364 = vmax.f32 %v5806, 0.0
        %v6365 = vmax.f32 %v5814, 0.0
        %v6366 = vmax.f32 %v5813, 0.0
        %v6367 = vmax.f32 %v5815, 0.0
        %v6368 = vmax.f32 %v5823, 0.0
        %v6369 = vmax.f32 %v5831, 0.0
        %v6370 = vmax.f32 %v5830, 0.0
        %v6371 = vmax.f32 %v5832, 0.0
        %v6372 = vmax.f32 %v5840, 0.0
        %v6373 = vmax.f32 %v5848, 0.0
        %v6374 = vmax.f32 %v5847, 0.0
        %v6375 = vmax.f32 %v5849, 0.0
        %v6376 = vmax.f32 %v5857, 0.0
        %v6377 = vmax.f32 %v5865, 0.0
        %v6378 = vmax.f32 %v5864, 0.0
        %v6379 = vmax.f32 %v5866, 0.0
        %v6380 = vmax.f32 %v5874, 0.0
        %v6381 = vmax.f32 %v5882, 0.0
        %v6382 = vmax.f32 %v5881, 0.0
        %v6383 = vmax.f32 %v5883, 0.0
        %v6384 = vmax.f32 %v5891, 0.0
        %v6385 = vmax.f32 %v5899, 0.0
        %v6386 = vmax.f32 %v5898, 0.0
        %v6387 = vmax.f32 %v5900, 0.0
        %v6388 = vmax.f32 %v5908, 0.0
        %v6389 = vmax.f32 %v5916, 0.0
        %v6390 = vmax.f32 %v5915, 0.0
        %v6391 = vmax.f32 %v5917, 0.0
        %v6392 = vmax.f32 %v5925, 0.0
        %v6393 = vmax.f32 %v5933, 0.0
        %v6394 = vmax.f32 %v5932, 0.0
        %v6395 = vmax.f32 %v5934, 0.0
        %v6396 = vmax.f32 %v5942, 0.0
        %v6397 = vmax.f32 %v5950, 0.0
        %v6398 = vmax.f32 %v5949, 0.0
        %v6399 = vmax.f32 %v5951, 0.0
        %v6624 = vcombine.low %v6176, %v6177
        %v6625 = vcombine.low %v6178, %v6179
        %v6627 = vunpack.c.l.s4 1983009808
        %v6628 = vunpack.c.0.s8 %v6627
        %v6629 = vlaneseq
        %v6630 = vshrl.u32 %v6629, 7
        %v6631 = vsub.s32 %v6628, %v6630
        %v6632 = vrot.slane %v6624, %v6631
        %v6634 = vunpack.c.l.s4 1983009808
        %v6635 = vunpack.c.0.s8 %v6634
        %v6636 = vlaneseq
        %v6637 = vshrl.u32 %v6636, 7
        %v6638 = vsub.s32 %v6635, %v6637
        %v6639 = vrot.slane %v6625, %v6638
        %v6640 = vcombine.low %v6632, %v6639
        %v6641 = vcombine.low %v6180, %v6181
        %v6643 = vunpack.c.l.s4 1983009808
        %v6644 = vunpack.c.0.s8 %v6643
        %v6645 = vlaneseq
        %v6646 = vshrl.u32 %v6645, 7
        %v6647 = vsub.s32 %v6644, %v6646
        %v6648 = vrot.slane %v6641, %v6647
        %v6650 = vunpack.c.l.s4 1983009808
        %v6651 = vunpack.c.0.s8 %v6650
        %v6652 = vlaneseq
        %v6653 = vshrl.u32 %v6652, 7
        %v6654 = vsub.s32 %v6651, %v6653
        %v6655 = vrot.slane %v6182, %v6654
        %v6656 = vcombine.low %v6648, %v6655
        %v6657 = vcombine.low %v6183, %v6184
        %v6658 = vcombine.low %v6185, %v6186
        %v6660 = vunpack.c.l.s4 1983009808
        %v6661 = vunpack.c.0.s8 %v6660
        %v6662 = vlaneseq
        %v6663 = vshrl.u32 %v6662, 7
        %v6664 = vsub.s32 %v6661, %v6663
        %v6665 = vrot.slane %v6657, %v6664
        %v6667 = vunpack.c.l.s4 1983009808
        %v6668 = vunpack.c.0.s8 %v6667
        %v6669 = vlaneseq
        %v6670 = vshrl.u32 %v6669, 7
        %v6671 = vsub.s32 %v6668, %v6670
        %v6672 = vrot.slane %v6658, %v6671
        %v6673 = vcombine.low %v6665, %v6672
        %v6674 = vcombine.low %v6187, %v6188
        %v6676 = vunpack.c.l.s4 1983009808
        %v6677 = vunpack.c.0.s8 %v6676
        %v6678 = vlaneseq
        %v6679 = vshrl.u32 %v6678, 7
        %v6680 = vsub.s32 %v6677, %v6679
        %v6681 = vrot.slane %v6674, %v6680
        %v6683 = vunpack.c.l.s4 1983009808
        %v6684 = vunpack.c.0.s8 %v6683
        %v6685 = vlaneseq
        %v6686 = vshrl.u32 %v6685, 7
        %v6687 = vsub.s32 %v6684, %v6686
        %v6688 = vrot.slane %v6189, %v6687
        %v6689 = vcombine.low %v6681, %v6688
        %v6690 = vcombine.low %v6190, %v6191
        %v6691 = vcombine.low %v6192, %v6193
        %v6693 = vunpack.c.l.s4 1983009808
        %v6694 = vunpack.c.0.s8 %v6693
        %v6695 = vlaneseq
        %v6696 = vshrl.u32 %v6695, 7
        %v6697 = vsub.s32 %v6694, %v6696
        %v6698 = vrot.slane %v6690, %v6697
        %v6700 = vunpack.c.l.s4 1983009808
        %v6701 = vunpack.c.0.s8 %v6700
        %v6702 = vlaneseq
        %v6703 = vshrl.u32 %v6702, 7
        %v6704 = vsub.s32 %v6701, %v6703
        %v6705 = vrot.slane %v6691, %v6704
        %v6706 = vcombine.low %v6698, %v6705
        %v6707 = vcombine.low %v6194, %v6195
        %v6709 = vunpack.c.l.s4 1983009808
        %v6710 = vunpack.c.0.s8 %v6709
        %v6711 = vlaneseq
        %v6712 = vshrl.u32 %v6711, 7
        %v6713 = vsub.s32 %v6710, %v6712
        %v6714 = vrot.slane %v6707, %v6713
        %v6716 = vunpack.c.l.s4 1983009808
        %v6717 = vunpack.c.0.s8 %v6716
        %v6718 = vlaneseq
        %v6719 = vshrl.u32 %v6718, 7
        %v6720 = vsub.s32 %v6717, %v6719
        %v6721 = vrot.slane %v6196, %v6720
        %v6722 = vcombine.low %v6714, %v6721
        %v6723 = vcombine.low %v6197, %v6198
        %v6724 = vcombine.low %v6199, %v6200
        %v6726 = vunpack.c.l.s4 1983009808
        %v6727 = vunpack.c.0.s8 %v6726
        %v6728 = vlaneseq
        %v6729 = vshrl.u32 %v6728, 7
        %v6730 = vsub.s32 %v6727, %v6729
        %v6731 = vrot.slane %v6723, %v6730
        %v6733 = vunpack.c.l.s4 1983009808
        %v6734 = vunpack.c.0.s8 %v6733
        %v6735 = vlaneseq
        %v6736 = vshrl.u32 %v6735, 7
        %v6737 = vsub.s32 %v6734, %v6736
        %v6738 = vrot.slane %v6724, %v6737
        %v6739 = vcombine.low %v6731, %v6738
        %v6740 = vcombine.low %v6201, %v6202
        %v6742 = vunpack.c.l.s4 1983009808
        %v6743 = vunpack.c.0.s8 %v6742
        %v6744 = vlaneseq
        %v6745 = vshrl.u32 %v6744, 7
        %v6746 = vsub.s32 %v6743, %v6745
        %v6747 = vrot.slane %v6740, %v6746
        %v6749 = vunpack.c.l.s4 1983009808
        %v6750 = vunpack.c.0.s8 %v6749
        %v6751 = vlaneseq
        %v6752 = vshrl.u32 %v6751, 7
        %v6753 = vsub.s32 %v6750, %v6752
        %v6754 = vrot.slane %v6203, %v6753
        %v6755 = vcombine.low %v6747, %v6754
        %v6756 = vcombine.low %v6204, %v6205
        %v6757 = vcombine.low %v6206, %v6207
        %v6759 = vunpack.c.l.s4 1983009808
        %v6760 = vunpack.c.0.s8 %v6759
        %v6761 = vlaneseq
        %v6762 = vshrl.u32 %v6761, 7
        %v6763 = vsub.s32 %v6760, %v6762
        %v6764 = vrot.slane %v6756, %v6763
        %v6766 = vunpack.c.l.s4 1983009808
        %v6767 = vunpack.c.0.s8 %v6766
        %v6768 = vlaneseq
        %v6769 = vshrl.u32 %v6768, 7
        %v6770 = vsub.s32 %v6767, %v6769
        %v6771 = vrot.slane %v6757, %v6770
        %v6772 = vcombine.low %v6764, %v6771
        %v6773 = vcombine.low %v6208, %v6209
        %v6775 = vunpack.c.l.s4 1983009808
        %v6776 = vunpack.c.0.s8 %v6775
        %v6777 = vlaneseq
        %v6778 = vshrl.u32 %v6777, 7
        %v6779 = vsub.s32 %v6776, %v6778
        %v6780 = vrot.slane %v6773, %v6779
        %v6782 = vunpack.c.l.s4 1983009808
        %v6783 = vunpack.c.0.s8 %v6782
        %v6784 = vlaneseq
        %v6785 = vshrl.u32 %v6784, 7
        %v6786 = vsub.s32 %v6783, %v6785
        %v6787 = vrot.slane %v6210, %v6786
        %v6788 = vcombine.low %v6780, %v6787
        %v6789 = vcombine.low %v6211, %v6212
        %v6790 = vcombine.low %v6213, %v6214
        %v6792 = vunpack.c.l.s4 1983009808
        %v6793 = vunpack.c.0.s8 %v6792
        %v6794 = vlaneseq
        %v6795 = vshrl.u32 %v6794, 7
        %v6796 = vsub.s32 %v6793, %v6795
        %v6797 = vrot.slane %v6789, %v6796
        %v6799 = vunpack.c.l.s4 1983009808
        %v6800 = vunpack.c.0.s8 %v6799
        %v6801 = vlaneseq
        %v6802 = vshrl.u32 %v6801, 7
        %v6803 = vsub.s32 %v6800, %v6802
        %v6804 = vrot.slane %v6790, %v6803
        %v6805 = vcombine.low %v6797, %v6804
        %v6806 = vcombine.low %v6215, %v6216
        %v6808 = vunpack.c.l.s4 1983009808
        %v6809 = vunpack.c.0.s8 %v6808
        %v6810 = vlaneseq
        %v6811 = vshrl.u32 %v6810, 7
        %v6812 = vsub.s32 %v6809, %v6811
        %v6813 = vrot.slane %v6806, %v6812
        %v6815 = vunpack.c.l.s4 1983009808
        %v6816 = vunpack.c.0.s8 %v6815
        %v6817 = vlaneseq
        %v6818 = vshrl.u32 %v6817, 7
        %v6819 = vsub.s32 %v6816, %v6818
        %v6820 = vrot.slane %v6217, %v6819
        %v6821 = vcombine.low %v6813, %v6820
        %v6822 = vcombine.low %v6218, %v6219
        %v6823 = vcombine.low %v6220, %v6221
        %v6825 = vunpack.c.l.s4 1983009808
        %v6826 = vunpack.c.0.s8 %v6825
        %v6827 = vlaneseq
        %v6828 = vshrl.u32 %v6827, 7
        %v6829 = vsub.s32 %v6826, %v6828
        %v6830 = vrot.slane %v6822, %v6829
        %v6832 = vunpack.c.l.s4 1983009808
        %v6833 = vunpack.c.0.s8 %v6832
        %v6834 = vlaneseq
        %v6835 = vshrl.u32 %v6834, 7
        %v6836 = vsub.s32 %v6833, %v6835
        %v6837 = vrot.slane %v6823, %v6836
        %v6838 = vcombine.low %v6830, %v6837
        %v6839 = vcombine.low %v6222, %v6223
        %v6841 = vunpack.c.l.s4 1983009808
        %v6842 = vunpack.c.0.s8 %v6841
        %v6843 = vlaneseq
        %v6844 = vshrl.u32 %v6843, 7
        %v6845 = vsub.s32 %v6842, %v6844
        %v6846 = vrot.slane %v6839, %v6845
        %v6848 = vunpack.c.l.s4 1983009808
        %v6849 = vunpack.c.0.s8 %v6848
        %v6850 = vlaneseq
        %v6851 = vshrl.u32 %v6850, 7
        %v6852 = vsub.s32 %v6849, %v6851
        %v6853 = vrot.slane %v6224, %v6852
        %v6854 = vcombine.low %v6846, %v6853
        %v6855 = vcombine.low %v6225, %v6226
        %v6856 = vcombine.low %v6227, %v6228
        %v6858 = vunpack.c.l.s4 1983009808
        %v6859 = vunpack.c.0.s8 %v6858
        %v6860 = vlaneseq
        %v6861 = vshrl.u32 %v6860, 7
        %v6862 = vsub.s32 %v6859, %v6861
        %v6863 = vrot.slane %v6855, %v6862
        %v6865 = vunpack.c.l.s4 1983009808
        %v6866 = vunpack.c.0.s8 %v6865
        %v6867 = vlaneseq
        %v6868 = vshrl.u32 %v6867, 7
        %v6869 = vsub.s32 %v6866, %v6868
        %v6870 = vrot.slane %v6856, %v6869
        %v6871 = vcombine.low %v6863, %v6870
        %v6872 = vcombine.low %v6229, %v6230
        %v6874 = vunpack.c.l.s4 1983009808
        %v6875 = vunpack.c.0.s8 %v6874
        %v6876 = vlaneseq
        %v6877 = vshrl.u32 %v6876, 7
        %v6878 = vsub.s32 %v6875, %v6877
        %v6879 = vrot.slane %v6872, %v6878
        %v6881 = vunpack.c.l.s4 1983009808
        %v6882 = vunpack.c.0.s8 %v6881
        %v6883 = vlaneseq
        %v6884 = vshrl.u32 %v6883, 7
        %v6885 = vsub.s32 %v6882, %v6884
        %v6886 = vrot.slane %v6231, %v6885
        %v6887 = vcombine.low %v6879, %v6886
        %v6888 = vcombine.low %v6232, %v6233
        %v6889 = vcombine.low %v6234, %v6235
        %v6891 = vunpack.c.l.s4 1983009808
        %v6892 = vunpack.c.0.s8 %v6891
        %v6893 = vlaneseq
        %v6894 = vshrl.u32 %v6893, 7
        %v6895 = vsub.s32 %v6892, %v6894
        %v6896 = vrot.slane %v6888, %v6895
        %v6898 = vunpack.c.l.s4 1983009808
        %v6899 = vunpack.c.0.s8 %v6898
        %v6900 = vlaneseq
        %v6901 = vshrl.u32 %v6900, 7
        %v6902 = vsub.s32 %v6899, %v6901
        %v6903 = vrot.slane %v6889, %v6902
        %v6904 = vcombine.low %v6896, %v6903
        %v6905 = vcombine.low %v6236, %v6237
        %v6907 = vunpack.c.l.s4 1983009808
        %v6908 = vunpack.c.0.s8 %v6907
        %v6909 = vlaneseq
        %v6910 = vshrl.u32 %v6909, 7
        %v6911 = vsub.s32 %v6908, %v6910
        %v6912 = vrot.slane %v6905, %v6911
        %v6914 = vunpack.c.l.s4 1983009808
        %v6915 = vunpack.c.0.s8 %v6914
        %v6916 = vlaneseq
        %v6917 = vshrl.u32 %v6916, 7
        %v6918 = vsub.s32 %v6915, %v6917
        %v6919 = vrot.slane %v6238, %v6918
        %v6920 = vcombine.low %v6912, %v6919
        %v6921 = vcombine.low %v6239, %v6240
        %v6922 = vcombine.low %v6241, %v6242
        %v6924 = vunpack.c.l.s4 1983009808
        %v6925 = vunpack.c.0.s8 %v6924
        %v6926 = vlaneseq
        %v6927 = vshrl.u32 %v6926, 7
        %v6928 = vsub.s32 %v6925, %v6927
        %v6929 = vrot.slane %v6921, %v6928
        %v6931 = vunpack.c.l.s4 1983009808
        %v6932 = vunpack.c.0.s8 %v6931
        %v6933 = vlaneseq
        %v6934 = vshrl.u32 %v6933, 7
        %v6935 = vsub.s32 %v6932, %v6934
        %v6936 = vrot.slane %v6922, %v6935
        %v6937 = vcombine.low %v6929, %v6936
        %v6938 = vcombine.low %v6243, %v6244
        %v6940 = vunpack.c.l.s4 1983009808
        %v6941 = vunpack.c.0.s8 %v6940
        %v6942 = vlaneseq
        %v6943 = vshrl.u32 %v6942, 7
        %v6944 = vsub.s32 %v6941, %v6943
        %v6945 = vrot.slane %v6938, %v6944
        %v6947 = vunpack.c.l.s4 1983009808
        %v6948 = vunpack.c.0.s8 %v6947
        %v6949 = vlaneseq
        %v6950 = vshrl.u32 %v6949, 7
        %v6951 = vsub.s32 %v6948, %v6950
        %v6952 = vrot.slane %v6245, %v6951
        %v6953 = vcombine.low %v6945, %v6952
        %v6954 = vcombine.low %v6246, %v6247
        %v6955 = vcombine.low %v6248, %v6249
        %v6957 = vunpack.c.l.s4 1983009808
        %v6958 = vunpack.c.0.s8 %v6957
        %v6959 = vlaneseq
        %v6960 = vshrl.u32 %v6959, 7
        %v6961 = vsub.s32 %v6958, %v6960
        %v6962 = vrot.slane %v6954, %v6961
        %v6964 = vunpack.c.l.s4 1983009808
        %v6965 = vunpack.c.0.s8 %v6964
        %v6966 = vlaneseq
        %v6967 = vshrl.u32 %v6966, 7
        %v6968 = vsub.s32 %v6965, %v6967
        %v6969 = vrot.slane %v6955, %v6968
        %v6970 = vcombine.low %v6962, %v6969
        %v6971 = vcombine.low %v6250, %v6251
        %v6973 = vunpack.c.l.s4 1983009808
        %v6974 = vunpack.c.0.s8 %v6973
        %v6975 = vlaneseq
        %v6976 = vshrl.u32 %v6975, 7
        %v6977 = vsub.s32 %v6974, %v6976
        %v6978 = vrot.slane %v6971, %v6977
        %v6980 = vunpack.c.l.s4 1983009808
        %v6981 = vunpack.c.0.s8 %v6980
        %v6982 = vlaneseq
        %v6983 = vshrl.u32 %v6982, 7
        %v6984 = vsub.s32 %v6981, %v6983
        %v6985 = vrot.slane %v6252, %v6984
        %v6986 = vcombine.low %v6978, %v6985
        %v6987 = vcombine.low %v6253, %v6254
        %v6988 = vcombine.low %v6255, %v6256
        %v6990 = vunpack.c.l.s4 1983009808
        %v6991 = vunpack.c.0.s8 %v6990
        %v6992 = vlaneseq
        %v6993 = vshrl.u32 %v6992, 7
        %v6994 = vsub.s32 %v6991, %v6993
        %v6995 = vrot.slane %v6987, %v6994
        %v6997 = vunpack.c.l.s4 1983009808
        %v6998 = vunpack.c.0.s8 %v6997
        %v6999 = vlaneseq
        %v7000 = vshrl.u32 %v6999, 7
        %v7001 = vsub.s32 %v6998, %v7000
        %v7002 = vrot.slane %v6988, %v7001
        %v7003 = vcombine.low %v6995, %v7002
        %v7004 = vcombine.low %v6257, %v6258
        %v7006 = vunpack.c.l.s4 1983009808
        %v7007 = vunpack.c.0.s8 %v7006
        %v7008 = vlaneseq
        %v7009 = vshrl.u32 %v7008, 7
        %v7010 = vsub.s32 %v7007, %v7009
        %v7011 = vrot.slane %v7004, %v7010
        %v7013 = vunpack.c.l.s4 1983009808
        %v7014 = vunpack.c.0.s8 %v7013
        %v7015 = vlaneseq
        %v7016 = vshrl.u32 %v7015, 7
        %v7017 = vsub.s32 %v7014, %v7016
        %v7018 = vrot.slane %v6259, %v7017
        %v7019 = vcombine.low %v7011, %v7018
        %v7020 = vcombine.low %v6260, %v6261
        %v7021 = vcombine.low %v6262, %v6263
        %v7023 = vunpack.c.l.s4 1983009808
        %v7024 = vunpack.c.0.s8 %v7023
        %v7025 = vlaneseq
        %v7026 = vshrl.u32 %v7025, 7
        %v7027 = vsub.s32 %v7024, %v7026
        %v7028 = vrot.slane %v7020, %v7027
        %v7030 = vunpack.c.l.s4 1983009808
        %v7031 = vunpack.c.0.s8 %v7030
        %v7032 = vlaneseq
        %v7033 = vshrl.u32 %v7032, 7
        %v7034 = vsub.s32 %v7031, %v7033
        %v7035 = vrot.slane %v7021, %v7034
        %v7036 = vcombine.low %v7028, %v7035
        %v7037 = vcombine.low %v6264, %v6265
        %v7039 = vunpack.c.l.s4 1983009808
        %v7040 = vunpack.c.0.s8 %v7039
        %v7041 = vlaneseq
        %v7042 = vshrl.u32 %v7041, 7
        %v7043 = vsub.s32 %v7040, %v7042
        %v7044 = vrot.slane %v7037, %v7043
        %v7046 = vunpack.c.l.s4 1983009808
        %v7047 = vunpack.c.0.s8 %v7046
        %v7048 = vlaneseq
        %v7049 = vshrl.u32 %v7048, 7
        %v7050 = vsub.s32 %v7047, %v7049
        %v7051 = vrot.slane %v6266, %v7050
        %v7052 = vcombine.low %v7044, %v7051
        %v7053 = vcombine.low %v6267, %v6268
        %v7054 = vcombine.low %v6269, %v6270
        %v7056 = vunpack.c.l.s4 1983009808
        %v7057 = vunpack.c.0.s8 %v7056
        %v7058 = vlaneseq
        %v7059 = vshrl.u32 %v7058, 7
        %v7060 = vsub.s32 %v7057, %v7059
        %v7061 = vrot.slane %v7053, %v7060
        %v7063 = vunpack.c.l.s4 1983009808
        %v7064 = vunpack.c.0.s8 %v7063
        %v7065 = vlaneseq
        %v7066 = vshrl.u32 %v7065, 7
        %v7067 = vsub.s32 %v7064, %v7066
        %v7068 = vrot.slane %v7054, %v7067
        %v7069 = vcombine.low %v7061, %v7068
        %v7070 = vcombine.low %v6271, %v6272
        %v7072 = vunpack.c.l.s4 1983009808
        %v7073 = vunpack.c.0.s8 %v7072
        %v7074 = vlaneseq
        %v7075 = vshrl.u32 %v7074, 7
        %v7076 = vsub.s32 %v7073, %v7075
        %v7077 = vrot.slane %v7070, %v7076
        %v7079 = vunpack.c.l.s4 1983009808
        %v7080 = vunpack.c.0.s8 %v7079
        %v7081 = vlaneseq
        %v7082 = vshrl.u32 %v7081, 7
        %v7083 = vsub.s32 %v7080, %v7082
        %v7084 = vrot.slane %v6273, %v7083
        %v7085 = vcombine.low %v7077, %v7084
        %v7086 = vcombine.low %v6274, %v6275
        %v7087 = vcombine.low %v6276, %v6277
        %v7089 = vunpack.c.l.s4 1983009808
        %v7090 = vunpack.c.0.s8 %v7089
        %v7091 = vlaneseq
        %v7092 = vshrl.u32 %v7091, 7
        %v7093 = vsub.s32 %v7090, %v7092
        %v7094 = vrot.slane %v7086, %v7093
        %v7096 = vunpack.c.l.s4 1983009808
        %v7097 = vunpack.c.0.s8 %v7096
        %v7098 = vlaneseq
        %v7099 = vshrl.u32 %v7098, 7
        %v7100 = vsub.s32 %v7097, %v7099
        %v7101 = vrot.slane %v7087, %v7100
        %v7102 = vcombine.low %v7094, %v7101
        %v7103 = vcombine.low %v6278, %v6279
        %v7105 = vunpack.c.l.s4 1983009808
        %v7106 = vunpack.c.0.s8 %v7105
        %v7107 = vlaneseq
        %v7108 = vshrl.u32 %v7107, 7
        %v7109 = vsub.s32 %v7106, %v7108
        %v7110 = vrot.slane %v7103, %v7109
        %v7112 = vunpack.c.l.s4 1983009808
        %v7113 = vunpack.c.0.s8 %v7112
        %v7114 = vlaneseq
        %v7115 = vshrl.u32 %v7114, 7
        %v7116 = vsub.s32 %v7113, %v7115
        %v7117 = vrot.slane %v6280, %v7116
        %v7118 = vcombine.low %v7110, %v7117
        %v7119 = vcombine.low %v6281, %v6282
        %v7120 = vcombine.low %v6283, %v6284
        %v7122 = vunpack.c.l.s4 1983009808
        %v7123 = vunpack.c.0.s8 %v7122
        %v7124 = vlaneseq
        %v7125 = vshrl.u32 %v7124, 7
        %v7126 = vsub.s32 %v7123, %v7125
        %v7127 = vrot.slane %v7119, %v7126
        %v7129 = vunpack.c.l.s4 1983009808
        %v7130 = vunpack.c.0.s8 %v7129
        %v7131 = vlaneseq
        %v7132 = vshrl.u32 %v7131, 7
        %v7133 = vsub.s32 %v7130, %v7132
        %v7134 = vrot.slane %v7120, %v7133
        %v7135 = vcombine.low %v7127, %v7134
        %v7136 = vcombine.low %v6285, %v6286
        %v7138 = vunpack.c.l.s4 1983009808
        %v7139 = vunpack.c.0.s8 %v7138
        %v7140 = vlaneseq
        %v7141 = vshrl.u32 %v7140, 7
        %v7142 = vsub.s32 %v7139, %v7141
        %v7143 = vrot.slane %v7136, %v7142
        %v7145 = vunpack.c.l.s4 1983009808
        %v7146 = vunpack.c.0.s8 %v7145
        %v7147 = vlaneseq
        %v7148 = vshrl.u32 %v7147, 7
        %v7149 = vsub.s32 %v7146, %v7148
        %v7150 = vrot.slane %v6287, %v7149
        %v7151 = vcombine.low %v7143, %v7150
        %v7152 = vcombine.low %v6288, %v6289
        %v7153 = vcombine.low %v6290, %v6291
        %v7155 = vunpack.c.l.s4 1983009808
        %v7156 = vunpack.c.0.s8 %v7155
        %v7157 = vlaneseq
        %v7158 = vshrl.u32 %v7157, 7
        %v7159 = vsub.s32 %v7156, %v7158
        %v7160 = vrot.slane %v7152, %v7159
        %v7162 = vunpack.c.l.s4 1983009808
        %v7163 = vunpack.c.0.s8 %v7162
        %v7164 = vlaneseq
        %v7165 = vshrl.u32 %v7164, 7
        %v7166 = vsub.s32 %v7163, %v7165
        %v7167 = vrot.slane %v7153, %v7166
        %v7168 = vcombine.low %v7160, %v7167
        %v7169 = vcombine.low %v6292, %v6293
        %v7171 = vunpack.c.l.s4 1983009808
        %v7172 = vunpack.c.0.s8 %v7171
        %v7173 = vlaneseq
        %v7174 = vshrl.u32 %v7173, 7
        %v7175 = vsub.s32 %v7172, %v7174
        %v7176 = vrot.slane %v7169, %v7175
        %v7178 = vunpack.c.l.s4 1983009808
        %v7179 = vunpack.c.0.s8 %v7178
        %v7180 = vlaneseq
        %v7181 = vshrl.u32 %v7180, 7
        %v7182 = vsub.s32 %v7179, %v7181
        %v7183 = vrot.slane %v6294, %v7182
        %v7184 = vcombine.low %v7176, %v7183
        %v7185 = vcombine.low %v6295, %v6296
        %v7186 = vcombine.low %v6297, %v6298
        %v7188 = vunpack.c.l.s4 1983009808
        %v7189 = vunpack.c.0.s8 %v7188
        %v7190 = vlaneseq
        %v7191 = vshrl.u32 %v7190, 7
        %v7192 = vsub.s32 %v7189, %v7191
        %v7193 = vrot.slane %v7185, %v7192
        %v7195 = vunpack.c.l.s4 1983009808
        %v7196 = vunpack.c.0.s8 %v7195
        %v7197 = vlaneseq
        %v7198 = vshrl.u32 %v7197, 7
        %v7199 = vsub.s32 %v7196, %v7198
        %v7200 = vrot.slane %v7186, %v7199
        %v7201 = vcombine.low %v7193, %v7200
        %v7202 = vcombine.low %v6299, %v6300
        %v7204 = vunpack.c.l.s4 1983009808
        %v7205 = vunpack.c.0.s8 %v7204
        %v7206 = vlaneseq
        %v7207 = vshrl.u32 %v7206, 7
        %v7208 = vsub.s32 %v7205, %v7207
        %v7209 = vrot.slane %v7202, %v7208
        %v7211 = vunpack.c.l.s4 1983009808
        %v7212 = vunpack.c.0.s8 %v7211
        %v7213 = vlaneseq
        %v7214 = vshrl.u32 %v7213, 7
        %v7215 = vsub.s32 %v7212, %v7214
        %v7216 = vrot.slane %v6301, %v7215
        %v7217 = vcombine.low %v7209, %v7216
        %v7218 = vcombine.low %v6302, %v6303
        %v7219 = vcombine.low %v6304, %v6305
        %v7221 = vunpack.c.l.s4 1983009808
        %v7222 = vunpack.c.0.s8 %v7221
        %v7223 = vlaneseq
        %v7224 = vshrl.u32 %v7223, 7
        %v7225 = vsub.s32 %v7222, %v7224
        %v7226 = vrot.slane %v7218, %v7225
        %v7228 = vunpack.c.l.s4 1983009808
        %v7229 = vunpack.c.0.s8 %v7228
        %v7230 = vlaneseq
        %v7231 = vshrl.u32 %v7230, 7
        %v7232 = vsub.s32 %v7229, %v7231
        %v7233 = vrot.slane %v7219, %v7232
        %v7234 = vcombine.low %v7226, %v7233
        %v7235 = vcombine.low %v6306, %v6307
        %v7237 = vunpack.c.l.s4 1983009808
        %v7238 = vunpack.c.0.s8 %v7237
        %v7239 = vlaneseq
        %v7240 = vshrl.u32 %v7239, 7
        %v7241 = vsub.s32 %v7238, %v7240
        %v7242 = vrot.slane %v7235, %v7241
        %v7244 = vunpack.c.l.s4 1983009808
        %v7245 = vunpack.c.0.s8 %v7244
        %v7246 = vlaneseq
        %v7247 = vshrl.u32 %v7246, 7
        %v7248 = vsub.s32 %v7245, %v7247
        %v7249 = vrot.slane %v6308, %v7248
        %v7250 = vcombine.low %v7242, %v7249
        %v7251 = vcombine.low %v6309, %v6310
        %v7252 = vcombine.low %v6311, %v6312
        %v7254 = vunpack.c.l.s4 1983009808
        %v7255 = vunpack.c.0.s8 %v7254
        %v7256 = vlaneseq
        %v7257 = vshrl.u32 %v7256, 7
        %v7258 = vsub.s32 %v7255, %v7257
        %v7259 = vrot.slane %v7251, %v7258
        %v7261 = vunpack.c.l.s4 1983009808
        %v7262 = vunpack.c.0.s8 %v7261
        %v7263 = vlaneseq
        %v7264 = vshrl.u32 %v7263, 7
        %v7265 = vsub.s32 %v7262, %v7264
        %v7266 = vrot.slane %v7252, %v7265
        %v7267 = vcombine.low %v7259, %v7266
        %v7268 = vcombine.low %v6313, %v6314
        %v7270 = vunpack.c.l.s4 1983009808
        %v7271 = vunpack.c.0.s8 %v7270
        %v7272 = vlaneseq
        %v7273 = vshrl.u32 %v7272, 7
        %v7274 = vsub.s32 %v7271, %v7273
        %v7275 = vrot.slane %v7268, %v7274
        %v7277 = vunpack.c.l.s4 1983009808
        %v7278 = vunpack.c.0.s8 %v7277
        %v7279 = vlaneseq
        %v7280 = vshrl.u32 %v7279, 7
        %v7281 = vsub.s32 %v7278, %v7280
        %v7282 = vrot.slane %v6315, %v7281
        %v7283 = vcombine.low %v7275, %v7282
        %v7284 = vcombine.low %v6316, %v6317
        %v7285 = vcombine.low %v6318, %v6319
        %v7287 = vunpack.c.l.s4 1983009808
        %v7288 = vunpack.c.0.s8 %v7287
        %v7289 = vlaneseq
        %v7290 = vshrl.u32 %v7289, 7
        %v7291 = vsub.s32 %v7288, %v7290
        %v7292 = vrot.slane %v7284, %v7291
        %v7294 = vunpack.c.l.s4 1983009808
        %v7295 = vunpack.c.0.s8 %v7294
        %v7296 = vlaneseq
        %v7297 = vshrl.u32 %v7296, 7
        %v7298 = vsub.s32 %v7295, %v7297
        %v7299 = vrot.slane %v7285, %v7298
        %v7300 = vcombine.low %v7292, %v7299
        %v7301 = vcombine.low %v6320, %v6321
        %v7303 = vunpack.c.l.s4 1983009808
        %v7304 = vunpack.c.0.s8 %v7303
        %v7305 = vlaneseq
        %v7306 = vshrl.u32 %v7305, 7
        %v7307 = vsub.s32 %v7304, %v7306
        %v7308 = vrot.slane %v7301, %v7307
        %v7310 = vunpack.c.l.s4 1983009808
        %v7311 = vunpack.c.0.s8 %v7310
        %v7312 = vlaneseq
        %v7313 = vshrl.u32 %v7312, 7
        %v7314 = vsub.s32 %v7311, %v7313
        %v7315 = vrot.slane %v6322, %v7314
        %v7316 = vcombine.low %v7308, %v7315
        %v7317 = vcombine.low %v6323, %v6324
        %v7318 = vcombine.low %v6325, %v6326
        %v7320 = vunpack.c.l.s4 1983009808
        %v7321 = vunpack.c.0.s8 %v7320
        %v7322 = vlaneseq
        %v7323 = vshrl.u32 %v7322, 7
        %v7324 = vsub.s32 %v7321, %v7323
        %v7325 = vrot.slane %v7317, %v7324
        %v7327 = vunpack.c.l.s4 1983009808
        %v7328 = vunpack.c.0.s8 %v7327
        %v7329 = vlaneseq
        %v7330 = vshrl.u32 %v7329, 7
        %v7331 = vsub.s32 %v7328, %v7330
        %v7332 = vrot.slane %v7318, %v7331
        %v7333 = vcombine.low %v7325, %v7332
        %v7334 = vcombine.low %v6327, %v6328
        %v7336 = vunpack.c.l.s4 1983009808
        %v7337 = vunpack.c.0.s8 %v7336
        %v7338 = vlaneseq
        %v7339 = vshrl.u32 %v7338, 7
        %v7340 = vsub.s32 %v7337, %v7339
        %v7341 = vrot.slane %v7334, %v7340
        %v7343 = vunpack.c.l.s4 1983009808
        %v7344 = vunpack.c.0.s8 %v7343
        %v7345 = vlaneseq
        %v7346 = vshrl.u32 %v7345, 7
        %v7347 = vsub.s32 %v7344, %v7346
        %v7348 = vrot.slane %v6329, %v7347
        %v7349 = vcombine.low %v7341, %v7348
        %v7350 = vcombine.low %v6330, %v6331
        %v7351 = vcombine.low %v6332, %v6333
        %v7353 = vunpack.c.l.s4 1983009808
        %v7354 = vunpack.c.0.s8 %v7353
        %v7355 = vlaneseq
        %v7356 = vshrl.u32 %v7355, 7
        %v7357 = vsub.s32 %v7354, %v7356
        %v7358 = vrot.slane %v7350, %v7357
        %v7360 = vunpack.c.l.s4 1983009808
        %v7361 = vunpack.c.0.s8 %v7360
        %v7362 = vlaneseq
        %v7363 = vshrl.u32 %v7362, 7
        %v7364 = vsub.s32 %v7361, %v7363
        %v7365 = vrot.slane %v7351, %v7364
        %v7366 = vcombine.low %v7358, %v7365
        %v7367 = vcombine.low %v6334, %v6335
        %v7369 = vunpack.c.l.s4 1983009808
        %v7370 = vunpack.c.0.s8 %v7369
        %v7371 = vlaneseq
        %v7372 = vshrl.u32 %v7371, 7
        %v7373 = vsub.s32 %v7370, %v7372
        %v7374 = vrot.slane %v7367, %v7373
        %v7376 = vunpack.c.l.s4 1983009808
        %v7377 = vunpack.c.0.s8 %v7376
        %v7378 = vlaneseq
        %v7379 = vshrl.u32 %v7378, 7
        %v7380 = vsub.s32 %v7377, %v7379
        %v7381 = vrot.slane %v6336, %v7380
        %v7382 = vcombine.low %v7374, %v7381
        %v7383 = vcombine.low %v6337, %v6338
        %v7384 = vcombine.low %v6339, %v6340
        %v7386 = vunpack.c.l.s4 1983009808
        %v7387 = vunpack.c.0.s8 %v7386
        %v7388 = vlaneseq
        %v7389 = vshrl.u32 %v7388, 7
        %v7390 = vsub.s32 %v7387, %v7389
        %v7391 = vrot.slane %v7383, %v7390
        %v7393 = vunpack.c.l.s4 1983009808
        %v7394 = vunpack.c.0.s8 %v7393
        %v7395 = vlaneseq
        %v7396 = vshrl.u32 %v7395, 7
        %v7397 = vsub.s32 %v7394, %v7396
        %v7398 = vrot.slane %v7384, %v7397
        %v7399 = vcombine.low %v7391, %v7398
        %v7400 = vcombine.low %v6341, %v6342
        %v7402 = vunpack.c.l.s4 1983009808
        %v7403 = vunpack.c.0.s8 %v7402
        %v7404 = vlaneseq
        %v7405 = vshrl.u32 %v7404, 7
        %v7406 = vsub.s32 %v7403, %v7405
        %v7407 = vrot.slane %v7400, %v7406
        %v7409 = vunpack.c.l.s4 1983009808
        %v7410 = vunpack.c.0.s8 %v7409
        %v7411 = vlaneseq
        %v7412 = vshrl.u32 %v7411, 7
        %v7413 = vsub.s32 %v7410, %v7412
        %v7414 = vrot.slane %v6343, %v7413
        %v7415 = vcombine.low %v7407, %v7414
        %v7416 = vcombine.low %v6344, %v6345
        %v7417 = vcombine.low %v6346, %v6347
        %v7419 = vunpack.c.l.s4 1983009808
        %v7420 = vunpack.c.0.s8 %v7419
        %v7421 = vlaneseq
        %v7422 = vshrl.u32 %v7421, 7
        %v7423 = vsub.s32 %v7420, %v7422
        %v7424 = vrot.slane %v7416, %v7423
        %v7426 = vunpack.c.l.s4 1983009808
        %v7427 = vunpack.c.0.s8 %v7426
        %v7428 = vlaneseq
        %v7429 = vshrl.u32 %v7428, 7
        %v7430 = vsub.s32 %v7427, %v7429
        %v7431 = vrot.slane %v7417, %v7430
        %v7432 = vcombine.low %v7424, %v7431
        %v7433 = vcombine.low %v6348, %v6349
        %v7435 = vunpack.c.l.s4 1983009808
        %v7436 = vunpack.c.0.s8 %v7435
        %v7437 = vlaneseq
        %v7438 = vshrl.u32 %v7437, 7
        %v7439 = vsub.s32 %v7436, %v7438
        %v7440 = vrot.slane %v7433, %v7439
        %v7442 = vunpack.c.l.s4 1983009808
        %v7443 = vunpack.c.0.s8 %v7442
        %v7444 = vlaneseq
        %v7445 = vshrl.u32 %v7444, 7
        %v7446 = vsub.s32 %v7443, %v7445
        %v7447 = vrot.slane %v6350, %v7446
        %v7448 = vcombine.low %v7440, %v7447
        %v7449 = vcombine.low %v6351, %v6352
        %v7450 = vcombine.low %v6353, %v6354
        %v7452 = vunpack.c.l.s4 1983009808
        %v7453 = vunpack.c.0.s8 %v7452
        %v7454 = vlaneseq
        %v7455 = vshrl.u32 %v7454, 7
        %v7456 = vsub.s32 %v7453, %v7455
        %v7457 = vrot.slane %v7449, %v7456
        %v7459 = vunpack.c.l.s4 1983009808
        %v7460 = vunpack.c.0.s8 %v7459
        %v7461 = vlaneseq
        %v7462 = vshrl.u32 %v7461, 7
        %v7463 = vsub.s32 %v7460, %v7462
        %v7464 = vrot.slane %v7450, %v7463
        %v7465 = vcombine.low %v7457, %v7464
        %v7466 = vcombine.low %v6355, %v6356
        %v7468 = vunpack.c.l.s4 1983009808
        %v7469 = vunpack.c.0.s8 %v7468
        %v7470 = vlaneseq
        %v7471 = vshrl.u32 %v7470, 7
        %v7472 = vsub.s32 %v7469, %v7471
        %v7473 = vrot.slane %v7466, %v7472
        %v7475 = vunpack.c.l.s4 1983009808
        %v7476 = vunpack.c.0.s8 %v7475
        %v7477 = vlaneseq
        %v7478 = vshrl.u32 %v7477, 7
        %v7479 = vsub.s32 %v7476, %v7478
        %v7480 = vrot.slane %v6357, %v7479
        %v7481 = vcombine.low %v7473, %v7480
        %v7482 = vcombine.low %v6358, %v6359
        %v7483 = vcombine.low %v6360, %v6361
        %v7485 = vunpack.c.l.s4 1983009808
        %v7486 = vunpack.c.0.s8 %v7485
        %v7487 = vlaneseq
        %v7488 = vshrl.u32 %v7487, 7
        %v7489 = vsub.s32 %v7486, %v7488
        %v7490 = vrot.slane %v7482, %v7489
        %v7492 = vunpack.c.l.s4 1983009808
        %v7493 = vunpack.c.0.s8 %v7492
        %v7494 = vlaneseq
        %v7495 = vshrl.u32 %v7494, 7
        %v7496 = vsub.s32 %v7493, %v7495
        %v7497 = vrot.slane %v7483, %v7496
        %v7498 = vcombine.low %v7490, %v7497
        %v7499 = vcombine.low %v6362, %v6363
        %v7501 = vunpack.c.l.s4 1983009808
        %v7502 = vunpack.c.0.s8 %v7501
        %v7503 = vlaneseq
        %v7504 = vshrl.u32 %v7503, 7
        %v7505 = vsub.s32 %v7502, %v7504
        %v7506 = vrot.slane %v7499, %v7505
        %v7508 = vunpack.c.l.s4 1983009808
        %v7509 = vunpack.c.0.s8 %v7508
        %v7510 = vlaneseq
        %v7511 = vshrl.u32 %v7510, 7
        %v7512 = vsub.s32 %v7509, %v7511
        %v7513 = vrot.slane %v6364, %v7512
        %v7514 = vcombine.low %v7506, %v7513
        %v7515 = vcombine.low %v6365, %v6366
        %v7516 = vcombine.low %v6367, %v6368
        %v7518 = vunpack.c.l.s4 1983009808
        %v7519 = vunpack.c.0.s8 %v7518
        %v7520 = vlaneseq
        %v7521 = vshrl.u32 %v7520, 7
        %v7522 = vsub.s32 %v7519, %v7521
        %v7523 = vrot.slane %v7515, %v7522
        %v7525 = vunpack.c.l.s4 1983009808
        %v7526 = vunpack.c.0.s8 %v7525
        %v7527 = vlaneseq
        %v7528 = vshrl.u32 %v7527, 7
        %v7529 = vsub.s32 %v7526, %v7528
        %v7530 = vrot.slane %v7516, %v7529
        %v7531 = vcombine.low %v7523, %v7530
        %v7532 = vcombine.low %v6369, %v6370
        %v7534 = vunpack.c.l.s4 1983009808
        %v7535 = vunpack.c.0.s8 %v7534
        %v7536 = vlaneseq
        %v7537 = vshrl.u32 %v7536, 7
        %v7538 = vsub.s32 %v7535, %v7537
        %v7539 = vrot.slane %v7532, %v7538
        %v7541 = vunpack.c.l.s4 1983009808
        %v7542 = vunpack.c.0.s8 %v7541
        %v7543 = vlaneseq
        %v7544 = vshrl.u32 %v7543, 7
        %v7545 = vsub.s32 %v7542, %v7544
        %v7546 = vrot.slane %v6371, %v7545
        %v7547 = vcombine.low %v7539, %v7546
        %v7548 = vcombine.low %v6372, %v6373
        %v7549 = vcombine.low %v6374, %v6375
        %v7551 = vunpack.c.l.s4 1983009808
        %v7552 = vunpack.c.0.s8 %v7551
        %v7553 = vlaneseq
        %v7554 = vshrl.u32 %v7553, 7
        %v7555 = vsub.s32 %v7552, %v7554
        %v7556 = vrot.slane %v7548, %v7555
        %v7558 = vunpack.c.l.s4 1983009808
        %v7559 = vunpack.c.0.s8 %v7558
        %v7560 = vlaneseq
        %v7561 = vshrl.u32 %v7560, 7
        %v7562 = vsub.s32 %v7559, %v7561
        %v7563 = vrot.slane %v7549, %v7562
        %v7564 = vcombine.low %v7556, %v7563
        %v7565 = vcombine.low %v6376, %v6377
        %v7567 = vunpack.c.l.s4 1983009808
        %v7568 = vunpack.c.0.s8 %v7567
        %v7569 = vlaneseq
        %v7570 = vshrl.u32 %v7569, 7
        %v7571 = vsub.s32 %v7568, %v7570
        %v7572 = vrot.slane %v7565, %v7571
        %v7574 = vunpack.c.l.s4 1983009808
        %v7575 = vunpack.c.0.s8 %v7574
        %v7576 = vlaneseq
        %v7577 = vshrl.u32 %v7576, 7
        %v7578 = vsub.s32 %v7575, %v7577
        %v7579 = vrot.slane %v6378, %v7578
        %v7580 = vcombine.low %v7572, %v7579
        %v7581 = vcombine.low %v6379, %v6380
        %v7582 = vcombine.low %v6381, %v6382
        %v7584 = vunpack.c.l.s4 1983009808
        %v7585 = vunpack.c.0.s8 %v7584
        %v7586 = vlaneseq
        %v7587 = vshrl.u32 %v7586, 7
        %v7588 = vsub.s32 %v7585, %v7587
        %v7589 = vrot.slane %v7581, %v7588
        %v7591 = vunpack.c.l.s4 1983009808
        %v7592 = vunpack.c.0.s8 %v7591
        %v7593 = vlaneseq
        %v7594 = vshrl.u32 %v7593, 7
        %v7595 = vsub.s32 %v7592, %v7594
        %v7596 = vrot.slane %v7582, %v7595
        %v7597 = vcombine.low %v7589, %v7596
        %v7598 = vcombine.low %v6383, %v6384
        %v7600 = vunpack.c.l.s4 1983009808
        %v7601 = vunpack.c.0.s8 %v7600
        %v7602 = vlaneseq
        %v7603 = vshrl.u32 %v7602, 7
        %v7604 = vsub.s32 %v7601, %v7603
        %v7605 = vrot.slane %v7598, %v7604
        %v7607 = vunpack.c.l.s4 1983009808
        %v7608 = vunpack.c.0.s8 %v7607
        %v7609 = vlaneseq
        %v7610 = vshrl.u32 %v7609, 7
        %v7611 = vsub.s32 %v7608, %v7610
        %v7612 = vrot.slane %v6385, %v7611
        %v7613 = vcombine.low %v7605, %v7612
        %v7614 = vcombine.low %v6386, %v6387
        %v7615 = vcombine.low %v6388, %v6389
        %v7617 = vunpack.c.l.s4 1983009808
        %v7618 = vunpack.c.0.s8 %v7617
        %v7619 = vlaneseq
        %v7620 = vshrl.u32 %v7619, 7
        %v7621 = vsub.s32 %v7618, %v7620
        %v7622 = vrot.slane %v7614, %v7621
        %v7624 = vunpack.c.l.s4 1983009808
        %v7625 = vunpack.c.0.s8 %v7624
        %v7626 = vlaneseq
        %v7627 = vshrl.u32 %v7626, 7
        %v7628 = vsub.s32 %v7625, %v7627
        %v7629 = vrot.slane %v7615, %v7628
        %v7630 = vcombine.low %v7622, %v7629
        %v7631 = vcombine.low %v6390, %v6391
        %v7633 = vunpack.c.l.s4 1983009808
        %v7634 = vunpack.c.0.s8 %v7633
        %v7635 = vlaneseq
        %v7636 = vshrl.u32 %v7635, 7
        %v7637 = vsub.s32 %v7634, %v7636
        %v7638 = vrot.slane %v7631, %v7637
        %v7640 = vunpack.c.l.s4 1983009808
        %v7641 = vunpack.c.0.s8 %v7640
        %v7642 = vlaneseq
        %v7643 = vshrl.u32 %v7642, 7
        %v7644 = vsub.s32 %v7641, %v7643
        %v7645 = vrot.slane %v6392, %v7644
        %v7646 = vcombine.low %v7638, %v7645
        %v7647 = vcombine.low %v6393, %v6394
        %v7648 = vcombine.low %v6395, %v6396
        %v7650 = vunpack.c.l.s4 1983009808
        %v7651 = vunpack.c.0.s8 %v7650
        %v7652 = vlaneseq
        %v7653 = vshrl.u32 %v7652, 7
        %v7654 = vsub.s32 %v7651, %v7653
        %v7655 = vrot.slane %v7647, %v7654
        %v7657 = vunpack.c.l.s4 1983009808
        %v7658 = vunpack.c.0.s8 %v7657
        %v7659 = vlaneseq
        %v7660 = vshrl.u32 %v7659, 7
        %v7661 = vsub.s32 %v7658, %v7660
        %v7662 = vrot.slane %v7648, %v7661
        %v7663 = vcombine.low %v7655, %v7662
        %v7664 = vcombine.low %v6397, %v6398
        %v7666 = vunpack.c.l.s4 1983009808
        %v7667 = vunpack.c.0.s8 %v7666
        %v7668 = vlaneseq
        %v7669 = vshrl.u32 %v7668, 7
        %v7670 = vsub.s32 %v7667, %v7669
        %v7671 = vrot.slane %v7664, %v7670
        %v7673 = vunpack.c.l.s4 1983009808
        %v7674 = vunpack.c.0.s8 %v7673
        %v7675 = vlaneseq
        %v7676 = vshrl.u32 %v7675, 7
        %v7677 = vsub.s32 %v7674, %v7676
        %v7678 = vrot.slane %v6399, %v7677
        %v7679 = vcombine.low %v7671, %v7678
        %v7744 = vsel %vm774, %v6656, -inf
        %v7745 = vmax.f32 %v6640, %v7744
        %v7746 = vrot.slane %v7745, 4
        %v7747 = vmax.f32 %v7745, %v7746
        %v7748 = vrot.slane %v7747, 2
        %v7749 = vmax.f32 %v7747, %v7748
        %v7750 = vrot.slane %v7749, 1
        %v7751 = vmax.f32 %v7749, %v7750
        %v7752 = vsel %vm774, %v6689, -inf
        %v7753 = vmax.f32 %v6673, %v7752
        %v7754 = vrot.slane %v7753, 4
        %v7755 = vmax.f32 %v7753, %v7754
        %v7756 = vrot.slane %v7755, 2
        %v7757 = vmax.f32 %v7755, %v7756
        %v7758 = vrot.slane %v7757, 1
        %v7759 = vmax.f32 %v7757, %v7758
        %v7760 = vsel %vm774, %v6722, -inf
        %v7761 = vmax.f32 %v6706, %v7760
        %v7762 = vrot.slane %v7761, 4
        %v7763 = vmax.f32 %v7761, %v7762
        %v7764 = vrot.slane %v7763, 2
        %v7765 = vmax.f32 %v7763, %v7764
        %v7766 = vrot.slane %v7765, 1
        %v7767 = vmax.f32 %v7765, %v7766
        %v7768 = vsel %vm774, %v6755, -inf
        %v7769 = vmax.f32 %v6739, %v7768
        %v7770 = vrot.slane %v7769, 4
        %v7771 = vmax.f32 %v7769, %v7770
        %v7772 = vrot.slane %v7771, 2
        %v7773 = vmax.f32 %v7771, %v7772
        %v7774 = vrot.slane %v7773, 1
        %v7775 = vmax.f32 %v7773, %v7774
        %v7776 = vsel %vm774, %v6788, -inf
        %v7777 = vmax.f32 %v6772, %v7776
        %v7778 = vrot.slane %v7777, 4
        %v7779 = vmax.f32 %v7777, %v7778
        %v7780 = vrot.slane %v7779, 2
        %v7781 = vmax.f32 %v7779, %v7780
        %v7782 = vrot.slane %v7781, 1
        %v7783 = vmax.f32 %v7781, %v7782
        %v7784 = vsel %vm774, %v6821, -inf
        %v7785 = vmax.f32 %v6805, %v7784
        %v7786 = vrot.slane %v7785, 4
        %v7787 = vmax.f32 %v7785, %v7786
        %v7788 = vrot.slane %v7787, 2
        %v7789 = vmax.f32 %v7787, %v7788
        %v7790 = vrot.slane %v7789, 1
        %v7791 = vmax.f32 %v7789, %v7790
        %v7792 = vsel %vm774, %v6854, -inf
        %v7793 = vmax.f32 %v6838, %v7792
        %v7794 = vrot.slane %v7793, 4
        %v7795 = vmax.f32 %v7793, %v7794
        %v7796 = vrot.slane %v7795, 2
        %v7797 = vmax.f32 %v7795, %v7796
        %v7798 = vrot.slane %v7797, 1
        %v7799 = vmax.f32 %v7797, %v7798
        %v7800 = vsel %vm774, %v6887, -inf
        %v7801 = vmax.f32 %v6871, %v7800
        %v7802 = vrot.slane %v7801, 4
        %v7803 = vmax.f32 %v7801, %v7802
        %v7804 = vrot.slane %v7803, 2
        %v7805 = vmax.f32 %v7803, %v7804
        %v7806 = vrot.slane %v7805, 1
        %v7807 = vmax.f32 %v7805, %v7806
        %v7808 = vsel %vm774, %v6920, -inf
        %v7809 = vmax.f32 %v6904, %v7808
        %v7810 = vrot.slane %v7809, 4
        %v7811 = vmax.f32 %v7809, %v7810
        %v7812 = vrot.slane %v7811, 2
        %v7813 = vmax.f32 %v7811, %v7812
        %v7814 = vrot.slane %v7813, 1
        %v7815 = vmax.f32 %v7813, %v7814
        %v7816 = vsel %vm774, %v6953, -inf
        %v7817 = vmax.f32 %v6937, %v7816
        %v7818 = vrot.slane %v7817, 4
        %v7819 = vmax.f32 %v7817, %v7818
        %v7820 = vrot.slane %v7819, 2
        %v7821 = vmax.f32 %v7819, %v7820
        %v7822 = vrot.slane %v7821, 1
        %v7823 = vmax.f32 %v7821, %v7822
        %v7824 = vsel %vm774, %v6986, -inf
        %v7825 = vmax.f32 %v6970, %v7824
        %v7826 = vrot.slane %v7825, 4
        %v7827 = vmax.f32 %v7825, %v7826
        %v7828 = vrot.slane %v7827, 2
        %v7829 = vmax.f32 %v7827, %v7828
        %v7830 = vrot.slane %v7829, 1
        %v7831 = vmax.f32 %v7829, %v7830
        %v7832 = vsel %vm774, %v7019, -inf
        %v7833 = vmax.f32 %v7003, %v7832
        %v7834 = vrot.slane %v7833, 4
        %v7835 = vmax.f32 %v7833, %v7834
        %v7836 = vrot.slane %v7835, 2
        %v7837 = vmax.f32 %v7835, %v7836
        %v7838 = vrot.slane %v7837, 1
        %v7839 = vmax.f32 %v7837, %v7838
        %v7840 = vsel %vm774, %v7052, -inf
        %v7841 = vmax.f32 %v7036, %v7840
        %v7842 = vrot.slane %v7841, 4
        %v7843 = vmax.f32 %v7841, %v7842
        %v7844 = vrot.slane %v7843, 2
        %v7845 = vmax.f32 %v7843, %v7844
        %v7846 = vrot.slane %v7845, 1
        %v7847 = vmax.f32 %v7845, %v7846
        %v7848 = vsel %vm774, %v7085, -inf
        %v7849 = vmax.f32 %v7069, %v7848
        %v7850 = vrot.slane %v7849, 4
        %v7851 = vmax.f32 %v7849, %v7850
        %v7852 = vrot.slane %v7851, 2
        %v7853 = vmax.f32 %v7851, %v7852
        %v7854 = vrot.slane %v7853, 1
        %v7855 = vmax.f32 %v7853, %v7854
        %v7856 = vsel %vm774, %v7118, -inf
        %v7857 = vmax.f32 %v7102, %v7856
        %v7858 = vrot.slane %v7857, 4
        %v7859 = vmax.f32 %v7857, %v7858
        %v7860 = vrot.slane %v7859, 2
        %v7861 = vmax.f32 %v7859, %v7860
        %v7862 = vrot.slane %v7861, 1
        %v7863 = vmax.f32 %v7861, %v7862
        %v7864 = vsel %vm774, %v7151, -inf
        %v7865 = vmax.f32 %v7135, %v7864
        %v7866 = vrot.slane %v7865, 4
        %v7867 = vmax.f32 %v7865, %v7866
        %v7868 = vrot.slane %v7867, 2
        %v7869 = vmax.f32 %v7867, %v7868
        %v7870 = vrot.slane %v7869, 1
        %v7871 = vmax.f32 %v7869, %v7870
        %v7872 = vsel %vm774, %v7184, -inf
        %v7873 = vmax.f32 %v7168, %v7872
        %v7874 = vrot.slane %v7873, 4
        %v7875 = vmax.f32 %v7873, %v7874
        %v7876 = vrot.slane %v7875, 2
        %v7877 = vmax.f32 %v7875, %v7876
        %v7878 = vrot.slane %v7877, 1
        %v7879 = vmax.f32 %v7877, %v7878
        %v7880 = vsel %vm774, %v7217, -inf
        %v7881 = vmax.f32 %v7201, %v7880
        %v7882 = vrot.slane %v7881, 4
        %v7883 = vmax.f32 %v7881, %v7882
        %v7884 = vrot.slane %v7883, 2
        %v7885 = vmax.f32 %v7883, %v7884
        %v7886 = vrot.slane %v7885, 1
        %v7887 = vmax.f32 %v7885, %v7886
        %v7888 = vsel %vm774, %v7250, -inf
        %v7889 = vmax.f32 %v7234, %v7888
        %v7890 = vrot.slane %v7889, 4
        %v7891 = vmax.f32 %v7889, %v7890
        %v7892 = vrot.slane %v7891, 2
        %v7893 = vmax.f32 %v7891, %v7892
        %v7894 = vrot.slane %v7893, 1
        %v7895 = vmax.f32 %v7893, %v7894
        %v7896 = vsel %vm774, %v7283, -inf
        %v7897 = vmax.f32 %v7267, %v7896
        %v7898 = vrot.slane %v7897, 4
        %v7899 = vmax.f32 %v7897, %v7898
        %v7900 = vrot.slane %v7899, 2
        %v7901 = vmax.f32 %v7899, %v7900
        %v7902 = vrot.slane %v7901, 1
        %v7903 = vmax.f32 %v7901, %v7902
        %v7904 = vsel %vm774, %v7316, -inf
        %v7905 = vmax.f32 %v7300, %v7904
        %v7906 = vrot.slane %v7905, 4
        %v7907 = vmax.f32 %v7905, %v7906
        %v7908 = vrot.slane %v7907, 2
        %v7909 = vmax.f32 %v7907, %v7908
        %v7910 = vrot.slane %v7909, 1
        %v7911 = vmax.f32 %v7909, %v7910
        %v7912 = vsel %vm774, %v7349, -inf
        %v7913 = vmax.f32 %v7333, %v7912
        %v7914 = vrot.slane %v7913, 4
        %v7915 = vmax.f32 %v7913, %v7914
        %v7916 = vrot.slane %v7915, 2
        %v7917 = vmax.f32 %v7915, %v7916
        %v7918 = vrot.slane %v7917, 1
        %v7919 = vmax.f32 %v7917, %v7918
        %v7920 = vsel %vm774, %v7382, -inf
        %v7921 = vmax.f32 %v7366, %v7920
        %v7922 = vrot.slane %v7921, 4
        %v7923 = vmax.f32 %v7921, %v7922
        %v7924 = vrot.slane %v7923, 2
        %v7925 = vmax.f32 %v7923, %v7924
        %v7926 = vrot.slane %v7925, 1
        %v7927 = vmax.f32 %v7925, %v7926
        %v7928 = vsel %vm774, %v7415, -inf
        %v7929 = vmax.f32 %v7399, %v7928
        %v7930 = vrot.slane %v7929, 4
        %v7931 = vmax.f32 %v7929, %v7930
        %v7932 = vrot.slane %v7931, 2
        %v7933 = vmax.f32 %v7931, %v7932
        %v7934 = vrot.slane %v7933, 1
        %v7935 = vmax.f32 %v7933, %v7934
        %v7936 = vsel %vm774, %v7448, -inf
        %v7937 = vmax.f32 %v7432, %v7936
        %v7938 = vrot.slane %v7937, 4
        %v7939 = vmax.f32 %v7937, %v7938
        %v7940 = vrot.slane %v7939, 2
        %v7941 = vmax.f32 %v7939, %v7940
        %v7942 = vrot.slane %v7941, 1
        %v7943 = vmax.f32 %v7941, %v7942
        %v7944 = vsel %vm774, %v7481, -inf
        %v7945 = vmax.f32 %v7465, %v7944
        %v7946 = vrot.slane %v7945, 4
        %v7947 = vmax.f32 %v7945, %v7946
        %v7948 = vrot.slane %v7947, 2
        %v7949 = vmax.f32 %v7947, %v7948
        %v7950 = vrot.slane %v7949, 1
        %v7951 = vmax.f32 %v7949, %v7950
        %v7952 = vsel %vm774, %v7514, -inf
        %v7953 = vmax.f32 %v7498, %v7952
        %v7954 = vrot.slane %v7953, 4
        %v7955 = vmax.f32 %v7953, %v7954
        %v7956 = vrot.slane %v7955, 2
        %v7957 = vmax.f32 %v7955, %v7956
        %v7958 = vrot.slane %v7957, 1
        %v7959 = vmax.f32 %v7957, %v7958
        %v7960 = vsel %vm774, %v7547, -inf
        %v7961 = vmax.f32 %v7531, %v7960
        %v7962 = vrot.slane %v7961, 4
        %v7963 = vmax.f32 %v7961, %v7962
        %v7964 = vrot.slane %v7963, 2
        %v7965 = vmax.f32 %v7963, %v7964
        %v7966 = vrot.slane %v7965, 1
        %v7967 = vmax.f32 %v7965, %v7966
        %v7968 = vsel %vm774, %v7580, -inf
        %v7969 = vmax.f32 %v7564, %v7968
        %v7970 = vrot.slane %v7969, 4
        %v7971 = vmax.f32 %v7969, %v7970
        %v7972 = vrot.slane %v7971, 2
        %v7973 = vmax.f32 %v7971, %v7972
        %v7974 = vrot.slane %v7973, 1
        %v7975 = vmax.f32 %v7973, %v7974
        %v7976 = vsel %vm774, %v7613, -inf
        %v7977 = vmax.f32 %v7597, %v7976
        %v7978 = vrot.slane %v7977, 4
        %v7979 = vmax.f32 %v7977, %v7978
        %v7980 = vrot.slane %v7979, 2
        %v7981 = vmax.f32 %v7979, %v7980
        %v7982 = vrot.slane %v7981, 1
        %v7983 = vmax.f32 %v7981, %v7982
        %v7984 = vsel %vm774, %v7646, -inf
        %v7985 = vmax.f32 %v7630, %v7984
        %v7986 = vrot.slane %v7985, 4
        %v7987 = vmax.f32 %v7985, %v7986
        %v7988 = vrot.slane %v7987, 2
        %v7989 = vmax.f32 %v7987, %v7988
        %v7990 = vrot.slane %v7989, 1
        %v7991 = vmax.f32 %v7989, %v7990
        %v7992 = vsel %vm774, %v7679, -inf
        %v7993 = vmax.f32 %v7663, %v7992
        %v7994 = vrot.slane %v7993, 4
        %v7995 = vmax.f32 %v7993, %v7994
        %v7996 = vrot.slane %v7995, 2
        %v7997 = vmax.f32 %v7995, %v7996
        %v7998 = vrot.slane %v7997, 1
        %v7999 = vmax.f32 %v7997, %v7998
        %v8000 = vld [vmem:[%s3] sm:$0xff]
        %v8001 = vld [vmem:[%s3 + $0x8] sm:$0xff]
        %v8002 = vld [vmem:[%s3 + $0x10] sm:$0xff]
        %v8003 = vld [vmem:[%s3 + $0x18] sm:$0xff]
        %v8004 = vld [vmem:[%s3 + $0x20] sm:$0xff]
        %v8005 = vld [vmem:[%s3 + $0x28] sm:$0xff]
        %v8006 = vld [vmem:[%s3 + $0x30] sm:$0xff]
        %v8007 = vld [vmem:[%s3 + $0x38] sm:$0xff]
        %v8008 = vld [vmem:[%s3 + $0x40] sm:$0xff]
        %v8009 = vld [vmem:[%s3 + $0x48] sm:$0xff]
        %v8010 = vld [vmem:[%s3 + $0x50] sm:$0xff]
        %v8011 = vld [vmem:[%s3 + $0x58] sm:$0xff]
        %v8012 = vld [vmem:[%s3 + $0x60] sm:$0xff]
        %v8013 = vld [vmem:[%s3 + $0x68] sm:$0xff]
        %v8014 = vld [vmem:[%s3 + $0x70] sm:$0xff]
        %v8015 = vld [vmem:[%s3 + $0x78] sm:$0xff]
        %v8016 = vld [vmem:[%s3 + $0x80] sm:$0xff]
        %v8017 = vld [vmem:[%s3 + $0x88] sm:$0xff]
        %v8018 = vld [vmem:[%s3 + $0x90] sm:$0xff]
        %v8019 = vld [vmem:[%s3 + $0x98] sm:$0xff]
        %v8020 = vld [vmem:[%s3 + $0xa0] sm:$0xff]
        %v8021 = vld [vmem:[%s3 + $0xa8] sm:$0xff]
        %v8022 = vld [vmem:[%s3 + $0xb0] sm:$0xff]
        %v8023 = vld [vmem:[%s3 + $0xb8] sm:$0xff]
        %v8024 = vld [vmem:[%s3 + $0xc0] sm:$0xff]
        %v8025 = vld [vmem:[%s3 + $0xc8] sm:$0xff]
        %v8026 = vld [vmem:[%s3 + $0xd0] sm:$0xff]
        %v8027 = vld [vmem:[%s3 + $0xd8] sm:$0xff]
        %v8028 = vld [vmem:[%s3 + $0xe0] sm:$0xff]
        %v8029 = vld [vmem:[%s3 + $0xe8] sm:$0xff]
        %v8030 = vld [vmem:[%s3 + $0xf0] sm:$0xff]
        %v8031 = vld [vmem:[%s3 + $0xf8] sm:$0xff]
        %v8032 = vld [vmem:[%s4] sm:$0x3]
        %v8034 = vlaneseq
        %v8035 = vshrl.u32 %v8034, 7
        %v8036 = vsub.s32 0, %v8035
        %v8037 = vrot.slane %v8032, %v8036
        %v8038 = vlaneseq
        %v8039 = vshrl.u32 %v8038, 7
        %v8040 = vsub.s32 1, %v8039
        %v8041 = vrot.slane %v8032, %v8040
        %vm8076 = vcmask 1041409
        %v8077 = vsel %vm8076, %v7759, %v7751
        %vm8078 = vcmask 1042434
        %v8079 = vsel %vm8078, %v7767, %v8077
        %vm8080 = vcmask 1043459
        %v8081 = vsel %vm8080, %v7775, %v8079
        %vm8082 = vcmask 1044484
        %v8083 = vsel %vm8082, %v7783, %v8081
        %vm8084 = vcmask 1045509
        %v8085 = vsel %vm8084, %v7791, %v8083
        %vm8086 = vcmask 1046534
        %v8087 = vsel %vm8086, %v7799, %v8085
        %vm8088 = vcmask 1047559
        %v8089 = vsel %vm8088, %v7807, %v8087
        %v8090 = vsel %vm8076, %v7823, %v7815
        %v8091 = vsel %vm8078, %v7831, %v8090
        %v8092 = vsel %vm8080, %v7839, %v8091
        %v8093 = vsel %vm8082, %v7847, %v8092
        %v8094 = vsel %vm8084, %v7855, %v8093
        %v8095 = vsel %vm8086, %v7863, %v8094
        %v8096 = vsel %vm8088, %v7871, %v8095
        %v8097 = vsel %vm8076, %v7887, %v7879
        %v8098 = vsel %vm8078, %v7895, %v8097
        %v8099 = vsel %vm8080, %v7903, %v8098
        %v8100 = vsel %vm8082, %v7911, %v8099
        %v8101 = vsel %vm8084, %v7919, %v8100
        %v8102 = vsel %vm8086, %v7927, %v8101
        %v8103 = vsel %vm8088, %v7935, %v8102
        %v8104 = vsel %vm8076, %v7951, %v7943
        %v8105 = vsel %vm8078, %v7959, %v8104
        %v8106 = vsel %vm8080, %v7967, %v8105
        %v8107 = vsel %vm8082, %v7975, %v8106
        %v8108 = vsel %vm8084, %v7983, %v8107
        %v8109 = vsel %vm8086, %v7991, %v8108
        %v8110 = vsel %vm8088, %v7999, %v8109
        %8115 = vmatprep.subr.mxu0 %v8031
        %8116 = vmatpush1.msra.mxu0 %v8030
        %8117 = vmatprep.subr.mxu0 %v8029
        %8118 = vmatpush1.msra.mxu0 %v8028
        %8119 = vmatprep.subr.mxu0 %v8027
        %8120 = vmatpush1.msra.mxu0 %v8026
        %8121 = vmatprep.subr.mxu0 %v8025
        %8122 = vmatpush1.msra.mxu0 %v8024
        %8123 = vmatprep.subr.mxu0 %v8023
        %8124 = vmatpush1.msra.mxu0 %v8022
        %8125 = vmatprep.subr.mxu0 %v8021
        %8126 = vmatpush1.msra.mxu0 %v8020
        %8127 = vmatprep.subr.mxu0 %v8019
        %8128 = vmatpush1.msra.mxu0 %v8018
        %8129 = vmatprep.subr.mxu0 %v8017
        %8130 = vmatpush1.msra.mxu0 %v8016
        %8131 = vmatprep.subr.mxu0 %v8015
        %8132 = vmatpush1.msra.mxu0 %v8014
        %8133 = vmatprep.subr.mxu0 %v8013
        %8134 = vmatpush1.msra.mxu0 %v8012
        %8135 = vmatprep.subr.mxu0 %v8011
        %8136 = vmatpush1.msra.mxu0 %v8010
        %8137 = vmatprep.subr.mxu0 %v8009
        %8138 = vmatpush1.msra.mxu0 %v8008
        %8139 = vmatprep.subr.mxu0 %v8007
        %8140 = vmatpush1.msra.mxu0 %v8006
        %8141 = vmatprep.subr.mxu0 %v8005
        %8142 = vmatpush1.msra.mxu0 %v8004
        %8143 = vmatprep.subr.mxu0 %v8003
        %8144 = vmatpush1.msra.mxu0 %v8002
        %8145 = vmatprep.subr.mxu0 %v8001
        %8146 = vmatpush1.msra.mxu0 %v8000
        %8147 = vmatprep.subr.mxu0 0.0
        %8148 = vmatpush2.msra.mxu0 0.0
        %8149 = vmatprep.subr.mxu0 0.0
        %8150 = vmatpush2.msra.mxu0 0.0
        %8151 = vmatprep.subr.mxu0 0.0
        %8152 = vmatpush2.msra.mxu0 0.0
        %8153 = vmatprep.subr.mxu0 0.0
        %8154 = vmatpush2.msra.mxu0 0.0
        %8155 = vmatprep.subr.mxu0 0.0
        %8156 = vmatpush2.msra.mxu0 0.0
        %8157 = vmatprep.subr.mxu0 0.0
        %8158 = vmatpush2.msra.mxu0 0.0
        %8159 = vmatprep.subr.mxu0 0.0
        %8160 = vmatpush2.msra.mxu0 0.0
        %8161 = vmatprep.subr.mxu0 0.0
        %8162 = vmatpush2.msra.mxu0 0.0
        %8163 = vmatprep.subr.mxu0 0.0
        %8164 = vmatpush2.msra.mxu0 0.0
        %8165 = vmatprep.subr.mxu0 0.0
        %8166 = vmatpush2.msra.mxu0 0.0
        %8167 = vmatprep.subr.mxu0 0.0
        %8168 = vmatpush2.msra.mxu0 0.0
        %8169 = vmatprep.subr.mxu0 0.0
        %8170 = vmatpush2.msra.mxu0 0.0
        %8171 = vmatprep.subr.mxu0 0.0
        %8172 = vmatpush2.msra.mxu0 0.0
        %8173 = vmatprep.subr.mxu0 0.0
        %8174 = vmatpush2.msra.mxu0 0.0
        %8175 = vmatprep.subr.mxu0 0.0
        %8176 = vmatpush2.msra.mxu0 0.0
        %8177 = vmatprep.subr.mxu0 0.0
        %8178 = vmatpush2.msra.mxu0 0.0
        %8179 = vmatprep.mubr.f32.mxu0 0.0
        %8180 = vmatmul.mubr.f32.gmra.mxu0 %v8089
        %v8181 = vpop.f32.mrf.mxu0
        %v8182 = vadd.f32 %v8037, %v8181
        %v8183 = vpop.f32.mrf.mxu0
        %v8184 = vadd.f32 %v8041, %v8183
        %8185 = vmatprep.mubr.f32.mxu0 0.0
        %8186 = vmatmul.mubr.f32.gmra.mxu0 %v8096
        %v8187 = vpop.f32.mrf.mxu0
        %v8188 = vadd.f32 %v8037, %v8187
        %v8189 = vpop.f32.mrf.mxu0
        %v8190 = vadd.f32 %v8041, %v8189
        %8191 = vmatprep.mubr.f32.mxu0 0.0
        %8192 = vmatmul.mubr.f32.gmra.mxu0 %v8103
        %v8193 = vpop.f32.mrf.mxu0
        %v8194 = vadd.f32 %v8037, %v8193
        %v8195 = vpop.f32.mrf.mxu0
        %v8196 = vadd.f32 %v8041, %v8195
        %8197 = vmatprep.mubr.f32.mxu0 0.0
        %8198 = vmatmul.mubr.f32.gmra.mxu0 %v8110
        %v8199 = vpop.f32.mrf.mxu0
        %v8200 = vadd.f32 %v8037, %v8199
        %v8201 = vpop.f32.mrf.mxu0
        %v8202 = vadd.f32 %v8041, %v8201
        %8203 = vdwg.mxu0
        %v8204 = vmax.f32 %v8182, 0.0
        %v8205 = vmax.f32 %v8188, 0.0
        %v8206 = vmax.f32 %v8194, 0.0
        %v8207 = vmax.f32 %v8200, 0.0
        %v8208 = vxor.u32 %v8184, 2147483648
        %v8209 = vxor.u32 %v8190, 2147483648
        %v8210 = vxor.u32 %v8196, 2147483648
        %v8211 = vxor.u32 %v8202, 2147483648
        %v8212 = vmul.f32 %v8208, 1.442695
        %v8213 = vpow.pop %v8212
        %v8214 = vmul.f32 %v8209, 1.442695
        %v8215 = vpow.pop %v8214
        %v8216 = vmul.f32 %v8210, 1.442695
        %v8217 = vpow.pop %v8216
        %v8218 = vmul.f32 %v8211, 1.442695
        %v8219 = vpow.pop %v8218
        %v8220 = vadd.f32 %v8213, 1.0
        %v8221 = vadd.f32 %v8215, 1.0
        %v8222 = vadd.f32 %v8217, 1.0
        %v8223 = vadd.f32 %v8219, 1.0
        %v8224 = vrcp.pop %v8220
        %v8225 = vmul.f32 1.0, %v8224
        %v8226 = vrcp.pop %v8221
        %v8227 = vmul.f32 1.0, %v8226
        %v8228 = vrcp.pop %v8222
        %v8229 = vmul.f32 1.0, %v8228
        %v8230 = vrcp.pop %v8223
        %v8231 = vmul.f32 1.0, %v8230
        %v8232 = vmul.f32 %v8225, %v8204
        %v8233 = vmul.f32 %v8227, %v8205
        %v8234 = vmul.f32 %v8229, %v8206
        %v8235 = vmul.f32 %v8231, %v8207
        %v8236 = vsub.f32 1.0, %v8225
        %v8237 = vsub.f32 1.0, %v8227
        %v8238 = vsub.f32 1.0, %v8229
        %v8239 = vsub.f32 1.0, %v8231
        %v8240 = vmul.f32 %v8236, %v8089
        %v8241 = vmul.f32 %v8237, %v8096
        %v8242 = vmul.f32 %v8238, %v8103
        %v8243 = vmul.f32 %v8239, %v8110
        %v8244 = vadd.f32 %v8232, %v8240
        %v8245 = vadd.f32 %v8233, %v8241
        %v8246 = vadd.f32 %v8234, %v8242
        %v8247 = vadd.f32 %v8235, %v8243
        %8248 = vst [vmem:[%s220] sm:$0xff] %v8244
        %8249 = vst [vmem:[%s220 + $0x8] sm:$0xff] %v8245
        %8250 = vst [vmem:[%s220 + $0x10] sm:$0xff] %v8246
        %8251 = vst [vmem:[%s220 + $0x18] sm:$0xff] %v8247
        %s8252 = sand.u32 %s137, 1
        %s8253 = scalar_lea.sflag [#allocation3], %s8252
        %s8254 = sand.u32 %s137, 1
        %s8255 = smul.addr %s8254, 32
        %s8256 = scalar_lea.vmem [#allocation2], %s8255
        // Predicated region
        $region41: #{tpu_custom_call.1} parent=39 // pred_check
          %p8257 = pneg %p147
        $region42: #{tpu_custom_call.1} parent=39 // pred_check_branch
          %8259 = sbr.rel (%p8257) target = $region44
        $region43: #{tpu_custom_call.1} parent=39 // pred_region
          %s8260 = smul.u32 4, %s19
          %s8262 = ssub.s32 512, 512
          %8263 = vsyncadd %s8253, %s8262
          %s8264 = smul.addr %s8260, 128
          %s8265 = scalar_lea.hbm %s5, %s8264
          %s8266 = sshll.u32 %s8256, 4
          %s8267 = int_to_ptr.vmem [resolvable:$true] %s8266
          %8272 = dma.vmem_to_hbm [thread:$0]  %s8267, 512, %s8265, %s8253, 128, 128, 8
        $region44: #{tpu_custom_call.1} parent=39 // pred_fallthru
          _
      $region40: #{tpu_custom_call.1} parent=5 // pred_fallthru
        _
      %p8273 = scmp.le.s32.totalorder 2, %s14
      // Predicated region
      $region45: #{tpu_custom_call.1} parent=5 // pred_check
        %p8274 = pneg %p8273
      $region46: #{tpu_custom_call.1} parent=5 // pred_check_branch
        %8276 = sbr.rel (%p8274) target = $region48
      $region47: #{tpu_custom_call.1} parent=5 // pred_region
        %s8277 = ssub.s32 %s14, 2
        // Predicated region
        $region49: #{tpu_custom_call.1} parent=47 // pred_check
          %p8278 = pneg %p153
        $region50: #{tpu_custom_call.1} parent=47 // pred_check_branch
          %8280 = sbr.rel (%p8278) target = $region52
        $region51: #{tpu_custom_call.1} parent=47 // pred_region
          %s8281 = sand.u32 %s138, 1
          %s8282 = scalar_lea.sflag [#allocation3], %s8281
          %s8283 = sand.u32 %s138, 1
          %s8284 = smul.addr %s8283, 32
          %s8285 = scalar_lea.vmem [#allocation2], %s8284
          %8286 = dma.done %s8282, 512
        $region52: #{tpu_custom_call.1} parent=47 // pred_fallthru
          _
      $region48: #{tpu_custom_call.1} parent=5 // pred_fallthru
        _
    $region6: #{tpu_custom_call.1} parent=1 // loop_footer
      %s18 = sadd.s32 1, %s14
    $region7: #{tpu_custom_call.1} parent=1 // loop_footer_branch
      %13 = sbr.rel target = $region3
    $region8: #{tpu_custom_call.1} parent=1 // loop_exit
      _
    %8287 = vsyncpa [#allocation3], 1
    %s8288 = scalar_lea.sflag [#allocation3], 1
    %8289 = vsyncpa %s8288, 1

</llo_original>
